<compile_context>
chip_gen: v7x
topology: tpu7x:2x2x1
jax: 0.10.0
libtpu: 0.0.40
codegen_flags: <defaults>
</compile_context>

<pallas_src>
import functools

import numpy as np
import jax
import jax.numpy as jnp
from jax.experimental import pallas as pl
from jax.experimental.pallas import tpu as pltpu

B = 2                 # batch (block-diagonal batched weights are built for this B)
L0 = 200              # sampling_point (hard-coded by the module: fc1 = 50*32)
NUM_CLASSES = 4

P200 = 256            # padded lane width for the length-200 stage
P100 = 128            # padded lane width for the length-100 stage
P50 = 128             # padded lane width for the length-50 stage

N_OPERANDS = 22       # x + 21 packed constants
W1T_IDX = 16          # operand index of the fc1 weight (kept in HBM, manual DMA)


# ----------------------------------------------------------------------------
# Fused kernel: pre_block -> conv1 -> pool -> conv2 -> pool -> inception
#               -> flatten -> fc1 -> BN(eval) -> ReLU -> fc2 -> softmax
# Activations: (B*C, L_padded) tiles; batch stacked on sublanes, length on lanes.
# Padding lanes are kept at exactly 0 so pltpu.roll provides conv zero-padding.
# ----------------------------------------------------------------------------
def deepspectra_kernel(
    x_ref, apre_ref, lng_ref, lnb_ref,
    wc1a_ref, wc1b_ref, wc1c_ref, bc1_ref, sev1_ref,
    wc2_ref, bc2_ref, sev2_ref,
    w123_ref, b123_ref, wi4_ref, bi4_ref,
    w1t_hbm_ref, fb1_ref, bns_ref, bnsh_ref, w2t_ref, fb2_ref,
    out_ref,
    brs_ref, flat_ref, w1t_vmem_ref, w1t_sem):
    f32 = jnp.float32

    # Kick off the fc1-weight DMA (largest constant) right away; it overlaps
    # with the entire feature-extraction path and is awaited just before fc1.
    w1_cp = pltpu.make_async_copy(w1t_hbm_ref, w1t_vmem_ref, w1t_sem)
    w1_cp.start()

    def sh(v, s):
        # out[:, l] = v[:, l - s]; zero edge-fill comes from the zero pad lanes.
        n = v.shape[-1]
        return pltpu.roll(v, shift=s % n, axis=1)

    # ---- pre_block: composed avg pools (single matmul) + LayerNorm(200) ----
    h = jnp.dot(x_ref[...], apre_ref[...], preferred_element_type=f32)  # (B,256), pads 0
    mu = jnp.sum(h, axis=-1, keepdims=True) * (1.0 / float(L0))
    var = jnp.sum(h * h, axis=-1, keepdims=True) * (1.0 / float(L0)) - mu * mu
    h = (h - mu) * jax.lax.rsqrt(var + 1e-5)
    h = h * lng_ref[...] + lnb_ref[...]              # padded gamma/beta -> pads back to 0

    # ---- conv1: Conv1d(1->8, k=3, p=1) + ReLU ----
    hm1 = sh(h, +1)                                  # h[:, l-1]
    hp1 = sh(h, -1)                                  # h[:, l+1]
    c1 = (jnp.dot(wc1a_ref[...], hm1, preferred_element_type=f32) +
          jnp.dot(wc1b_ref[...], h, preferred_element_type=f32) +
          jnp.dot(wc1c_ref[...], hp1, preferred_element_type=f32) +
          bc1_ref[...])
    c1 = jnp.maximum(c1, 0.0)                        # (B*8, 256)

    # ---- max_pool1d(k=2, s=2): pair max (VPU) + even-column selector (MXU) ----
    m1 = jnp.maximum(c1, sh(c1, -1))
    p1 = jnp.dot(m1, sev1_ref[...], preferred_element_type=f32)   # (B*8, 128), pads 0

    # ---- conv2: Conv1d(8->16, k=3, p=1) + ReLU (single stacked matmul) ----
    x2 = jnp.concatenate([sh(p1, +1), p1, sh(p1, -1)], axis=0)    # (3*B*8, 128)
    c2 = jnp.dot(wc2_ref[...], x2, preferred_element_type=f32) + bc2_ref[...]
    c2 = jnp.maximum(c2, 0.0)                        # (B*16, 128)

    # ---- max_pool1d(k=2, s=2) ----
    m2 = jnp.maximum(c2, sh(c2, -1))
    p2 = jnp.dot(m2, sev2_ref[...], preferred_element_type=f32)   # (B*16, 128), pads 0

    # ---- inception: branches 1-3 fused into one stacked matmul ----
    sm1 = sh(p2, +1)
    sp1 = sh(p2, -1)
    sm2 = sh(p2, +2)
    sp2 = sh(p2, -2)

    # tap-major stacked input covering kernel sizes 1/3/5: (5*B*16, 128)
    xb = jnp.concatenate([sm2, sm1, p2, sp1, sp2], axis=0)
    br123 = jnp.maximum(
        jnp.dot(w123_ref[...], xb, preferred_element_type=f32) + b123_ref[...], 0.0)
    # (3*B*8, 128): rows 0..15 = branch1, 16..31 = branch2, 32..47 = branch3

    # branch4: MaxPool1d(k=3,s=1,p=1) then 1x1 conv + ReLU.
    # p2 >= 0 (post-ReLU/pool) so zero-filled shifts == implicit -inf padding.
    pooled = jnp.maximum(jnp.maximum(sm1, p2), sp1)
    br4 = jnp.maximum(
        jnp.dot(wi4_ref[...], pooled, preferred_element_type=f32) + bi4_ref[...], 0.0)

    # ---- flatten to PyTorch x.view(-1, 32*50) channel-major layout ----
    # Park branch outputs in a VMEM scratch so the per-row copies are plain
    # ref loads/stores instead of value relayouts.
    brs_ref[0:3 * B * 8, :] = br123
    brs_ref[3 * B * 8:4 * B * 8, :] = br4
    for b in range(B):
        for k in range(4):
            for o in range(8):
                row = k * (B * 8) + b * 8 + o
                col = (k * 8 + o) * 50
                flat_ref[b:b + 1, col:col + 50] = brs_ref[row:row + 1, 0:50]

    # ---- head: fc1 -> BN(eval) -> ReLU -> (Dropout = id) -> fc2 -> softmax ----
    w1_cp.wait()                                     # fc1 weight now resident in VMEM
    feat = flat_ref[...].astype(jnp.bfloat16)        # (B, 1600)
    h1 = jnp.dot(feat, w1t_vmem_ref[...], preferred_element_type=f32) + fb1_ref[...]
    h1 = h1 * bns_ref[...] + bnsh_ref[...]           # eval BatchNorm1d(128)
    h1 = jnp.maximum(h1, 0.0)
    logits = (jnp.dot(h1.astype(jnp.bfloat16), w2t_ref[...],
                      preferred_element_type=f32) + fb2_ref[...])
    mx = jnp.max(logits, axis=-1, keepdims=True)
    e = jnp.exp(logits - mx)
    out_ref[...] = e / jnp.sum(e, axis=-1, keepdims=True)


# ----------------------------------------------------------------------------
# Host-side constant / weight packing (built once, outside the jit'ed forward)
# ----------------------------------------------------------------------------
def _avg_matrix(L, k):
    # same-padded AvgPool1d(kernel=k, stride=1), count_include_pad=True
    p = (k - 1) // 2
    m = np.zeros((L, L), np.float64)
    for l in range(L):
        m[max(0, l - p):min(L, l + p + 1), l] = 1.0 / k
    return m


@functools.lru_cache(maxsize=None)
def _static_consts():
    # composed pre_block operator (one matmul), padded to 256 lanes
    a = _avg_matrix(L0, 5) @ _avg_matrix(L0, 13) @ _avg_matrix(L0, 7)
    a_pad = np.zeros((L0, P200), np.float32)
    a_pad[:, :L0] = a.astype(np.float32)
    # even-column selectors for the two stride-2 max-pools
    sev1 = np.zeros((P200, P100), np.float32)
    for i in range(100):
        sev1[2 * i, i] = 1.0
    sev2 = np.zeros((P100, P50), np.float32)
    for i in range(50):
        sev2[2 * i, i] = 1.0
    return a_pad, sev1, sev2


def _block_diag_taps(w):
    # PyTorch Conv1d weight (Cout, Cin, K) -> (B*Cout, K*B*Cin), batch block-diag,
    # tap-major column blocks (tap t uses input positions l + t - (K-1)//2).
    w = np.asarray(w, np.float32)
    k = w.shape[2]
    eye = np.eye(B, dtype=np.float32)
    return np.concatenate([np.kron(eye, w[:, :, t]) for t in range(k)], axis=1)


def _tile_bias(b):
    b = np.asarray(b, np.float32).reshape(-1)
    return np.tile(b, B).reshape(B * b.shape[0], 1)


def _pack_inception123(params):
    # Combined weight for inception branches 1 (1x1), 2 (k3), 3 (k5) against the
    # 5-tap stacked input [l-2, l-1, l, l+1, l+2]; zero blocks for unused taps.
    w1 = _block_diag_taps(params["wi1"])     # (B*8, 1*B*16)
    w2 = _block_diag_taps(params["wi2"])     # (B*8, 3*B*16)
    w3 = _block_diag_taps(params["wi3"])     # (B*8, 5*B*16)
    blk = B * 16
    W = np.zeros((3 * B * 8, 5 * blk), np.float32)          # (48, 160)
    W[0 * B * 8:1 * B * 8, 2 * blk:3 * blk] = w1             # center tap only
    W[1 * B * 8:2 * B * 8, 1 * blk:4 * blk] = w2             # taps l-1, l, l+1
    W[2 * B * 8:3 * B * 8, 0 * blk:5 * blk] = w3             # all 5 taps
    bias = np.concatenate([_tile_bias(params["bi1"]),
                           _tile_bias(params["bi2"]),
                           _tile_bias(params["bi3"])], axis=0)  # (48, 1)
    return W, bias


def prepare_inputs(params):
    """Repack PyTorch-style params into the kernel's constant operands (runs once)."""
    a_pad, sev1, sev2 = _static_consts()

    lng = np.zeros((1, P200), np.float32)
    lng[0, :L0] = np.asarray(params["ln_g"], np.float32).reshape(-1)
    lnb = np.zeros((1, P200), np.float32)
    lnb[0, :L0] = np.asarray(params["ln_b"], np.float32).reshape(-1)

    w1 = np.asarray(params["w1"], np.float32)          # (8, 1, 3)
    eye = np.eye(B, dtype=np.float32)
    wc1 = [np.kron(eye, w1[:, :, t]) for t in range(3)]  # each (B*8, B)

    w123, b123 = _pack_inception123(params)

    eps = 1e-5
    g = np.asarray(params["bn_g"], np.float32)
    scale = g / np.sqrt(np.asarray(params["bn_rv"], np.float32) + eps)
    shift = np.asarray(params["bn_b"], np.float32) - \
        np.asarray(params["bn_rm"], np.float32) * scale

    packed = (
        jnp.asarray(a_pad), jnp.asarray(lng), jnp.asarray(lnb),
        jnp.asarray(wc1[0]), jnp.asarray(wc1[1]), jnp.asarray(wc1[2]),
        jnp.asarray(_tile_bias(params["b1"])),
        jnp.asarray(sev1),
        jnp.asarray(_block_diag_taps(params["w2"])),
        jnp.asarray(_tile_bias(params["b2"])),
        jnp.asarray(sev2),
        jnp.asarray(w123),
        jnp.asarray(b123),
        jnp.asarray(_block_diag_taps(params["wi4"])),
        jnp.asarray(_tile_bias(params["bi4"])),
        jnp.asarray(np.asarray(params["fc1_w"], np.float32).T, dtype=jnp.bfloat16),
        jnp.asarray(np.asarray(params["fc1_b"], np.float32).reshape(1, 128)),
        jnp.asarray(scale.reshape(1, 128)),
        jnp.asarray(shift.reshape(1, 128)),
        jnp.asarray(np.asarray(params["fc2_w"], np.float32).T, dtype=jnp.bfloat16),
        jnp.asarray(np.asarray(params["fc2_b"], np.float32).reshape(1, NUM_CLASSES)),
    )
    return packed


# ----------------------------------------------------------------------------
# Wrapper: one fused pallas_call, whole batch per invocation, jit'ed.
# fc1 weight stays in HBM (pl.ANY) and is manually DMA'd inside the kernel so
# its transfer overlaps the feature-extraction compute.
# ----------------------------------------------------------------------------
@jax.jit
def deepspectra_forward(x, packed):
    x2d = x.reshape(x.shape[0], L0).astype(jnp.float32)   # PyTorch NCW (B,1,200) -> (B,200)

    vmem_spec = pl.BlockSpec(memory_space=pltpu.MemorySpace.VMEM)
    in_specs = [vmem_spec] * N_OPERANDS
    in_specs[W1T_IDX] = pl.BlockSpec(memory_space=pl.ANY)  # fc1 weight: manual DMA

    return pl.pallas_call(
        deepspectra_kernel,
        out_shape=jax.ShapeDtypeStruct((x.shape[0], NUM_CLASSES), jnp.float32),
        in_specs=in_specs,
        out_specs=pl.BlockSpec(memory_space=pltpu.MemorySpace.VMEM),
        scratch_shapes=[
            pltpu.VMEM((4 * B * 8, P50), jnp.float32),     # inception branch park
            pltpu.VMEM((B, 32 * 50), jnp.float32),         # flattened features
            pltpu.VMEM((32 * 50, 128), jnp.bfloat16),      # fc1 weight landing buffer
            pltpu.SemaphoreType.DMA,                       # fc1 weight DMA semaphore
        ],
    )(x2d, *packed)


def init_params(key):
    ks = jax.random.split(key, 20)
    n = lambda k, shp, s=0.1: (jax.random.normal(k, shp, jnp.float32) * s)
    return {
        "ln_g": jnp.ones((1, L0), jnp.float32),
        "ln_b": jnp.zeros((1, L0), jnp.float32),
        "w1": n(ks[0], (8, 1, 3)),   "b1": n(ks[1], (8,), 0.01),
        "w2": n(ks[2], (16, 8, 3)),  "b2": n(ks[3], (16,), 0.01),
        "wi1": n(ks[4], (8, 16, 1)), "bi1": n(ks[5], (8,), 0.01),
        "wi2": n(ks[6], (8, 16, 3)), "bi2": n(ks[7], (8,), 0.01),
        "wi3": n(ks[8], (8, 16, 5)), "bi3": n(ks[9], (8,), 0.01),
        "wi4": n(ks[10], (8, 16, 1)), "bi4": n(ks[11], (8,), 0.01),
        "fc1_w": n(ks[12], (128, 1600), 0.02), "fc1_b": n(ks[13], (128,), 0.01),
        "fc2_w": n(ks[14], (NUM_CLASSES, 128), 0.05),
        "fc2_b": n(ks[15], (NUM_CLASSES,), 0.01),
        "bn_g": jnp.ones((128,), jnp.float32) + n(ks[16], (128,), 0.05),
        "bn_b": n(ks[17], (128,), 0.05),
        "bn_rm": jnp.zeros((128,), jnp.float32),   # running mean (eval mode)
        "bn_rv": jnp.ones((128,), jnp.float32),    # running var  (eval mode)
    }


if __name__ == "__main__":
    key = jax.random.PRNGKey(0)
    k_x, k_p = jax.random.split(key)
    x = jax.random.normal(k_x, (B, 1, L0), jnp.float32)   # PyTorch NCW: (B, 1, 200)
    params = init_params(k_p)

    packed = prepare_inputs(params)                       # built once, reused per call
    out = deepspectra_forward(x, packed)
    out = jax.block_until_ready(out)

    assert out.shape == (B, NUM_CLASSES)
    assert bool(jnp.all(jnp.isfinite(out)))
    # softmax rows should sum to ~1
    assert bool(jnp.allclose(jnp.sum(out, axis=-1), 1.0, atol=1e-5))
    print("KERNEL_OK")
</pallas_src>

<mosaic_0001>
module attributes {stable_mosaic.version = 11 : i64} {
  func.func @deepspectra_kernel(%arg0: memref<2x200xf32, #tpu.memory_space<vmem>>, %arg1: memref<200x256xf32, #tpu.memory_space<vmem>>, %arg2: memref<1x256xf32, #tpu.memory_space<vmem>>, %arg3: memref<1x256xf32, #tpu.memory_space<vmem>>, %arg4: memref<16x2xf32, #tpu.memory_space<vmem>>, %arg5: memref<16x2xf32, #tpu.memory_space<vmem>>, %arg6: memref<16x2xf32, #tpu.memory_space<vmem>>, %arg7: memref<16x1xf32, #tpu.memory_space<vmem>>, %arg8: memref<256x128xf32, #tpu.memory_space<vmem>>, %arg9: memref<32x48xf32, #tpu.memory_space<vmem>>, %arg10: memref<32x1xf32, #tpu.memory_space<vmem>>, %arg11: memref<128x128xf32, #tpu.memory_space<vmem>>, %arg12: memref<48x160xf32, #tpu.memory_space<vmem>>, %arg13: memref<48x1xf32, #tpu.memory_space<vmem>>, %arg14: memref<16x32xf32, #tpu.memory_space<vmem>>, %arg15: memref<16x1xf32, #tpu.memory_space<vmem>>, %arg16: memref<1600x128xbf16, #tpu.memory_space<any>>, %arg17: memref<1x128xf32, #tpu.memory_space<vmem>>, %arg18: memref<1x128xf32, #tpu.memory_space<vmem>>, %arg19: memref<1x128xf32, #tpu.memory_space<vmem>>, %arg20: memref<128x4xbf16, #tpu.memory_space<vmem>>, %arg21: memref<1x4xf32, #tpu.memory_space<vmem>>, %arg22: memref<2x4xf32, #tpu.memory_space<vmem>>, %arg23: memref<64x128xf32, #tpu.memory_space<vmem>>, %arg24: memref<2x1600xf32, #tpu.memory_space<vmem>>, %arg25: memref<1600x128xbf16, #tpu.memory_space<vmem>>, %arg26: memref<!tpu.dma_semaphore, #tpu.memory_space<semaphore_mem>>) attributes {dimension_semantics = [], scalar_prefetch = 0 : i64, scratch_operands = 4 : i64, tpu.core_type = #tpu.core_type<tc>} {
    tpu.enqueue_dma source(%arg16 : memref<1600x128xbf16, #tpu.memory_space<any>>) target(%arg25 : memref<1600x128xbf16, #tpu.memory_space<vmem>>) target_semaphore(%arg26 : memref<!tpu.dma_semaphore, #tpu.memory_space<semaphore_mem>>)
    %c0 = arith.constant 0 : index
    %c0_0 = arith.constant 0 : index
    %0 = vector.load %arg0[%c0, %c0_0] : memref<2x200xf32, #tpu.memory_space<vmem>>, vector<2x200xf32>
    %c0_1 = arith.constant 0 : index
    %c0_2 = arith.constant 0 : index
    %1 = vector.load %arg1[%c0_1, %c0_2] : memref<200x256xf32, #tpu.memory_space<vmem>>, vector<200x256xf32>
    %cst = arith.constant dense<0.000000e+00> : vector<2x256xf32>
    %2 = tpu.matmul %0, %1, %cst {dimension_numbers = #tpu.dot_dimension_numbers<[1], [0], [0], [1], [0, 0, 1, 1], [], []>} : vector<2x200xf32>, vector<200x256xf32>, vector<2x256xf32> -> vector<2x256xf32>
    %cst_3 = arith.constant dense<0.000000e+00> : vector<2xf32>
    %3 = vector.multi_reduction <add>, %2, %cst_3 [1] : vector<2x256xf32> to vector<2xf32>
    %4 = vector.shape_cast %3 : vector<2xf32> to vector<2x1xf32>
    %cst_4 = arith.constant 5.000000e-03 : f32
    %5 = vector.broadcast %cst_4 : f32 to vector<2x1xf32>
    %6 = arith.mulf %4, %5 : vector<2x1xf32>
    %7 = arith.mulf %2, %2 : vector<2x256xf32>
    %cst_5 = arith.constant dense<0.000000e+00> : vector<2xf32>
    %8 = vector.multi_reduction <add>, %7, %cst_5 [1] : vector<2x256xf32> to vector<2xf32>
    %9 = vector.shape_cast %8 : vector<2xf32> to vector<2x1xf32>
    %cst_6 = arith.constant 5.000000e-03 : f32
    %10 = vector.broadcast %cst_6 : f32 to vector<2x1xf32>
    %11 = arith.mulf %9, %10 : vector<2x1xf32>
    %12 = arith.mulf %6, %6 : vector<2x1xf32>
    %13 = arith.subf %11, %12 : vector<2x1xf32>
    %14 = vector.broadcast %6 : vector<2x1xf32> to vector<2x256xf32>
    %15 = arith.subf %2, %14 : vector<2x256xf32>
    %cst_7 = arith.constant 9.99999974E-6 : f32
    %16 = vector.broadcast %cst_7 : f32 to vector<2x1xf32>
    %17 = arith.addf %13, %16 : vector<2x1xf32>
    %18 = math.rsqrt %17 : vector<2x1xf32>
    %19 = vector.broadcast %18 : vector<2x1xf32> to vector<2x256xf32>
    %20 = arith.mulf %15, %19 : vector<2x256xf32>
    %c0_8 = arith.constant 0 : index
    %c0_9 = arith.constant 0 : index
    %21 = vector.load %arg2[%c0_8, %c0_9] : memref<1x256xf32, #tpu.memory_space<vmem>>, vector<1x256xf32>
    %22 = vector.broadcast %21 : vector<1x256xf32> to vector<2x256xf32>
    %23 = arith.mulf %20, %22 : vector<2x256xf32>
    %c0_10 = arith.constant 0 : index
    %c0_11 = arith.constant 0 : index
    %24 = vector.load %arg3[%c0_10, %c0_11] : memref<1x256xf32, #tpu.memory_space<vmem>>, vector<1x256xf32>
    %25 = vector.broadcast %24 : vector<1x256xf32> to vector<2x256xf32>
    %26 = arith.addf %23, %25 : vector<2x256xf32>
    %c1_i32 = arith.constant 1 : i32
    %27 = tpu.dynamic_rotate %26 by %c1_i32 dim 1 : vector<2x256xf32>, i32 -> vector<2x256xf32>
    %c255_i32 = arith.constant 255 : i32
    %28 = tpu.dynamic_rotate %26 by %c255_i32 dim 1 : vector<2x256xf32>, i32 -> vector<2x256xf32>
    %c0_12 = arith.constant 0 : index
    %c0_13 = arith.constant 0 : index
    %29 = vector.load %arg4[%c0_12, %c0_13] : memref<16x2xf32, #tpu.memory_space<vmem>>, vector<16x2xf32>
    %cst_14 = arith.constant dense<0.000000e+00> : vector<16x256xf32>
    %30 = tpu.matmul %29, %27, %cst_14 {dimension_numbers = #tpu.dot_dimension_numbers<[1], [0], [0], [1], [0, 0, 1, 1], [], []>} : vector<16x2xf32>, vector<2x256xf32>, vector<16x256xf32> -> vector<16x256xf32>
    %c0_15 = arith.constant 0 : index
    %c0_16 = arith.constant 0 : index
    %31 = vector.load %arg5[%c0_15, %c0_16] : memref<16x2xf32, #tpu.memory_space<vmem>>, vector<16x2xf32>
    %cst_17 = arith.constant dense<0.000000e+00> : vector<16x256xf32>
    %32 = tpu.matmul %31, %26, %cst_17 {dimension_numbers = #tpu.dot_dimension_numbers<[1], [0], [0], [1], [0, 0, 1, 1], [], []>} : vector<16x2xf32>, vector<2x256xf32>, vector<16x256xf32> -> vector<16x256xf32>
    %33 = arith.addf %30, %32 : vector<16x256xf32>
    %c0_18 = arith.constant 0 : index
    %c0_19 = arith.constant 0 : index
    %34 = vector.load %arg6[%c0_18, %c0_19] : memref<16x2xf32, #tpu.memory_space<vmem>>, vector<16x2xf32>
    %cst_20 = arith.constant dense<0.000000e+00> : vector<16x256xf32>
    %35 = tpu.matmul %34, %28, %cst_20 {dimension_numbers = #tpu.dot_dimension_numbers<[1], [0], [0], [1], [0, 0, 1, 1], [], []>} : vector<16x2xf32>, vector<2x256xf32>, vector<16x256xf32> -> vector<16x256xf32>
    %36 = arith.addf %33, %35 : vector<16x256xf32>
    %c0_21 = arith.constant 0 : index
    %c0_22 = arith.constant 0 : index
    %37 = vector.load %arg7[%c0_21, %c0_22] : memref<16x1xf32, #tpu.memory_space<vmem>>, vector<16x1xf32>
    %38 = vector.broadcast %37 : vector<16x1xf32> to vector<16x256xf32>
    %39 = arith.addf %36, %38 : vector<16x256xf32>
    %cst_23 = arith.constant 0.000000e+00 : f32
    %40 = vector.broadcast %cst_23 : f32 to vector<16x256xf32>
    %41 = arith.maximumf %39, %40 : vector<16x256xf32>
    %c255_i32_24 = arith.constant 255 : i32
    %42 = tpu.dynamic_rotate %41 by %c255_i32_24 dim 1 : vector<16x256xf32>, i32 -> vector<16x256xf32>
    %43 = arith.maximumf %41, %42 : vector<16x256xf32>
    %c0_25 = arith.constant 0 : index
    %c0_26 = arith.constant 0 : index
    %44 = vector.load %arg8[%c0_25, %c0_26] : memref<256x128xf32, #tpu.memory_space<vmem>>, vector<256x128xf32>
    %cst_27 = arith.constant dense<0.000000e+00> : vector<16x128xf32>
    %45 = tpu.matmul %43, %44, %cst_27 {dimension_numbers = #tpu.dot_dimension_numbers<[1], [0], [0], [1], [0, 0, 1, 1], [], []>} : vector<16x256xf32>, vector<256x128xf32>, vector<16x128xf32> -> vector<16x128xf32>
    %c1_i32_28 = arith.constant 1 : i32
    %46 = tpu.dynamic_rotate %45 by %c1_i32_28 dim 1 : vector<16x128xf32>, i32 -> vector<16x128xf32>
    %c127_i32 = arith.constant 127 : i32
    %47 = tpu.dynamic_rotate %45 by %c127_i32 dim 1 : vector<16x128xf32>, i32 -> vector<16x128xf32>
    %48 = tpu.concatenate %46, %45, %47 in 0 : vector<16x128xf32>, vector<16x128xf32>, vector<16x128xf32> -> vector<48x128xf32>
    %c0_29 = arith.constant 0 : index
    %c0_30 = arith.constant 0 : index
    %49 = vector.load %arg9[%c0_29, %c0_30] : memref<32x48xf32, #tpu.memory_space<vmem>>, vector<32x48xf32>
    %cst_31 = arith.constant dense<0.000000e+00> : vector<32x128xf32>
    %50 = tpu.matmul %49, %48, %cst_31 {dimension_numbers = #tpu.dot_dimension_numbers<[1], [0], [0], [1], [0, 0, 1, 1], [], []>} : vector<32x48xf32>, vector<48x128xf32>, vector<32x128xf32> -> vector<32x128xf32>
    %c0_32 = arith.constant 0 : index
    %c0_33 = arith.constant 0 : index
    %51 = vector.load %arg10[%c0_32, %c0_33] : memref<32x1xf32, #tpu.memory_space<vmem>>, vector<32x1xf32>
    %52 = vector.broadcast %51 : vector<32x1xf32> to vector<32x128xf32>
    %53 = arith.addf %50, %52 : vector<32x128xf32>
    %cst_34 = arith.constant 0.000000e+00 : f32
    %54 = vector.broadcast %cst_34 : f32 to vector<32x128xf32>
    %55 = arith.maximumf %53, %54 : vector<32x128xf32>
    %c127_i32_35 = arith.constant 127 : i32
    %56 = tpu.dynamic_rotate %55 by %c127_i32_35 dim 1 : vector<32x128xf32>, i32 -> vector<32x128xf32>
    %57 = arith.maximumf %55, %56 : vector<32x128xf32>
    %c0_36 = arith.constant 0 : index
    %c0_37 = arith.constant 0 : index
    %58 = vector.load %arg11[%c0_36, %c0_37] : memref<128x128xf32, #tpu.memory_space<vmem>>, vector<128x128xf32>
    %cst_38 = arith.constant dense<0.000000e+00> : vector<32x128xf32>
    %59 = tpu.matmul %57, %58, %cst_38 {dimension_numbers = #tpu.dot_dimension_numbers<[1], [0], [0], [1], [0, 0, 1, 1], [], []>} : vector<32x128xf32>, vector<128x128xf32>, vector<32x128xf32> -> vector<32x128xf32>
    %c1_i32_39 = arith.constant 1 : i32
    %60 = tpu.dynamic_rotate %59 by %c1_i32_39 dim 1 : vector<32x128xf32>, i32 -> vector<32x128xf32>
    %c127_i32_40 = arith.constant 127 : i32
    %61 = tpu.dynamic_rotate %59 by %c127_i32_40 dim 1 : vector<32x128xf32>, i32 -> vector<32x128xf32>
    %c2_i32 = arith.constant 2 : i32
    %62 = tpu.dynamic_rotate %59 by %c2_i32 dim 1 : vector<32x128xf32>, i32 -> vector<32x128xf32>
    %c126_i32 = arith.constant 126 : i32
    %63 = tpu.dynamic_rotate %59 by %c126_i32 dim 1 : vector<32x128xf32>, i32 -> vector<32x128xf32>
    %64 = tpu.concatenate %62, %60, %59, %61, %63 in 0 : vector<32x128xf32>, vector<32x128xf32>, vector<32x128xf32>, vector<32x128xf32>, vector<32x128xf32> -> vector<160x128xf32>
    %c0_41 = arith.constant 0 : index
    %c0_42 = arith.constant 0 : index
    %65 = vector.load %arg12[%c0_41, %c0_42] : memref<48x160xf32, #tpu.memory_space<vmem>>, vector<48x160xf32>
    %cst_43 = arith.constant dense<0.000000e+00> : vector<48x128xf32>
    %66 = tpu.matmul %65, %64, %cst_43 {dimension_numbers = #tpu.dot_dimension_numbers<[1], [0], [0], [1], [0, 0, 1, 1], [], []>} : vector<48x160xf32>, vector<160x128xf32>, vector<48x128xf32> -> vector<48x128xf32>
    %c0_44 = arith.constant 0 : index
    %c0_45 = arith.constant 0 : index
    %67 = vector.load %arg13[%c0_44, %c0_45] : memref<48x1xf32, #tpu.memory_space<vmem>>, vector<48x1xf32>
    %68 = vector.broadcast %67 : vector<48x1xf32> to vector<48x128xf32>
    %69 = arith.addf %66, %68 : vector<48x128xf32>
    %cst_46 = arith.constant 0.000000e+00 : f32
    %70 = vector.broadcast %cst_46 : f32 to vector<48x128xf32>
    %71 = arith.maximumf %69, %70 : vector<48x128xf32>
    %72 = arith.maximumf %60, %59 : vector<32x128xf32>
    %73 = arith.maximumf %72, %61 : vector<32x128xf32>
    %c0_47 = arith.constant 0 : index
    %c0_48 = arith.constant 0 : index
    %74 = vector.load %arg14[%c0_47, %c0_48] : memref<16x32xf32, #tpu.memory_space<vmem>>, vector<16x32xf32>
    %cst_49 = arith.constant dense<0.000000e+00> : vector<16x128xf32>
    %75 = tpu.matmul %74, %73, %cst_49 {dimension_numbers = #tpu.dot_dimension_numbers<[1], [0], [0], [1], [0, 0, 1, 1], [], []>} : vector<16x32xf32>, vector<32x128xf32>, vector<16x128xf32> -> vector<16x128xf32>
    %c0_50 = arith.constant 0 : index
    %c0_51 = arith.constant 0 : index
    %76 = vector.load %arg15[%c0_50, %c0_51] : memref<16x1xf32, #tpu.memory_space<vmem>>, vector<16x1xf32>
    %77 = vector.broadcast %76 : vector<16x1xf32> to vector<16x128xf32>
    %78 = arith.addf %75, %77 : vector<16x128xf32>
    %cst_52 = arith.constant 0.000000e+00 : f32
    %79 = vector.broadcast %cst_52 : f32 to vector<16x128xf32>
    %80 = arith.maximumf %78, %79 : vector<16x128xf32>
    %c0_53 = arith.constant 0 : index
    %c0_54 = arith.constant 0 : index
    %81 = vector.load %arg23[%c0_53, %c0_54] : memref<64x128xf32, #tpu.memory_space<vmem>>, vector<48x128xf32>
    tpu.vector_store %arg23[%c0_53, %c0_54], %71 {strides = array<i32>} : memref<64x128xf32, #tpu.memory_space<vmem>>, vector<48x128xf32>,
    %c48 = arith.constant 48 : index
    %c0_55 = arith.constant 0 : index
    %82 = vector.load %arg23[%c48, %c0_55] : memref<64x128xf32, #tpu.memory_space<vmem>>, vector<16x128xf32>
    tpu.vector_store %arg23[%c48, %c0_55], %80 {strides = array<i32>} : memref<64x128xf32, #tpu.memory_space<vmem>>, vector<16x128xf32>,
    %c0_56 = arith.constant 0 : index
    %c0_57 = arith.constant 0 : index
    %83 = vector.load %arg23[%c0_56, %c0_57] : memref<64x128xf32, #tpu.memory_space<vmem>>, vector<1x50xf32>
    %c0_58 = arith.constant 0 : index
    %c0_59 = arith.constant 0 : index
    %84 = vector.load %arg24[%c0_58, %c0_59] : memref<2x1600xf32, #tpu.memory_space<vmem>>, vector<1x50xf32>
    tpu.vector_store %arg24[%c0_58, %c0_59], %83 {strides = array<i32>} : memref<2x1600xf32, #tpu.memory_space<vmem>>, vector<1x50xf32>,
    %c1 = arith.constant 1 : index
    %c0_60 = arith.constant 0 : index
    %85 = vector.load %arg23[%c1, %c0_60] : memref<64x128xf32, #tpu.memory_space<vmem>>, vector<1x50xf32>
    %c0_61 = arith.constant 0 : index
    %c50 = arith.constant 50 : index
    %86 = vector.load %arg24[%c0_61, %c50] : memref<2x1600xf32, #tpu.memory_space<vmem>>, vector<1x50xf32>
    tpu.vector_store %arg24[%c0_61, %c50], %85 {strides = array<i32>} : memref<2x1600xf32, #tpu.memory_space<vmem>>, vector<1x50xf32>,
    %c2 = arith.constant 2 : index
    %c0_62 = arith.constant 0 : index
    %87 = vector.load %arg23[%c2, %c0_62] : memref<64x128xf32, #tpu.memory_space<vmem>>, vector<1x50xf32>
    %c0_63 = arith.constant 0 : index
    %c100 = arith.constant 100 : index
    %88 = vector.load %arg24[%c0_63, %c100] : memref<2x1600xf32, #tpu.memory_space<vmem>>, vector<1x50xf32>
    tpu.vector_store %arg24[%c0_63, %c100], %87 {strides = array<i32>} : memref<2x1600xf32, #tpu.memory_space<vmem>>, vector<1x50xf32>,
    %c3 = arith.constant 3 : index
    %c0_64 = arith.constant 0 : index
    %89 = vector.load %arg23[%c3, %c0_64] : memref<64x128xf32, #tpu.memory_space<vmem>>, vector<1x50xf32>
    %c0_65 = arith.constant 0 : index
    %c150 = arith.constant 150 : index
    %90 = vector.load %arg24[%c0_65, %c150] : memref<2x1600xf32, #tpu.memory_space<vmem>>, vector<1x50xf32>
    tpu.vector_store %arg24[%c0_65, %c150], %89 {strides = array<i32>} : memref<2x1600xf32, #tpu.memory_space<vmem>>, vector<1x50xf32>,
    %c4 = arith.constant 4 : index
    %c0_66 = arith.constant 0 : index
    %91 = vector.load %arg23[%c4, %c0_66] : memref<64x128xf32, #tpu.memory_space<vmem>>, vector<1x50xf32>
    %c0_67 = arith.constant 0 : index
    %c200 = arith.constant 200 : index
    %92 = vector.load %arg24[%c0_67, %c200] : memref<2x1600xf32, #tpu.memory_space<vmem>>, vector<1x50xf32>
    tpu.vector_store %arg24[%c0_67, %c200], %91 {strides = array<i32>} : memref<2x1600xf32, #tpu.memory_space<vmem>>, vector<1x50xf32>,
    %c5 = arith.constant 5 : index
    %c0_68 = arith.constant 0 : index
    %93 = vector.load %arg23[%c5, %c0_68] : memref<64x128xf32, #tpu.memory_space<vmem>>, vector<1x50xf32>
    %c0_69 = arith.constant 0 : index
    %c250 = arith.constant 250 : index
    %94 = vector.load %arg24[%c0_69, %c250] : memref<2x1600xf32, #tpu.memory_space<vmem>>, vector<1x50xf32>
    tpu.vector_store %arg24[%c0_69, %c250], %93 {strides = array<i32>} : memref<2x1600xf32, #tpu.memory_space<vmem>>, vector<1x50xf32>,
    %c6 = arith.constant 6 : index
    %c0_70 = arith.constant 0 : index
    %95 = vector.load %arg23[%c6, %c0_70] : memref<64x128xf32, #tpu.memory_space<vmem>>, vector<1x50xf32>
    %c0_71 = arith.constant 0 : index
    %c300 = arith.constant 300 : index
    %96 = vector.load %arg24[%c0_71, %c300] : memref<2x1600xf32, #tpu.memory_space<vmem>>, vector<1x50xf32>
    tpu.vector_store %arg24[%c0_71, %c300], %95 {strides = array<i32>} : memref<2x1600xf32, #tpu.memory_space<vmem>>, vector<1x50xf32>,
    %c7 = arith.constant 7 : index
    %c0_72 = arith.constant 0 : index
    %97 = vector.load %arg23[%c7, %c0_72] : memref<64x128xf32, #tpu.memory_space<vmem>>, vector<1x50xf32>
    %c0_73 = arith.constant 0 : index
    %c350 = arith.constant 350 : index
    %98 = vector.load %arg24[%c0_73, %c350] : memref<2x1600xf32, #tpu.memory_space<vmem>>, vector<1x50xf32>
    tpu.vector_store %arg24[%c0_73, %c350], %97 {strides = array<i32>} : memref<2x1600xf32, #tpu.memory_space<vmem>>, vector<1x50xf32>,
    %c16 = arith.constant 16 : index
    %c0_74 = arith.constant 0 : index
    %99 = vector.load %arg23[%c16, %c0_74] : memref<64x128xf32, #tpu.memory_space<vmem>>, vector<1x50xf32>
    %c0_75 = arith.constant 0 : index
    %c400 = arith.constant 400 : index
    %100 = vector.load %arg24[%c0_75, %c400] : memref<2x1600xf32, #tpu.memory_space<vmem>>, vector<1x50xf32>
    tpu.vector_store %arg24[%c0_75, %c400], %99 {strides = array<i32>} : memref<2x1600xf32, #tpu.memory_space<vmem>>, vector<1x50xf32>,
    %c17 = arith.constant 17 : index
    %c0_76 = arith.constant 0 : index
    %101 = vector.load %arg23[%c17, %c0_76] : memref<64x128xf32, #tpu.memory_space<vmem>>, vector<1x50xf32>
    %c0_77 = arith.constant 0 : index
    %c450 = arith.constant 450 : index
    %102 = vector.load %arg24[%c0_77, %c450] : memref<2x1600xf32, #tpu.memory_space<vmem>>, vector<1x50xf32>
    tpu.vector_store %arg24[%c0_77, %c450], %101 {strides = array<i32>} : memref<2x1600xf32, #tpu.memory_space<vmem>>, vector<1x50xf32>,
    %c18 = arith.constant 18 : index
    %c0_78 = arith.constant 0 : index
    %103 = vector.load %arg23[%c18, %c0_78] : memref<64x128xf32, #tpu.memory_space<vmem>>, vector<1x50xf32>
    %c0_79 = arith.constant 0 : index
    %c500 = arith.constant 500 : index
    %104 = vector.load %arg24[%c0_79, %c500] : memref<2x1600xf32, #tpu.memory_space<vmem>>, vector<1x50xf32>
    tpu.vector_store %arg24[%c0_79, %c500], %103 {strides = array<i32>} : memref<2x1600xf32, #tpu.memory_space<vmem>>, vector<1x50xf32>,
    %c19 = arith.constant 19 : index
    %c0_80 = arith.constant 0 : index
    %105 = vector.load %arg23[%c19, %c0_80] : memref<64x128xf32, #tpu.memory_space<vmem>>, vector<1x50xf32>
    %c0_81 = arith.constant 0 : index
    %c550 = arith.constant 550 : index
    %106 = vector.load %arg24[%c0_81, %c550] : memref<2x1600xf32, #tpu.memory_space<vmem>>, vector<1x50xf32>
    tpu.vector_store %arg24[%c0_81, %c550], %105 {strides = array<i32>} : memref<2x1600xf32, #tpu.memory_space<vmem>>, vector<1x50xf32>,
    %c20 = arith.constant 20 : index
    %c0_82 = arith.constant 0 : index
    %107 = vector.load %arg23[%c20, %c0_82] : memref<64x128xf32, #tpu.memory_space<vmem>>, vector<1x50xf32>
    %c0_83 = arith.constant 0 : index
    %c600 = arith.constant 600 : index
    %108 = vector.load %arg24[%c0_83, %c600] : memref<2x1600xf32, #tpu.memory_space<vmem>>, vector<1x50xf32>
    tpu.vector_store %arg24[%c0_83, %c600], %107 {strides = array<i32>} : memref<2x1600xf32, #tpu.memory_space<vmem>>, vector<1x50xf32>,
    %c21 = arith.constant 21 : index
    %c0_84 = arith.constant 0 : index
    %109 = vector.load %arg23[%c21, %c0_84] : memref<64x128xf32, #tpu.memory_space<vmem>>, vector<1x50xf32>
    %c0_85 = arith.constant 0 : index
    %c650 = arith.constant 650 : index
    %110 = vector.load %arg24[%c0_85, %c650] : memref<2x1600xf32, #tpu.memory_space<vmem>>, vector<1x50xf32>
    tpu.vector_store %arg24[%c0_85, %c650], %109 {strides = array<i32>} : memref<2x1600xf32, #tpu.memory_space<vmem>>, vector<1x50xf32>,
    %c22 = arith.constant 22 : index
    %c0_86 = arith.constant 0 : index
    %111 = vector.load %arg23[%c22, %c0_86] : memref<64x128xf32, #tpu.memory_space<vmem>>, vector<1x50xf32>
    %c0_87 = arith.constant 0 : index
    %c700 = arith.constant 700 : index
    %112 = vector.load %arg24[%c0_87, %c700] : memref<2x1600xf32, #tpu.memory_space<vmem>>, vector<1x50xf32>
    tpu.vector_store %arg24[%c0_87, %c700], %111 {strides = array<i32>} : memref<2x1600xf32, #tpu.memory_space<vmem>>, vector<1x50xf32>,
    %c23 = arith.constant 23 : index
    %c0_88 = arith.constant 0 : index
    %113 = vector.load %arg23[%c23, %c0_88] : memref<64x128xf32, #tpu.memory_space<vmem>>, vector<1x50xf32>
    %c0_89 = arith.constant 0 : index
    %c750 = arith.constant 750 : index
    %114 = vector.load %arg24[%c0_89, %c750] : memref<2x1600xf32, #tpu.memory_space<vmem>>, vector<1x50xf32>
    tpu.vector_store %arg24[%c0_89, %c750], %113 {strides = array<i32>} : memref<2x1600xf32, #tpu.memory_space<vmem>>, vector<1x50xf32>,
    %c32 = arith.constant 32 : index
    %c0_90 = arith.constant 0 : index
    %115 = vector.load %arg23[%c32, %c0_90] : memref<64x128xf32, #tpu.memory_space<vmem>>, vector<1x50xf32>
    %c0_91 = arith.constant 0 : index
    %c800 = arith.constant 800 : index
    %116 = vector.load %arg24[%c0_91, %c800] : memref<2x1600xf32, #tpu.memory_space<vmem>>, vector<1x50xf32>
    tpu.vector_store %arg24[%c0_91, %c800], %115 {strides = array<i32>} : memref<2x1600xf32, #tpu.memory_space<vmem>>, vector<1x50xf32>,
    %c33 = arith.constant 33 : index
    %c0_92 = arith.constant 0 : index
    %117 = vector.load %arg23[%c33, %c0_92] : memref<64x128xf32, #tpu.memory_space<vmem>>, vector<1x50xf32>
    %c0_93 = arith.constant 0 : index
    %c850 = arith.constant 850 : index
    %118 = vector.load %arg24[%c0_93, %c850] : memref<2x1600xf32, #tpu.memory_space<vmem>>, vector<1x50xf32>
    tpu.vector_store %arg24[%c0_93, %c850], %117 {strides = array<i32>} : memref<2x1600xf32, #tpu.memory_space<vmem>>, vector<1x50xf32>,
    %c34 = arith.constant 34 : index
    %c0_94 = arith.constant 0 : index
    %119 = vector.load %arg23[%c34, %c0_94] : memref<64x128xf32, #tpu.memory_space<vmem>>, vector<1x50xf32>
    %c0_95 = arith.constant 0 : index
    %c900 = arith.constant 900 : index
    %120 = vector.load %arg24[%c0_95, %c900] : memref<2x1600xf32, #tpu.memory_space<vmem>>, vector<1x50xf32>
    tpu.vector_store %arg24[%c0_95, %c900], %119 {strides = array<i32>} : memref<2x1600xf32, #tpu.memory_space<vmem>>, vector<1x50xf32>,
    %c35 = arith.constant 35 : index
    %c0_96 = arith.constant 0 : index
    %121 = vector.load %arg23[%c35, %c0_96] : memref<64x128xf32, #tpu.memory_space<vmem>>, vector<1x50xf32>
    %c0_97 = arith.constant 0 : index
    %c950 = arith.constant 950 : index
    %122 = vector.load %arg24[%c0_97, %c950] : memref<2x1600xf32, #tpu.memory_space<vmem>>, vector<1x50xf32>
    tpu.vector_store %arg24[%c0_97, %c950], %121 {strides = array<i32>} : memref<2x1600xf32, #tpu.memory_space<vmem>>, vector<1x50xf32>,
    %c36 = arith.constant 36 : index
    %c0_98 = arith.constant 0 : index
    %123 = vector.load %arg23[%c36, %c0_98] : memref<64x128xf32, #tpu.memory_space<vmem>>, vector<1x50xf32>
    %c0_99 = arith.constant 0 : index
    %c1000 = arith.constant 1000 : index
    %124 = vector.load %arg24[%c0_99, %c1000] : memref<2x1600xf32, #tpu.memory_space<vmem>>, vector<1x50xf32>
    tpu.vector_store %arg24[%c0_99, %c1000], %123 {strides = array<i32>} : memref<2x1600xf32, #tpu.memory_space<vmem>>, vector<1x50xf32>,
    %c37 = arith.constant 37 : index
    %c0_100 = arith.constant 0 : index
    %125 = vector.load %arg23[%c37, %c0_100] : memref<64x128xf32, #tpu.memory_space<vmem>>, vector<1x50xf32>
    %c0_101 = arith.constant 0 : index
    %c1050 = arith.constant 1050 : index
    %126 = vector.load %arg24[%c0_101, %c1050] : memref<2x1600xf32, #tpu.memory_space<vmem>>, vector<1x50xf32>
    tpu.vector_store %arg24[%c0_101, %c1050], %125 {strides = array<i32>} : memref<2x1600xf32, #tpu.memory_space<vmem>>, vector<1x50xf32>,
    %c38 = arith.constant 38 : index
    %c0_102 = arith.constant 0 : index
    %127 = vector.load %arg23[%c38, %c0_102] : memref<64x128xf32, #tpu.memory_space<vmem>>, vector<1x50xf32>
    %c0_103 = arith.constant 0 : index
    %c1100 = arith.constant 1100 : index
    %128 = vector.load %arg24[%c0_103, %c1100] : memref<2x1600xf32, #tpu.memory_space<vmem>>, vector<1x50xf32>
    tpu.vector_store %arg24[%c0_103, %c1100], %127 {strides = array<i32>} : memref<2x1600xf32, #tpu.memory_space<vmem>>, vector<1x50xf32>,
    %c39 = arith.constant 39 : index
    %c0_104 = arith.constant 0 : index
    %129 = vector.load %arg23[%c39, %c0_104] : memref<64x128xf32, #tpu.memory_space<vmem>>, vector<1x50xf32>
    %c0_105 = arith.constant 0 : index
    %c1150 = arith.constant 1150 : index
    %130 = vector.load %arg24[%c0_105, %c1150] : memref<2x1600xf32, #tpu.memory_space<vmem>>, vector<1x50xf32>
    tpu.vector_store %arg24[%c0_105, %c1150], %129 {strides = array<i32>} : memref<2x1600xf32, #tpu.memory_space<vmem>>, vector<1x50xf32>,
    %c48_106 = arith.constant 48 : index
    %c0_107 = arith.constant 0 : index
    %131 = vector.load %arg23[%c48_106, %c0_107] : memref<64x128xf32, #tpu.memory_space<vmem>>, vector<1x50xf32>
    %c0_108 = arith.constant 0 : index
    %c1200 = arith.constant 1200 : index
    %132 = vector.load %arg24[%c0_108, %c1200] : memref<2x1600xf32, #tpu.memory_space<vmem>>, vector<1x50xf32>
    tpu.vector_store %arg24[%c0_108, %c1200], %131 {strides = array<i32>} : memref<2x1600xf32, #tpu.memory_space<vmem>>, vector<1x50xf32>,
    %c49 = arith.constant 49 : index
    %c0_109 = arith.constant 0 : index
    %133 = vector.load %arg23[%c49, %c0_109] : memref<64x128xf32, #tpu.memory_space<vmem>>, vector<1x50xf32>
    %c0_110 = arith.constant 0 : index
    %c1250 = arith.constant 1250 : index
    %134 = vector.load %arg24[%c0_110, %c1250] : memref<2x1600xf32, #tpu.memory_space<vmem>>, vector<1x50xf32>
    tpu.vector_store %arg24[%c0_110, %c1250], %133 {strides = array<i32>} : memref<2x1600xf32, #tpu.memory_space<vmem>>, vector<1x50xf32>,
    %c50_111 = arith.constant 50 : index
    %c0_112 = arith.constant 0 : index
    %135 = vector.load %arg23[%c50_111, %c0_112] : memref<64x128xf32, #tpu.memory_space<vmem>>, vector<1x50xf32>
    %c0_113 = arith.constant 0 : index
    %c1300 = arith.constant 1300 : index
    %136 = vector.load %arg24[%c0_113, %c1300] : memref<2x1600xf32, #tpu.memory_space<vmem>>, vector<1x50xf32>
    tpu.vector_store %arg24[%c0_113, %c1300], %135 {strides = array<i32>} : memref<2x1600xf32, #tpu.memory_space<vmem>>, vector<1x50xf32>,
    %c51 = arith.constant 51 : index
    %c0_114 = arith.constant 0 : index
    %137 = vector.load %arg23[%c51, %c0_114] : memref<64x128xf32, #tpu.memory_space<vmem>>, vector<1x50xf32>
    %c0_115 = arith.constant 0 : index
    %c1350 = arith.constant 1350 : index
    %138 = vector.load %arg24[%c0_115, %c1350] : memref<2x1600xf32, #tpu.memory_space<vmem>>, vector<1x50xf32>
    tpu.vector_store %arg24[%c0_115, %c1350], %137 {strides = array<i32>} : memref<2x1600xf32, #tpu.memory_space<vmem>>, vector<1x50xf32>,
    %c52 = arith.constant 52 : index
    %c0_116 = arith.constant 0 : index
    %139 = vector.load %arg23[%c52, %c0_116] : memref<64x128xf32, #tpu.memory_space<vmem>>, vector<1x50xf32>
    %c0_117 = arith.constant 0 : index
    %c1400 = arith.constant 1400 : index
    %140 = vector.load %arg24[%c0_117, %c1400] : memref<2x1600xf32, #tpu.memory_space<vmem>>, vector<1x50xf32>
    tpu.vector_store %arg24[%c0_117, %c1400], %139 {strides = array<i32>} : memref<2x1600xf32, #tpu.memory_space<vmem>>, vector<1x50xf32>,
    %c53 = arith.constant 53 : index
    %c0_118 = arith.constant 0 : index
    %141 = vector.load %arg23[%c53, %c0_118] : memref<64x128xf32, #tpu.memory_space<vmem>>, vector<1x50xf32>
    %c0_119 = arith.constant 0 : index
    %c1450 = arith.constant 1450 : index
    %142 = vector.load %arg24[%c0_119, %c1450] : memref<2x1600xf32, #tpu.memory_space<vmem>>, vector<1x50xf32>
    tpu.vector_store %arg24[%c0_119, %c1450], %141 {strides = array<i32>} : memref<2x1600xf32, #tpu.memory_space<vmem>>, vector<1x50xf32>,
    %c54 = arith.constant 54 : index
    %c0_120 = arith.constant 0 : index
    %143 = vector.load %arg23[%c54, %c0_120] : memref<64x128xf32, #tpu.memory_space<vmem>>, vector<1x50xf32>
    %c0_121 = arith.constant 0 : index
    %c1500 = arith.constant 1500 : index
    %144 = vector.load %arg24[%c0_121, %c1500] : memref<2x1600xf32, #tpu.memory_space<vmem>>, vector<1x50xf32>
    tpu.vector_store %arg24[%c0_121, %c1500], %143 {strides = array<i32>} : memref<2x1600xf32, #tpu.memory_space<vmem>>, vector<1x50xf32>,
    %c55 = arith.constant 55 : index
    %c0_122 = arith.constant 0 : index
    %145 = vector.load %arg23[%c55, %c0_122] : memref<64x128xf32, #tpu.memory_space<vmem>>, vector<1x50xf32>
    %c0_123 = arith.constant 0 : index
    %c1550 = arith.constant 1550 : index
    %146 = vector.load %arg24[%c0_123, %c1550] : memref<2x1600xf32, #tpu.memory_space<vmem>>, vector<1x50xf32>
    tpu.vector_store %arg24[%c0_123, %c1550], %145 {strides = array<i32>} : memref<2x1600xf32, #tpu.memory_space<vmem>>, vector<1x50xf32>,
    %c8 = arith.constant 8 : index
    %c0_124 = arith.constant 0 : index
    %147 = vector.load %arg23[%c8, %c0_124] : memref<64x128xf32, #tpu.memory_space<vmem>>, vector<1x50xf32>
    %c1_125 = arith.constant 1 : index
    %c0_126 = arith.constant 0 : index
    %148 = vector.load %arg24[%c1_125, %c0_126] : memref<2x1600xf32, #tpu.memory_space<vmem>>, vector<1x50xf32>
    tpu.vector_store %arg24[%c1_125, %c0_126], %147 {strides = array<i32>} : memref<2x1600xf32, #tpu.memory_space<vmem>>, vector<1x50xf32>,
    %c9 = arith.constant 9 : index
    %c0_127 = arith.constant 0 : index
    %149 = vector.load %arg23[%c9, %c0_127] : memref<64x128xf32, #tpu.memory_space<vmem>>, vector<1x50xf32>
    %c1_128 = arith.constant 1 : index
    %c50_129 = arith.constant 50 : index
    %150 = vector.load %arg24[%c1_128, %c50_129] : memref<2x1600xf32, #tpu.memory_space<vmem>>, vector<1x50xf32>
    tpu.vector_store %arg24[%c1_128, %c50_129], %149 {strides = array<i32>} : memref<2x1600xf32, #tpu.memory_space<vmem>>, vector<1x50xf32>,
    %c10 = arith.constant 10 : index
    %c0_130 = arith.constant 0 : index
    %151 = vector.load %arg23[%c10, %c0_130] : memref<64x128xf32, #tpu.memory_space<vmem>>, vector<1x50xf32>
    %c1_131 = arith.constant 1 : index
    %c100_132 = arith.constant 100 : index
    %152 = vector.load %arg24[%c1_131, %c100_132] : memref<2x1600xf32, #tpu.memory_space<vmem>>, vector<1x50xf32>
    tpu.vector_store %arg24[%c1_131, %c100_132], %151 {strides = array<i32>} : memref<2x1600xf32, #tpu.memory_space<vmem>>, vector<1x50xf32>,
    %c11 = arith.constant 11 : index
    %c0_133 = arith.constant 0 : index
    %153 = vector.load %arg23[%c11, %c0_133] : memref<64x128xf32, #tpu.memory_space<vmem>>, vector<1x50xf32>
    %c1_134 = arith.constant 1 : index
    %c150_135 = arith.constant 150 : index
    %154 = vector.load %arg24[%c1_134, %c150_135] : memref<2x1600xf32, #tpu.memory_space<vmem>>, vector<1x50xf32>
    tpu.vector_store %arg24[%c1_134, %c150_135], %153 {strides = array<i32>} : memref<2x1600xf32, #tpu.memory_space<vmem>>, vector<1x50xf32>,
    %c12 = arith.constant 12 : index
    %c0_136 = arith.constant 0 : index
    %155 = vector.load %arg23[%c12, %c0_136] : memref<64x128xf32, #tpu.memory_space<vmem>>, vector<1x50xf32>
    %c1_137 = arith.constant 1 : index
    %c200_138 = arith.constant 200 : index
    %156 = vector.load %arg24[%c1_137, %c200_138] : memref<2x1600xf32, #tpu.memory_space<vmem>>, vector<1x50xf32>
    tpu.vector_store %arg24[%c1_137, %c200_138], %155 {strides = array<i32>} : memref<2x1600xf32, #tpu.memory_space<vmem>>, vector<1x50xf32>,
    %c13 = arith.constant 13 : index
    %c0_139 = arith.constant 0 : index
    %157 = vector.load %arg23[%c13, %c0_139] : memref<64x128xf32, #tpu.memory_space<vmem>>, vector<1x50xf32>
    %c1_140 = arith.constant 1 : index
    %c250_141 = arith.constant 250 : index
    %158 = vector.load %arg24[%c1_140, %c250_141] : memref<2x1600xf32, #tpu.memory_space<vmem>>, vector<1x50xf32>
    tpu.vector_store %arg24[%c1_140, %c250_141], %157 {strides = array<i32>} : memref<2x1600xf32, #tpu.memory_space<vmem>>, vector<1x50xf32>,
    %c14 = arith.constant 14 : index
    %c0_142 = arith.constant 0 : index
    %159 = vector.load %arg23[%c14, %c0_142] : memref<64x128xf32, #tpu.memory_space<vmem>>, vector<1x50xf32>
    %c1_143 = arith.constant 1 : index
    %c300_144 = arith.constant 300 : index
    %160 = vector.load %arg24[%c1_143, %c300_144] : memref<2x1600xf32, #tpu.memory_space<vmem>>, vector<1x50xf32>
    tpu.vector_store %arg24[%c1_143, %c300_144], %159 {strides = array<i32>} : memref<2x1600xf32, #tpu.memory_space<vmem>>, vector<1x50xf32>,
    %c15 = arith.constant 15 : index
    %c0_145 = arith.constant 0 : index
    %161 = vector.load %arg23[%c15, %c0_145] : memref<64x128xf32, #tpu.memory_space<vmem>>, vector<1x50xf32>
    %c1_146 = arith.constant 1 : index
    %c350_147 = arith.constant 350 : index
    %162 = vector.load %arg24[%c1_146, %c350_147] : memref<2x1600xf32, #tpu.memory_space<vmem>>, vector<1x50xf32>
    tpu.vector_store %arg24[%c1_146, %c350_147], %161 {strides = array<i32>} : memref<2x1600xf32, #tpu.memory_space<vmem>>, vector<1x50xf32>,
    %c24 = arith.constant 24 : index
    %c0_148 = arith.constant 0 : index
    %163 = vector.load %arg23[%c24, %c0_148] : memref<64x128xf32, #tpu.memory_space<vmem>>, vector<1x50xf32>
    %c1_149 = arith.constant 1 : index
    %c400_150 = arith.constant 400 : index
    %164 = vector.load %arg24[%c1_149, %c400_150] : memref<2x1600xf32, #tpu.memory_space<vmem>>, vector<1x50xf32>
    tpu.vector_store %arg24[%c1_149, %c400_150], %163 {strides = array<i32>} : memref<2x1600xf32, #tpu.memory_space<vmem>>, vector<1x50xf32>,
    %c25 = arith.constant 25 : index
    %c0_151 = arith.constant 0 : index
    %165 = vector.load %arg23[%c25, %c0_151] : memref<64x128xf32, #tpu.memory_space<vmem>>, vector<1x50xf32>
    %c1_152 = arith.constant 1 : index
    %c450_153 = arith.constant 450 : index
    %166 = vector.load %arg24[%c1_152, %c450_153] : memref<2x1600xf32, #tpu.memory_space<vmem>>, vector<1x50xf32>
    tpu.vector_store %arg24[%c1_152, %c450_153], %165 {strides = array<i32>} : memref<2x1600xf32, #tpu.memory_space<vmem>>, vector<1x50xf32>,
    %c26 = arith.constant 26 : index
    %c0_154 = arith.constant 0 : index
    %167 = vector.load %arg23[%c26, %c0_154] : memref<64x128xf32, #tpu.memory_space<vmem>>, vector<1x50xf32>
    %c1_155 = arith.constant 1 : index
    %c500_156 = arith.constant 500 : index
    %168 = vector.load %arg24[%c1_155, %c500_156] : memref<2x1600xf32, #tpu.memory_space<vmem>>, vector<1x50xf32>
    tpu.vector_store %arg24[%c1_155, %c500_156], %167 {strides = array<i32>} : memref<2x1600xf32, #tpu.memory_space<vmem>>, vector<1x50xf32>,
    %c27 = arith.constant 27 : index
    %c0_157 = arith.constant 0 : index
    %169 = vector.load %arg23[%c27, %c0_157] : memref<64x128xf32, #tpu.memory_space<vmem>>, vector<1x50xf32>
    %c1_158 = arith.constant 1 : index
    %c550_159 = arith.constant 550 : index
    %170 = vector.load %arg24[%c1_158, %c550_159] : memref<2x1600xf32, #tpu.memory_space<vmem>>, vector<1x50xf32>
    tpu.vector_store %arg24[%c1_158, %c550_159], %169 {strides = array<i32>} : memref<2x1600xf32, #tpu.memory_space<vmem>>, vector<1x50xf32>,
    %c28 = arith.constant 28 : index
    %c0_160 = arith.constant 0 : index
    %171 = vector.load %arg23[%c28, %c0_160] : memref<64x128xf32, #tpu.memory_space<vmem>>, vector<1x50xf32>
    %c1_161 = arith.constant 1 : index
    %c600_162 = arith.constant 600 : index
    %172 = vector.load %arg24[%c1_161, %c600_162] : memref<2x1600xf32, #tpu.memory_space<vmem>>, vector<1x50xf32>
    tpu.vector_store %arg24[%c1_161, %c600_162], %171 {strides = array<i32>} : memref<2x1600xf32, #tpu.memory_space<vmem>>, vector<1x50xf32>,
    %c29 = arith.constant 29 : index
    %c0_163 = arith.constant 0 : index
    %173 = vector.load %arg23[%c29, %c0_163] : memref<64x128xf32, #tpu.memory_space<vmem>>, vector<1x50xf32>
    %c1_164 = arith.constant 1 : index
    %c650_165 = arith.constant 650 : index
    %174 = vector.load %arg24[%c1_164, %c650_165] : memref<2x1600xf32, #tpu.memory_space<vmem>>, vector<1x50xf32>
    tpu.vector_store %arg24[%c1_164, %c650_165], %173 {strides = array<i32>} : memref<2x1600xf32, #tpu.memory_space<vmem>>, vector<1x50xf32>,
    %c30 = arith.constant 30 : index
    %c0_166 = arith.constant 0 : index
    %175 = vector.load %arg23[%c30, %c0_166] : memref<64x128xf32, #tpu.memory_space<vmem>>, vector<1x50xf32>
    %c1_167 = arith.constant 1 : index
    %c700_168 = arith.constant 700 : index
    %176 = vector.load %arg24[%c1_167, %c700_168] : memref<2x1600xf32, #tpu.memory_space<vmem>>, vector<1x50xf32>
    tpu.vector_store %arg24[%c1_167, %c700_168], %175 {strides = array<i32>} : memref<2x1600xf32, #tpu.memory_space<vmem>>, vector<1x50xf32>,
    %c31 = arith.constant 31 : index
    %c0_169 = arith.constant 0 : index
    %177 = vector.load %arg23[%c31, %c0_169] : memref<64x128xf32, #tpu.memory_space<vmem>>, vector<1x50xf32>
    %c1_170 = arith.constant 1 : index
    %c750_171 = arith.constant 750 : index
    %178 = vector.load %arg24[%c1_170, %c750_171] : memref<2x1600xf32, #tpu.memory_space<vmem>>, vector<1x50xf32>
    tpu.vector_store %arg24[%c1_170, %c750_171], %177 {strides = array<i32>} : memref<2x1600xf32, #tpu.memory_space<vmem>>, vector<1x50xf32>,
    %c40 = arith.constant 40 : index
    %c0_172 = arith.constant 0 : index
    %179 = vector.load %arg23[%c40, %c0_172] : memref<64x128xf32, #tpu.memory_space<vmem>>, vector<1x50xf32>
    %c1_173 = arith.constant 1 : index
    %c800_174 = arith.constant 800 : index
    %180 = vector.load %arg24[%c1_173, %c800_174] : memref<2x1600xf32, #tpu.memory_space<vmem>>, vector<1x50xf32>
    tpu.vector_store %arg24[%c1_173, %c800_174], %179 {strides = array<i32>} : memref<2x1600xf32, #tpu.memory_space<vmem>>, vector<1x50xf32>,
    %c41 = arith.constant 41 : index
    %c0_175 = arith.constant 0 : index
    %181 = vector.load %arg23[%c41, %c0_175] : memref<64x128xf32, #tpu.memory_space<vmem>>, vector<1x50xf32>
    %c1_176 = arith.constant 1 : index
    %c850_177 = arith.constant 850 : index
    %182 = vector.load %arg24[%c1_176, %c850_177] : memref<2x1600xf32, #tpu.memory_space<vmem>>, vector<1x50xf32>
    tpu.vector_store %arg24[%c1_176, %c850_177], %181 {strides = array<i32>} : memref<2x1600xf32, #tpu.memory_space<vmem>>, vector<1x50xf32>,
    %c42 = arith.constant 42 : index
    %c0_178 = arith.constant 0 : index
    %183 = vector.load %arg23[%c42, %c0_178] : memref<64x128xf32, #tpu.memory_space<vmem>>, vector<1x50xf32>
    %c1_179 = arith.constant 1 : index
    %c900_180 = arith.constant 900 : index
    %184 = vector.load %arg24[%c1_179, %c900_180] : memref<2x1600xf32, #tpu.memory_space<vmem>>, vector<1x50xf32>
    tpu.vector_store %arg24[%c1_179, %c900_180], %183 {strides = array<i32>} : memref<2x1600xf32, #tpu.memory_space<vmem>>, vector<1x50xf32>,
    %c43 = arith.constant 43 : index
    %c0_181 = arith.constant 0 : index
    %185 = vector.load %arg23[%c43, %c0_181] : memref<64x128xf32, #tpu.memory_space<vmem>>, vector<1x50xf32>
    %c1_182 = arith.constant 1 : index
    %c950_183 = arith.constant 950 : index
    %186 = vector.load %arg24[%c1_182, %c950_183] : memref<2x1600xf32, #tpu.memory_space<vmem>>, vector<1x50xf32>
    tpu.vector_store %arg24[%c1_182, %c950_183], %185 {strides = array<i32>} : memref<2x1600xf32, #tpu.memory_space<vmem>>, vector<1x50xf32>,
    %c44 = arith.constant 44 : index
    %c0_184 = arith.constant 0 : index
    %187 = vector.load %arg23[%c44, %c0_184] : memref<64x128xf32, #tpu.memory_space<vmem>>, vector<1x50xf32>
    %c1_185 = arith.constant 1 : index
    %c1000_186 = arith.constant 1000 : index
    %188 = vector.load %arg24[%c1_185, %c1000_186] : memref<2x1600xf32, #tpu.memory_space<vmem>>, vector<1x50xf32>
    tpu.vector_store %arg24[%c1_185, %c1000_186], %187 {strides = array<i32>} : memref<2x1600xf32, #tpu.memory_space<vmem>>, vector<1x50xf32>,
    %c45 = arith.constant 45 : index
    %c0_187 = arith.constant 0 : index
    %189 = vector.load %arg23[%c45, %c0_187] : memref<64x128xf32, #tpu.memory_space<vmem>>, vector<1x50xf32>
    %c1_188 = arith.constant 1 : index
    %c1050_189 = arith.constant 1050 : index
    %190 = vector.load %arg24[%c1_188, %c1050_189] : memref<2x1600xf32, #tpu.memory_space<vmem>>, vector<1x50xf32>
    tpu.vector_store %arg24[%c1_188, %c1050_189], %189 {strides = array<i32>} : memref<2x1600xf32, #tpu.memory_space<vmem>>, vector<1x50xf32>,
    %c46 = arith.constant 46 : index
    %c0_190 = arith.constant 0 : index
    %191 = vector.load %arg23[%c46, %c0_190] : memref<64x128xf32, #tpu.memory_space<vmem>>, vector<1x50xf32>
    %c1_191 = arith.constant 1 : index
    %c1100_192 = arith.constant 1100 : index
    %192 = vector.load %arg24[%c1_191, %c1100_192] : memref<2x1600xf32, #tpu.memory_space<vmem>>, vector<1x50xf32>
    tpu.vector_store %arg24[%c1_191, %c1100_192], %191 {strides = array<i32>} : memref<2x1600xf32, #tpu.memory_space<vmem>>, vector<1x50xf32>,
    %c47 = arith.constant 47 : index
    %c0_193 = arith.constant 0 : index
    %193 = vector.load %arg23[%c47, %c0_193] : memref<64x128xf32, #tpu.memory_space<vmem>>, vector<1x50xf32>
    %c1_194 = arith.constant 1 : index
    %c1150_195 = arith.constant 1150 : index
    %194 = vector.load %arg24[%c1_194, %c1150_195] : memref<2x1600xf32, #tpu.memory_space<vmem>>, vector<1x50xf32>
    tpu.vector_store %arg24[%c1_194, %c1150_195], %193 {strides = array<i32>} : memref<2x1600xf32, #tpu.memory_space<vmem>>, vector<1x50xf32>,
    %c56 = arith.constant 56 : index
    %c0_196 = arith.constant 0 : index
    %195 = vector.load %arg23[%c56, %c0_196] : memref<64x128xf32, #tpu.memory_space<vmem>>, vector<1x50xf32>
    %c1_197 = arith.constant 1 : index
    %c1200_198 = arith.constant 1200 : index
    %196 = vector.load %arg24[%c1_197, %c1200_198] : memref<2x1600xf32, #tpu.memory_space<vmem>>, vector<1x50xf32>
    tpu.vector_store %arg24[%c1_197, %c1200_198], %195 {strides = array<i32>} : memref<2x1600xf32, #tpu.memory_space<vmem>>, vector<1x50xf32>,
    %c57 = arith.constant 57 : index
    %c0_199 = arith.constant 0 : index
    %197 = vector.load %arg23[%c57, %c0_199] : memref<64x128xf32, #tpu.memory_space<vmem>>, vector<1x50xf32>
    %c1_200 = arith.constant 1 : index
    %c1250_201 = arith.constant 1250 : index
    %198 = vector.load %arg24[%c1_200, %c1250_201] : memref<2x1600xf32, #tpu.memory_space<vmem>>, vector<1x50xf32>
    tpu.vector_store %arg24[%c1_200, %c1250_201], %197 {strides = array<i32>} : memref<2x1600xf32, #tpu.memory_space<vmem>>, vector<1x50xf32>,
    %c58 = arith.constant 58 : index
    %c0_202 = arith.constant 0 : index
    %199 = vector.load %arg23[%c58, %c0_202] : memref<64x128xf32, #tpu.memory_space<vmem>>, vector<1x50xf32>
    %c1_203 = arith.constant 1 : index
    %c1300_204 = arith.constant 1300 : index
    %200 = vector.load %arg24[%c1_203, %c1300_204] : memref<2x1600xf32, #tpu.memory_space<vmem>>, vector<1x50xf32>
    tpu.vector_store %arg24[%c1_203, %c1300_204], %199 {strides = array<i32>} : memref<2x1600xf32, #tpu.memory_space<vmem>>, vector<1x50xf32>,
    %c59 = arith.constant 59 : index
    %c0_205 = arith.constant 0 : index
    %201 = vector.load %arg23[%c59, %c0_205] : memref<64x128xf32, #tpu.memory_space<vmem>>, vector<1x50xf32>
    %c1_206 = arith.constant 1 : index
    %c1350_207 = arith.constant 1350 : index
    %202 = vector.load %arg24[%c1_206, %c1350_207] : memref<2x1600xf32, #tpu.memory_space<vmem>>, vector<1x50xf32>
    tpu.vector_store %arg24[%c1_206, %c1350_207], %201 {strides = array<i32>} : memref<2x1600xf32, #tpu.memory_space<vmem>>, vector<1x50xf32>,
    %c60 = arith.constant 60 : index
    %c0_208 = arith.constant 0 : index
    %203 = vector.load %arg23[%c60, %c0_208] : memref<64x128xf32, #tpu.memory_space<vmem>>, vector<1x50xf32>
    %c1_209 = arith.constant 1 : index
    %c1400_210 = arith.constant 1400 : index
    %204 = vector.load %arg24[%c1_209, %c1400_210] : memref<2x1600xf32, #tpu.memory_space<vmem>>, vector<1x50xf32>
    tpu.vector_store %arg24[%c1_209, %c1400_210], %203 {strides = array<i32>} : memref<2x1600xf32, #tpu.memory_space<vmem>>, vector<1x50xf32>,
    %c61 = arith.constant 61 : index
    %c0_211 = arith.constant 0 : index
    %205 = vector.load %arg23[%c61, %c0_211] : memref<64x128xf32, #tpu.memory_space<vmem>>, vector<1x50xf32>
    %c1_212 = arith.constant 1 : index
    %c1450_213 = arith.constant 1450 : index
    %206 = vector.load %arg24[%c1_212, %c1450_213] : memref<2x1600xf32, #tpu.memory_space<vmem>>, vector<1x50xf32>
    tpu.vector_store %arg24[%c1_212, %c1450_213], %205 {strides = array<i32>} : memref<2x1600xf32, #tpu.memory_space<vmem>>, vector<1x50xf32>,
    %c62 = arith.constant 62 : index
    %c0_214 = arith.constant 0 : index
    %207 = vector.load %arg23[%c62, %c0_214] : memref<64x128xf32, #tpu.memory_space<vmem>>, vector<1x50xf32>
    %c1_215 = arith.constant 1 : index
    %c1500_216 = arith.constant 1500 : index
    %208 = vector.load %arg24[%c1_215, %c1500_216] : memref<2x1600xf32, #tpu.memory_space<vmem>>, vector<1x50xf32>
    tpu.vector_store %arg24[%c1_215, %c1500_216], %207 {strides = array<i32>} : memref<2x1600xf32, #tpu.memory_space<vmem>>, vector<1x50xf32>,
    %c63 = arith.constant 63 : index
    %c0_217 = arith.constant 0 : index
    %209 = vector.load %arg23[%c63, %c0_217] : memref<64x128xf32, #tpu.memory_space<vmem>>, vector<1x50xf32>
    %c1_218 = arith.constant 1 : index
    %c1550_219 = arith.constant 1550 : index
    %210 = vector.load %arg24[%c1_218, %c1550_219] : memref<2x1600xf32, #tpu.memory_space<vmem>>, vector<1x50xf32>
    tpu.vector_store %arg24[%c1_218, %c1550_219], %209 {strides = array<i32>} : memref<2x1600xf32, #tpu.memory_space<vmem>>, vector<1x50xf32>,
    tpu.wait_dma2 semaphore(%arg26 : memref<!tpu.dma_semaphore, #tpu.memory_space<semaphore_mem>>) src(%arg16 : memref<1600x128xbf16, #tpu.memory_space<any>>) dst(%arg25 : memref<1600x128xbf16, #tpu.memory_space<vmem>>)
    %c0_220 = arith.constant 0 : index
    %c0_221 = arith.constant 0 : index
    %211 = vector.load %arg24[%c0_220, %c0_221] : memref<2x1600xf32, #tpu.memory_space<vmem>>, vector<2x1600xf32>
    %212 = arith.truncf %211 : vector<2x1600xf32> to vector<2x1600xbf16>
    %c0_222 = arith.constant 0 : index
    %c0_223 = arith.constant 0 : index
    %213 = vector.load %arg25[%c0_222, %c0_223] : memref<1600x128xbf16, #tpu.memory_space<vmem>>, vector<1600x128xbf16>
    %cst_224 = arith.constant dense<0.000000e+00> : vector<2x128xf32>
    %214 = tpu.matmul %212, %213, %cst_224 {dimension_numbers = #tpu.dot_dimension_numbers<[1], [0], [0], [1], [0, 0, 1, 1], [], []>} : vector<2x1600xbf16>, vector<1600x128xbf16>, vector<2x128xf32> -> vector<2x128xf32>
    %c0_225 = arith.constant 0 : index
    %c0_226 = arith.constant 0 : index
    %215 = vector.load %arg17[%c0_225, %c0_226] : memref<1x128xf32, #tpu.memory_space<vmem>>, vector<1x128xf32>
    %216 = vector.broadcast %215 : vector<1x128xf32> to vector<2x128xf32>
    %217 = arith.addf %214, %216 : vector<2x128xf32>
    %c0_227 = arith.constant 0 : index
    %c0_228 = arith.constant 0 : index
    %218 = vector.load %arg18[%c0_227, %c0_228] : memref<1x128xf32, #tpu.memory_space<vmem>>, vector<1x128xf32>
    %219 = vector.broadcast %218 : vector<1x128xf32> to vector<2x128xf32>
    %220 = arith.mulf %217, %219 : vector<2x128xf32>
    %c0_229 = arith.constant 0 : index
    %c0_230 = arith.constant 0 : index
    %221 = vector.load %arg19[%c0_229, %c0_230] : memref<1x128xf32, #tpu.memory_space<vmem>>, vector<1x128xf32>
    %222 = vector.broadcast %221 : vector<1x128xf32> to vector<2x128xf32>
    %223 = arith.addf %220, %222 : vector<2x128xf32>
    %cst_231 = arith.constant 0.000000e+00 : f32
    %224 = vector.broadcast %cst_231 : f32 to vector<2x128xf32>
    %225 = arith.maximumf %223, %224 : vector<2x128xf32>
    %226 = arith.truncf %225 : vector<2x128xf32> to vector<2x128xbf16>
    %c0_232 = arith.constant 0 : index
    %c0_233 = arith.constant 0 : index
    %227 = vector.load %arg20[%c0_232, %c0_233] : memref<128x4xbf16, #tpu.memory_space<vmem>>, vector<128x4xbf16>
    %cst_234 = arith.constant dense<0.000000e+00> : vector<2x4xf32>
    %228 = tpu.matmul %226, %227, %cst_234 {dimension_numbers = #tpu.dot_dimension_numbers<[1], [0], [0], [1], [0, 0, 1, 1], [], []>} : vector<2x128xbf16>, vector<128x4xbf16>, vector<2x4xf32> -> vector<2x4xf32>
    %c0_235 = arith.constant 0 : index
    %c0_236 = arith.constant 0 : index
    %229 = vector.load %arg21[%c0_235, %c0_236] : memref<1x4xf32, #tpu.memory_space<vmem>>, vector<1x4xf32>
    %230 = vector.broadcast %229 : vector<1x4xf32> to vector<2x4xf32>
    %231 = arith.addf %228, %230 : vector<2x4xf32>
    %cst_237 = arith.constant dense<0xFF800000> : vector<2xf32>
    %232 = vector.multi_reduction <maximumf>, %231, %cst_237 [1] : vector<2x4xf32> to vector<2xf32>
    %233 = vector.shape_cast %232 : vector<2xf32> to vector<2x1xf32>
    %234 = vector.broadcast %233 : vector<2x1xf32> to vector<2x4xf32>
    %235 = arith.subf %231, %234 : vector<2x4xf32>
    %236 = math.exp %235 : vector<2x4xf32>
    %cst_238 = arith.constant dense<0.000000e+00> : vector<2xf32>
    %237 = vector.multi_reduction <add>, %236, %cst_238 [1] : vector<2x4xf32> to vector<2xf32>
    %238 = vector.shape_cast %237 : vector<2xf32> to vector<2x1xf32>
    %239 = vector.broadcast %238 : vector<2x1xf32> to vector<2x4xf32>
    %240 = arith.divf %236, %239 : vector<2x4xf32>
    %c0_239 = arith.constant 0 : index
    %c0_240 = arith.constant 0 : index
    %241 = vector.load %arg22[%c0_239, %c0_240] : memref<2x4xf32, #tpu.memory_space<vmem>>, vector<2x4xf32>
    tpu.vector_store %arg22[%c0_239, %c0_240], %240 {strides = array<i32>} : memref<2x4xf32, #tpu.memory_space<vmem>>, vector<2x4xf32>,
    return
  }
}

</mosaic_0001>

<llo_original>
// kernel: deepspectra_forward.1
$region0: #{deepspectra_forward.1}
  #allocation0 [shape = 'u32[]', space=smem, size = 0x4, offset = 0x4, fixed_abs, tag = 'smem constant byte address 0x4 - core index']
  #allocation1 [shape = 'u32[144,128]{1,0:T(1,128)}', space=vmem, size = 0x12000, scoped, tag = 'internal scratch']
  #allocation2 [shape = 'f32[64,128]{1,0:T(8,128)}', space=vmem, size = 0x8000, scoped, tag = 'scratch operand']
  #allocation3 [shape = 'f32[2,1600]{1,0:T(2,128)}', space=vmem, size = 0x3400, scoped, tag = 'scratch operand']
  #allocation4 [shape = 'bf16[1600,128]{1,0:T(16,128)(2,1)}', space=vmem, size = 0x64000, scoped, tag = 'scratch operand']
  #allocation5 [shape = 's32[1]{0}', space=sflag, size = 0x4, scoped, tag = 'scratch operand']
  #allocation16 [shape = 's32[]', space=sflag, size = 0x4, offset = 0, fixed_abs, tag = 'sflag constant byte address 0x0 - dummy sync flag']
  #allocation17 [shape = 's32[]', space=sflag, size = 0x4, offset = 0, fixed_abs, tag = 'sflag constant byte address 0x0 - dummy sync flag']
  #allocation18 [shape = 'u32[]', space=smem, size = 0x4, offset = 0x44, fixed_abs, tag = 'smem constant byte address 0x44 - assertion arg 0']
  #allocation19 [shape = 'u32[]', space=smem, size = 0x4, offset = 0x48, fixed_abs, tag = 'smem constant byte address 0x48 - assertion arg 1']
  %s0 = inlined_call_operand.vmem [shape: f32[2,200], index: 0, kind: input, shape index: {}]
  %s1 = inlined_call_operand.hbm [shape: f32[200,256], index: 1, kind: input, shape index: {}]
  %s2 = inlined_call_operand.vmem [shape: f32[1,256], index: 2, kind: input, shape index: {}]
  %s3 = inlined_call_operand.hbm [shape: f32[1,256], index: 3, kind: input, shape index: {}]
  %s4 = inlined_call_operand.vmem [shape: f32[16,2], index: 4, kind: input, shape index: {}]
  %s5 = inlined_call_operand.vmem [shape: f32[16,2], index: 5, kind: input, shape index: {}]
  %s6 = inlined_call_operand.vmem [shape: f32[16,2], index: 6, kind: input, shape index: {}]
  %s7 = inlined_call_operand.vmem [shape: f32[16,1], index: 7, kind: input, shape index: {}]
  %s8 = inlined_call_operand.vmem [shape: f32[256,128], index: 8, kind: input, shape index: {}]
  %s9 = inlined_call_operand.hbm [shape: f32[32,48], index: 9, kind: input, shape index: {}]
  %s10 = inlined_call_operand.vmem [shape: f32[32,1], index: 10, kind: input, shape index: {}]
  %s11 = inlined_call_operand.hbm [shape: f32[128,128], index: 11, kind: input, shape index: {}]
  %s12 = inlined_call_operand.hbm [shape: f32[48,160], index: 12, kind: input, shape index: {}]
  %s13 = inlined_call_operand.vmem [shape: f32[48,1], index: 13, kind: input, shape index: {}]
  %s14 = inlined_call_operand.vmem [shape: f32[16,32], index: 14, kind: input, shape index: {}]
  %s15 = inlined_call_operand.vmem [shape: f32[16,1], index: 15, kind: input, shape index: {}]
  %s16 = inlined_call_operand.hbm [shape: bf16[1600,128], index: 16, kind: input, shape index: {}]
  %s17 = inlined_call_operand.vmem [shape: f32[1,128], index: 17, kind: input, shape index: {}]
  %s18 = inlined_call_operand.vmem [shape: f32[1,128], index: 18, kind: input, shape index: {}]
  %s19 = inlined_call_operand.vmem [shape: f32[1,128], index: 19, kind: input, shape index: {}]
  %s20 = inlined_call_operand.vmem [shape: bf16[128,4], index: 20, kind: input, shape index: {}]
  %s21 = inlined_call_operand.vmem [shape: f32[1,4], index: 21, kind: input, shape index: {}]
  %s22 = inlined_call_operand.hbm [shape: f32[2,4], index: 22, kind: output, shape index: {}]
  %s23 = sld [smem:[#allocation0]]
  $region118: #{deepspectra_forward.1} parent=0
    _
  %s25 = ssub.s32 1, %s23
  %s26 = scalar_select 0, %s25, %s23
  $region1: #{deepspectra_forward.1} parent=0
    #allocation6 [shape = 'u8[204800]{0}', space=vmem, size = 0x32000, scoped, tag = 'input window, operand 1, single buffered']
    #allocation7 [shape = 's32[1]{0}', space=sflag, size = 0x4, scoped, tag = 'scoped memory for deepspectra_forward.1']
    #allocation8 [shape = 's32[1]{0}', space=sflag, size = 0x4, scoped, tag = 'scoped memory for deepspectra_forward.1']
    #allocation9 [shape = 'u8[1024]{0}', space=vmem, size = 0x400, scoped, tag = 'input window, operand 3, single buffered']
    #allocation10 [shape = 's32[1]{0}', space=sflag, size = 0x4, scoped, tag = 'scoped memory for deepspectra_forward.1']
    #allocation11 [shape = 'u8[16384]{0}', space=vmem, size = 0x4000, scoped, tag = 'input window, operand 9, single buffered']
    #allocation12 [shape = 'u8[65536]{0}', space=vmem, size = 0x10000, scoped, tag = 'input window, operand 11, single buffered']
    #allocation13 [shape = 's32[1]{0}', space=sflag, size = 0x4, scoped, tag = 'scoped memory for deepspectra_forward.1']
    #allocation14 [shape = 'u8[49152]{0}', space=vmem, size = 0xc000, scoped, tag = 'input window, operand 12, single buffered']
    #allocation15 [shape = 'u8[1024]{0}', space=vmem, size = 0x400, scoped, tag = 'output window, operand 0, single buffered']
    %27 = vsyncpa [#allocation7], 0
    %28 = vsyncpa [#allocation10], 0
    %29 = vsyncpa [#allocation13], 0
    %30 = vsyncpa [#allocation8], 0
    // Predicated region
    $region2: #{deepspectra_forward.1} parent=1 // pred_check
      _
    $region3: #{deepspectra_forward.1} parent=1 // pred_check_branch
      %32 = sbr.rel (0) target = $region5
    $region4: #{deepspectra_forward.1} parent=1 // pred_region
      _
    $region5: #{deepspectra_forward.1} parent=1 // pred_fallthru
      _
    // Predicated region
    $region6: #{deepspectra_forward.1} parent=1 // pred_check
      _
    $region7: #{deepspectra_forward.1} parent=1 // pred_check_branch
      %34 = sbr.rel (0) target = $region9
    $region8: #{deepspectra_forward.1} parent=1 // pred_region
      %s36 = ssub.s32 6400, 6400
      %37 = vsyncadd [#allocation7], %s36
      %s38 = sshll.u32 [#allocation6], 4
      %s39 = int_to_ptr.vmem [resolvable:$true] %s38
      %44 = dma.hbm_to_vmem [thread:$0]  %s1, 6400, %s39, [#allocation7], 256, 256, 16
    $region9: #{deepspectra_forward.1} parent=1 // pred_fallthru
      _
    // Predicated region
    $region10: #{deepspectra_forward.1} parent=1 // pred_check
      _
    $region11: #{deepspectra_forward.1} parent=1 // pred_check_branch
      %46 = sbr.rel (0) target = $region13
    $region12: #{deepspectra_forward.1} parent=1 // pred_region
      _
    $region13: #{deepspectra_forward.1} parent=1 // pred_fallthru
      _
    // Predicated region
    $region14: #{deepspectra_forward.1} parent=1 // pred_check
      _
    $region15: #{deepspectra_forward.1} parent=1 // pred_check_branch
      %48 = sbr.rel (0) target = $region17
    $region16: #{deepspectra_forward.1} parent=1 // pred_region
      %s50 = ssub.s32 32, 32
      %51 = vsyncadd [#allocation10], %s50
      %s53 = sshll.u32 [#allocation9], 4
      %s54 = int_to_ptr.vmem [resolvable:$true] %s53
      %56 = dma.hbm_to_vmem [thread:$0]  %s3, 32, %s54, [#allocation10]
    $region17: #{deepspectra_forward.1} parent=1 // pred_fallthru
      _
    // Predicated region
    $region18: #{deepspectra_forward.1} parent=1 // pred_check
      _
    $region19: #{deepspectra_forward.1} parent=1 // pred_check_branch
      %58 = sbr.rel (0) target = $region21
    $region20: #{deepspectra_forward.1} parent=1 // pred_region
      _
    $region21: #{deepspectra_forward.1} parent=1 // pred_fallthru
      _
    // Predicated region
    $region22: #{deepspectra_forward.1} parent=1 // pred_check
      _
    $region23: #{deepspectra_forward.1} parent=1 // pred_check_branch
      %60 = sbr.rel (0) target = $region25
    $region24: #{deepspectra_forward.1} parent=1 // pred_region
      _
    $region25: #{deepspectra_forward.1} parent=1 // pred_fallthru
      _
    // Predicated region
    $region26: #{deepspectra_forward.1} parent=1 // pred_check
      _
    $region27: #{deepspectra_forward.1} parent=1 // pred_check_branch
      %62 = sbr.rel (0) target = $region29
    $region28: #{deepspectra_forward.1} parent=1 // pred_region
      _
    $region29: #{deepspectra_forward.1} parent=1 // pred_fallthru
      _
    // Predicated region
    $region30: #{deepspectra_forward.1} parent=1 // pred_check
      _
    $region31: #{deepspectra_forward.1} parent=1 // pred_check_branch
      %64 = sbr.rel (0) target = $region33
    $region32: #{deepspectra_forward.1} parent=1 // pred_region
      _
    $region33: #{deepspectra_forward.1} parent=1 // pred_fallthru
      _
    // Predicated region
    $region34: #{deepspectra_forward.1} parent=1 // pred_check
      _
    $region35: #{deepspectra_forward.1} parent=1 // pred_check_branch
      %66 = sbr.rel (0) target = $region37
    $region36: #{deepspectra_forward.1} parent=1 // pred_region
      _
    $region37: #{deepspectra_forward.1} parent=1 // pred_fallthru
      _
    // Predicated region
    $region38: #{deepspectra_forward.1} parent=1 // pred_check
      _
    $region39: #{deepspectra_forward.1} parent=1 // pred_check_branch
      %68 = sbr.rel (0) target = $region41
    $region40: #{deepspectra_forward.1} parent=1 // pred_region
      %s70 = ssub.s32 512, 512
      %71 = vsyncadd [#allocation10], %s70
      %s72 = sshll.u32 [#allocation11], 4
      %s73 = int_to_ptr.vmem [resolvable:$true] %s72
      %78 = dma.hbm_to_vmem [thread:$0]  %s9, 512, %s73, [#allocation10], 128, 128, 8
    $region41: #{deepspectra_forward.1} parent=1 // pred_fallthru
      _
    // Predicated region
    $region42: #{deepspectra_forward.1} parent=1 // pred_check
      _
    $region43: #{deepspectra_forward.1} parent=1 // pred_check_branch
      %80 = sbr.rel (0) target = $region45
    $region44: #{deepspectra_forward.1} parent=1 // pred_region
      _
    $region45: #{deepspectra_forward.1} parent=1 // pred_fallthru
      _
    // Predicated region
    $region46: #{deepspectra_forward.1} parent=1 // pred_check
      _
    $region47: #{deepspectra_forward.1} parent=1 // pred_check_branch
      %82 = sbr.rel (0) target = $region49
    $region48: #{deepspectra_forward.1} parent=1 // pred_region
      %s84 = ssub.s32 2048, 2048
      %85 = vsyncadd [#allocation13], %s84
      %s86 = sshll.u32 [#allocation12], 4
      %s87 = int_to_ptr.vmem [resolvable:$true] %s86
      %92 = dma.hbm_to_vmem [thread:$0]  %s11, 2048, %s87, [#allocation13], 128, 128, 8
    $region49: #{deepspectra_forward.1} parent=1 // pred_fallthru
      _
    // Predicated region
    $region50: #{deepspectra_forward.1} parent=1 // pred_check
      _
    $region51: #{deepspectra_forward.1} parent=1 // pred_check_branch
      %94 = sbr.rel (0) target = $region53
    $region52: #{deepspectra_forward.1} parent=1 // pred_region
      %s96 = ssub.s32 1536, 1536
      %97 = vsyncadd [#allocation13], %s96
      %s98 = sshll.u32 [#allocation14], 4
      %s99 = int_to_ptr.vmem [resolvable:$true] %s98
      %104 = dma.hbm_to_vmem [thread:$0]  %s12, 1536, %s99, [#allocation13], 256, 256, 16
    $region53: #{deepspectra_forward.1} parent=1 // pred_fallthru
      _
    // Predicated region
    $region54: #{deepspectra_forward.1} parent=1 // pred_check
      _
    $region55: #{deepspectra_forward.1} parent=1 // pred_check_branch
      %106 = sbr.rel (0) target = $region57
    $region56: #{deepspectra_forward.1} parent=1 // pred_region
      _
    $region57: #{deepspectra_forward.1} parent=1 // pred_fallthru
      _
    // Predicated region
    $region58: #{deepspectra_forward.1} parent=1 // pred_check
      _
    $region59: #{deepspectra_forward.1} parent=1 // pred_check_branch
      %108 = sbr.rel (0) target = $region61
    $region60: #{deepspectra_forward.1} parent=1 // pred_region
      _
    $region61: #{deepspectra_forward.1} parent=1 // pred_fallthru
      _
    // Predicated region
    $region62: #{deepspectra_forward.1} parent=1 // pred_check
      _
    $region63: #{deepspectra_forward.1} parent=1 // pred_check_branch
      %110 = sbr.rel (0) target = $region65
    $region64: #{deepspectra_forward.1} parent=1 // pred_region
      _
    $region65: #{deepspectra_forward.1} parent=1 // pred_fallthru
      _
    // Predicated region
    $region66: #{deepspectra_forward.1} parent=1 // pred_check
      _
    $region67: #{deepspectra_forward.1} parent=1 // pred_check_branch
      %112 = sbr.rel (0) target = $region69
    $region68: #{deepspectra_forward.1} parent=1 // pred_region
      _
    $region69: #{deepspectra_forward.1} parent=1 // pred_fallthru
      _
    // Predicated region
    $region70: #{deepspectra_forward.1} parent=1 // pred_check
      _
    $region71: #{deepspectra_forward.1} parent=1 // pred_check_branch
      %114 = sbr.rel (0) target = $region73
    $region72: #{deepspectra_forward.1} parent=1 // pred_region
      _
    $region73: #{deepspectra_forward.1} parent=1 // pred_fallthru
      _
    // Predicated region
    $region74: #{deepspectra_forward.1} parent=1 // pred_check
      _
    $region75: #{deepspectra_forward.1} parent=1 // pred_check_branch
      %116 = sbr.rel (0) target = $region77
    $region76: #{deepspectra_forward.1} parent=1 // pred_region
      _
    $region77: #{deepspectra_forward.1} parent=1 // pred_fallthru
      _
    // Predicated region
    $region78: #{deepspectra_forward.1} parent=1 // pred_check
      _
    $region79: #{deepspectra_forward.1} parent=1 // pred_check_branch
      %118 = sbr.rel (0) target = $region81
    $region80: #{deepspectra_forward.1} parent=1 // pred_region
      _
    $region81: #{deepspectra_forward.1} parent=1 // pred_fallthru
      _
    // Predicated region
    $region82: #{deepspectra_forward.1} parent=1 // pred_check
      _
    $region83: #{deepspectra_forward.1} parent=1 // pred_check_branch
      %120 = sbr.rel (0) target = $region85
    $region84: #{deepspectra_forward.1} parent=1 // pred_region
      _
    $region85: #{deepspectra_forward.1} parent=1 // pred_fallthru
      _
    // Predicated region
    $region86: #{deepspectra_forward.1} parent=1 // pred_check
      _
    $region87: #{deepspectra_forward.1} parent=1 // pred_check_branch
      %122 = sbr.rel (0) target = $region89
    $region88: #{deepspectra_forward.1} parent=1 // pred_region
      %123 = dma.done [#allocation7], 6400
    $region89: #{deepspectra_forward.1} parent=1 // pred_fallthru
      _
    // Predicated region
    $region90: #{deepspectra_forward.1} parent=1 // pred_check
      _
    $region91: #{deepspectra_forward.1} parent=1 // pred_check_branch
      %125 = sbr.rel (0) target = $region93
    $region92: #{deepspectra_forward.1} parent=1 // pred_region
      %126 = dma.done [#allocation10], 32
    $region93: #{deepspectra_forward.1} parent=1 // pred_fallthru
      _
    // Predicated region
    $region94: #{deepspectra_forward.1} parent=1 // pred_check
      _
    $region95: #{deepspectra_forward.1} parent=1 // pred_check_branch
      %128 = sbr.rel (0) target = $region97
    $region96: #{deepspectra_forward.1} parent=1 // pred_region
      %129 = dma.done [#allocation10], 512
    $region97: #{deepspectra_forward.1} parent=1 // pred_fallthru
      _
    // Predicated region
    $region98: #{deepspectra_forward.1} parent=1 // pred_check
      _
    $region99: #{deepspectra_forward.1} parent=1 // pred_check_branch
      %131 = sbr.rel (0) target = $region101
    $region100: #{deepspectra_forward.1} parent=1 // pred_region
      %132 = dma.done [#allocation13], 2048
    $region101: #{deepspectra_forward.1} parent=1 // pred_fallthru
      _
    // Predicated region
    $region102: #{deepspectra_forward.1} parent=1 // pred_check
      _
    $region103: #{deepspectra_forward.1} parent=1 // pred_check_branch
      %134 = sbr.rel (0) target = $region105
    $region104: #{deepspectra_forward.1} parent=1 // pred_region
      %135 = dma.done [#allocation13], 1536
    $region105: #{deepspectra_forward.1} parent=1 // pred_fallthru
      _
    // Predicated region
    $region106: #{deepspectra_forward.1} parent=1 // pred_check
      _
    $region107: #{deepspectra_forward.1} parent=1 // pred_check_branch
      %138 = sbr.rel target = $region109
    $region108: #{deepspectra_forward.1} parent=1 // pred_region
      %139 = sst [smem:[#allocation18]] [#allocation17]
      %140 = sst [smem:[#allocation19]] [#allocation16]
    $region109: #{deepspectra_forward.1} parent=1 // pred_fallthru
      _
    %142 = shalt.err (0)
    %s144 = sshll.u32 [#allocation4], 4
    %s145 = int_to_ptr.vmem [resolvable:$true] %s144
    %147 = dma.hbm_to_vmem [thread:$0]  %s16, 12800, %s145, [#allocation5]
    %v148 = vld [vmem:[%s0] sm:$0xf]
    %v149 = vld [vmem:[#allocation6] sm:$0xff]
    %v150 = vld [vmem:[#allocation6 + $0x8] sm:$0xff]
    %v151 = vld [vmem:[#allocation6 + $0x10] sm:$0xff]
    %v152 = vld [vmem:[#allocation6 + $0x18] sm:$0xff]
    %v153 = vld [vmem:[#allocation6 + $0x20] sm:$0xff]
    %v154 = vld [vmem:[#allocation6 + $0x28] sm:$0xff]
    %v155 = vld [vmem:[#allocation6 + $0x30] sm:$0xff]
    %v156 = vld [vmem:[#allocation6 + $0x38] sm:$0xff]
    %v157 = vld [vmem:[#allocation6 + $0x40] sm:$0xff]
    %v158 = vld [vmem:[#allocation6 + $0x48] sm:$0xff]
    %v159 = vld [vmem:[#allocation6 + $0x50] sm:$0xff]
    %v160 = vld [vmem:[#allocation6 + $0x58] sm:$0xff]
    %v161 = vld [vmem:[#allocation6 + $0x60] sm:$0xff]
    %v162 = vld [vmem:[#allocation6 + $0x68] sm:$0xff]
    %v163 = vld [vmem:[#allocation6 + $0x70] sm:$0xff]
    %v164 = vld [vmem:[#allocation6 + $0x78] sm:$0xff]
    %v165 = vld [vmem:[#allocation6 + $0x80] sm:$0xff]
    %v166 = vld [vmem:[#allocation6 + $0x88] sm:$0xff]
    %v167 = vld [vmem:[#allocation6 + $0x90] sm:$0xff]
    %v168 = vld [vmem:[#allocation6 + $0x98] sm:$0xff]
    %v169 = vld [vmem:[#allocation6 + $0xa0] sm:$0xff]
    %v170 = vld [vmem:[#allocation6 + $0xa8] sm:$0xff]
    %v171 = vld [vmem:[#allocation6 + $0xb0] sm:$0xff]
    %v172 = vld [vmem:[#allocation6 + $0xb8] sm:$0xff]
    %v173 = vld [vmem:[#allocation6 + $0xc0] sm:$0xff]
    %v174 = vld [vmem:[#allocation6 + $0xc8] sm:$0xff]
    %v175 = vld [vmem:[#allocation6 + $0xd0] sm:$0xff]
    %v176 = vld [vmem:[#allocation6 + $0xd8] sm:$0xff]
    %v177 = vld [vmem:[#allocation6 + $0xe0] sm:$0xff]
    %v178 = vld [vmem:[#allocation6 + $0xe8] sm:$0xff]
    %v179 = vld [vmem:[#allocation6 + $0xf0] sm:$0xff]
    %v180 = vld [vmem:[#allocation6 + $0xf8] sm:$0xff]
    %v181 = vld [vmem:[#allocation6 + $0x100] sm:$0xff]
    %v182 = vld [vmem:[#allocation6 + $0x108] sm:$0xff]
    %v183 = vld [vmem:[#allocation6 + $0x110] sm:$0xff]
    %v184 = vld [vmem:[#allocation6 + $0x118] sm:$0xff]
    %v185 = vld [vmem:[#allocation6 + $0x120] sm:$0xff]
    %v186 = vld [vmem:[#allocation6 + $0x128] sm:$0xff]
    %v187 = vld [vmem:[#allocation6 + $0x130] sm:$0xff]
    %v188 = vld [vmem:[#allocation6 + $0x138] sm:$0xff]
    %v189 = vld [vmem:[#allocation6 + $0x140] sm:$0xff]
    %v190 = vld [vmem:[#allocation6 + $0x148] sm:$0xff]
    %v191 = vld [vmem:[#allocation6 + $0x150] sm:$0xff]
    %v192 = vld [vmem:[#allocation6 + $0x158] sm:$0xff]
    %v193 = vld [vmem:[#allocation6 + $0x160] sm:$0xff]
    %v194 = vld [vmem:[#allocation6 + $0x168] sm:$0xff]
    %v195 = vld [vmem:[#allocation6 + $0x170] sm:$0xff]
    %v196 = vld [vmem:[#allocation6 + $0x178] sm:$0xff]
    %v197 = vld [vmem:[#allocation6 + $0x180] sm:$0xff]
    %v198 = vld [vmem:[#allocation6 + $0x188] sm:$0xff]
    %v201 = vunpack.c.l.s4 1983009808
    %v202 = vunpack.c.0.s8 %v201
    %v203 = vlaneseq
    %v204 = vshrl.u32 %v203, 7
    %v205 = vsub.s32 %v202, %v204
    %v206 = vrot.slane %v148, %v205
    %v207 = vcombine.high %v206, %v206
    %vm209 = vcmask 588800
    %v210 = vsel %vm209, %v207, 0
    %212 = vmatprep.subr.mxu0 %v150
    %213 = vmatpush1.msra.mxu0 %v149
    %214 = vmatprep.subr.mxu0 %v152
    %215 = vmatpush1.msra.mxu0 %v151
    %216 = vmatprep.subr.mxu0 %v154
    %217 = vmatpush1.msra.mxu0 %v153
    %218 = vmatprep.subr.mxu0 %v156
    %219 = vmatpush1.msra.mxu0 %v155
    %220 = vmatprep.subr.mxu0 %v158
    %221 = vmatpush1.msra.mxu0 %v157
    %222 = vmatprep.subr.mxu0 %v160
    %223 = vmatpush1.msra.mxu0 %v159
    %224 = vmatprep.subr.mxu0 %v162
    %225 = vmatpush1.msra.mxu0 %v161
    %226 = vmatprep.subr.mxu0 %v164
    %227 = vmatpush1.msra.mxu0 %v163
    %228 = vmatprep.subr.mxu0 %v166
    %229 = vmatpush1.msra.mxu0 %v165
    %230 = vmatprep.subr.mxu0 %v168
    %231 = vmatpush1.msra.mxu0 %v167
    %232 = vmatprep.subr.mxu0 %v170
    %233 = vmatpush1.msra.mxu0 %v169
    %234 = vmatprep.subr.mxu0 %v172
    %235 = vmatpush1.msra.mxu0 %v171
    %236 = vmatprep.subr.mxu0 %v174
    %237 = vmatpush1.msra.mxu0 %v173
    %238 = vmatprep.subr.mxu0 %v176
    %239 = vmatpush1.msra.mxu0 %v175
    %240 = vmatprep.subr.mxu0 %v178
    %241 = vmatpush1.msra.mxu0 %v177
    %242 = vmatprep.subr.mxu0 %v180
    %243 = vmatpush1.msra.mxu0 %v179
    %244 = vmatprep.subr.mxu0 %v182
    %245 = vmatpush1.msra.mxu0 %v181
    %246 = vmatprep.subr.mxu0 %v184
    %247 = vmatpush1.msra.mxu0 %v183
    %248 = vmatprep.subr.mxu0 %v186
    %249 = vmatpush1.msra.mxu0 %v185
    %250 = vmatprep.subr.mxu0 %v188
    %251 = vmatpush1.msra.mxu0 %v187
    %252 = vmatprep.subr.mxu0 %v190
    %253 = vmatpush1.msra.mxu0 %v189
    %254 = vmatprep.subr.mxu0 %v192
    %255 = vmatpush1.msra.mxu0 %v191
    %256 = vmatprep.subr.mxu0 %v194
    %257 = vmatpush1.msra.mxu0 %v193
    %258 = vmatprep.subr.mxu0 %v196
    %259 = vmatpush1.msra.mxu0 %v195
    %260 = vmatprep.subr.mxu0 %v198
    %261 = vmatpush1.msra.mxu0 %v197
    %262 = vmatprep.subr.mxu0 0.0
    %263 = vmatpush1.msra.mxu0 0.0
    %264 = vmatprep.subr.mxu0 0.0
    %265 = vmatpush1.msra.mxu0 0.0
    %266 = vmatprep.subr.mxu0 0.0
    %267 = vmatpush1.msra.mxu0 0.0
    %268 = vmatprep.subr.mxu0 0.0
    %269 = vmatpush1.msra.mxu0 0.0
    %270 = vmatprep.subr.mxu0 0.0
    %271 = vmatpush1.msra.mxu0 0.0
    %272 = vmatprep.subr.mxu0 0.0
    %273 = vmatpush1.msra.mxu0 0.0
    %274 = vmatprep.subr.mxu0 0.0
    %275 = vmatpush1.msra.mxu0 0.0
    %276 = vmatprep.mubr.f32.mxu0 %v210
    %277 = vmatmul.mubr.f32.gmra.mrb[0].mxu0 %v206
    %v278 = vpop.f32.mrb[0].mxu0
    %v279 = vadd.f32 0.0, %v278
    %v280 = vpop.f32.mrb[0].mxu0
    %v281 = vadd.f32 0.0, %v280
    %282 = vdwg.mxu0
    %vm283 = vcmask 1041408
    %v284 = vsel %vm283, %v279, 0.0
    %v285 = vsel %vm283, %v281, 0.0
    %v286 = vadd.f32 %v284, %v285
    %287 = vadd.xlane.f32.xlu0 %v286
    %v288 = vpop.xlane.xlu0 %287
    %v289 = vmul.f32 %v288, 0.005
    %v290 = vmul.f32 %v279, %v279
    %v291 = vmul.f32 %v281, %v281
    %v292 = vsel %vm283, %v290, 0.0
    %v293 = vsel %vm283, %v291, 0.0
    %v294 = vadd.f32 %v292, %v293
    %295 = vadd.xlane.f32.xlu0 %v294
    %v296 = vpop.xlane.xlu0 %295
    %v297 = vmul.f32 %v296, 0.005
    %v298 = vmul.f32 %v289, %v289
    %v299 = vsub.f32 %v297, %v298
    %v300 = vsub.f32 %v279, %v289
    %v301 = vsub.f32 %v281, %v289
    %v302 = vadd.f32 %v299, 1e-05
    %v303 = vrsqrt.pop %v302
    %v304 = vmul.f32 %v300, %v303
    %v305 = vmul.f32 %v301, %v303
    %v306 = vld [vmem:[%s2] sm:$0x3]
    %v308 = vlaneseq
    %v309 = vshrl.u32 %v308, 7
    %v310 = vsub.s32 0, %v309
    %v311 = vrot.slane %v306, %v310
    %v312 = vlaneseq
    %v313 = vshrl.u32 %v312, 7
    %v314 = vsub.s32 1, %v313
    %v315 = vrot.slane %v306, %v314
    %v318 = vmul.f32 %v304, %v311
    %v319 = vmul.f32 %v305, %v315
    %v320 = vld [vmem:[#allocation9] sm:$0x3]
    %v322 = vlaneseq
    %v323 = vshrl.u32 %v322, 7
    %v324 = vsub.s32 0, %v323
    %v325 = vrot.slane %v320, %v324
    %v326 = vlaneseq
    %v327 = vshrl.u32 %v326, 7
    %v328 = vsub.s32 1, %v327
    %v329 = vrot.slane %v320, %v328
    %v332 = vadd.f32 %v318, %v325
    %v333 = vadd.f32 %v319, %v329
    %334 = vrot.lane.b32.xlu0 %v332, 1
    %v335 = vpop.permute.xlu0 %334
    %336 = vrot.lane.b32.xlu0 %v333, 1
    %v337 = vpop.permute.xlu0 %336
    %v338 = vlaneseq
    %v339 = vand.u32 %v338, 127
    %vm340 = vcmp.lt.s32.totalorder %v339, 1
    %v341 = vsel %vm340, %v335, %v337
    %v342 = vsel %vm340, %v337, %v335
    %343 = vrot.lane.b32.xlu0 %v332, 127
    %v344 = vpop.permute.xlu0 %343
    %345 = vrot.lane.b32.xlu0 %v333, 127
    %v346 = vpop.permute.xlu0 %345
    %vm347 = vcmp.lt.s32.totalorder %v339, 127
    %v348 = vsel %vm347, %v344, %v346
    %v349 = vsel %vm347, %v346, %v344
    %v350 = vld [vmem:[%s4] sm:$0xff]
    %v351 = vld [vmem:[%s4 + $0x8] sm:$0xff]
    %v352 = vld [vmem:[%s5] sm:$0xff]
    %v353 = vld [vmem:[%s5 + $0x8] sm:$0xff]
    %vm354 = vcmask 15360
    %v356 = vsel %vm354, %v352, 0
    %v359 = vsel %vm354, %v353, 0
    %v362 = vsel %vm283, %v332, 0
    %v365 = vsel %vm283, %v333, 0
    %367 = vmatprep.subr.mxu0 %v365
    %368 = vmatpush1.msra.mxu0 %v362
    %369 = vmatprep.subr.mxu0 0.0
    %370 = vmatpush1.msra.mxu0 0.0
    %371 = vmatprep.subr.mxu0 0.0
    %372 = vmatpush1.msra.mxu0 0.0
    %373 = vmatprep.subr.mxu0 0.0
    %374 = vmatpush1.msra.mxu0 0.0
    %375 = vmatprep.subr.mxu0 0.0
    %376 = vmatpush1.msra.mxu0 0.0
    %377 = vmatprep.subr.mxu0 0.0
    %378 = vmatpush1.msra.mxu0 0.0
    %379 = vmatprep.subr.mxu0 0.0
    %380 = vmatpush1.msra.mxu0 0.0
    %381 = vmatprep.subr.mxu0 0.0
    %382 = vmatpush1.msra.mxu0 0.0
    %383 = vmatprep.subr.mxu0 0.0
    %384 = vmatpush1.msra.mxu0 0.0
    %385 = vmatprep.subr.mxu0 0.0
    %386 = vmatpush1.msra.mxu0 0.0
    %387 = vmatprep.subr.mxu0 0.0
    %388 = vmatpush1.msra.mxu0 0.0
    %389 = vmatprep.subr.mxu0 0.0
    %390 = vmatpush1.msra.mxu0 0.0
    %391 = vmatprep.subr.mxu0 0.0
    %392 = vmatpush1.msra.mxu0 0.0
    %393 = vmatprep.subr.mxu0 0.0
    %394 = vmatpush1.msra.mxu0 0.0
    %395 = vmatprep.subr.mxu0 0.0
    %396 = vmatpush1.msra.mxu0 0.0
    %397 = vmatprep.subr.mxu0 0.0
    %398 = vmatpush1.msra.mxu0 0.0
    %399 = vmatprep.subr.mxu0 0.0
    %400 = vmatpush1.msra.mxu0 0.0
    %401 = vmatprep.subr.mxu0 0.0
    %402 = vmatpush1.msra.mxu0 0.0
    %403 = vmatprep.subr.mxu0 0.0
    %404 = vmatpush1.msra.mxu0 0.0
    %405 = vmatprep.subr.mxu0 0.0
    %406 = vmatpush1.msra.mxu0 0.0
    %407 = vmatprep.subr.mxu0 0.0
    %408 = vmatpush1.msra.mxu0 0.0
    %409 = vmatprep.subr.mxu0 0.0
    %410 = vmatpush1.msra.mxu0 0.0
    %411 = vmatprep.subr.mxu0 0.0
    %412 = vmatpush1.msra.mxu0 0.0
    %413 = vmatprep.subr.mxu0 0.0
    %414 = vmatpush1.msra.mxu0 0.0
    %415 = vmatprep.subr.mxu0 0.0
    %416 = vmatpush1.msra.mxu0 0.0
    %417 = vmatprep.subr.mxu0 0.0
    %418 = vmatpush1.msra.mxu0 0.0
    %419 = vmatprep.subr.mxu0 0.0
    %420 = vmatpush1.msra.mxu0 0.0
    %421 = vmatprep.subr.mxu0 0.0
    %422 = vmatpush1.msra.mxu0 0.0
    %423 = vmatprep.subr.mxu0 0.0
    %424 = vmatpush1.msra.mxu0 0.0
    %425 = vmatprep.subr.mxu0 0.0
    %426 = vmatpush1.msra.mxu0 0.0
    %427 = vmatprep.subr.mxu0 0.0
    %428 = vmatpush1.msra.mxu0 0.0
    %429 = vmatprep.subr.mxu0 0.0
    %430 = vmatpush1.msra.mxu0 0.0
    %431 = vmatprep.mubr.f32.mxu0 0.0
    %432 = vmatmul.mubr.f32.gmra.mrb[0].mxu0 %v356
    %v433 = vpop.f32.mrb[0].mxu0
    %v434 = vadd.f32 0.0, %v433
    %v435 = vpop.f32.mrb[0].mxu0
    %v436 = vadd.f32 0.0, %v435
    %437 = vmatprep.mubr.f32.mxu0 0.0
    %438 = vmatmul.mubr.f32.gmra.mrb[0].mxu0 %v359
    %v439 = vpop.f32.mrb[0].mxu0
    %v440 = vadd.f32 0.0, %v439
    %v441 = vpop.f32.mrb[0].mxu0
    %v442 = vadd.f32 0.0, %v441
    %443 = vdwg.mxu0
    %v445 = vsel %vm354, %v350, 0
    %v448 = vsel %vm354, %v351, 0
    %v451 = vsel %vm283, %v342, 0
    %v454 = vsel %vm283, %v341, 0
    %456 = vmatprep.subr.mxu0 %v454
    %457 = vmatpush1.msra.mxu0 %v451
    %458 = vmatprep.subr.mxu0 0.0
    %459 = vmatpush1.msra.mxu0 0.0
    %460 = vmatprep.subr.mxu0 0.0
    %461 = vmatpush1.msra.mxu0 0.0
    %462 = vmatprep.subr.mxu0 0.0
    %463 = vmatpush1.msra.mxu0 0.0
    %464 = vmatprep.subr.mxu0 0.0
    %465 = vmatpush1.msra.mxu0 0.0
    %466 = vmatprep.subr.mxu0 0.0
    %467 = vmatpush1.msra.mxu0 0.0
    %468 = vmatprep.subr.mxu0 0.0
    %469 = vmatpush1.msra.mxu0 0.0
    %470 = vmatprep.subr.mxu0 0.0
    %471 = vmatpush1.msra.mxu0 0.0
    %472 = vmatprep.subr.mxu0 0.0
    %473 = vmatpush1.msra.mxu0 0.0
    %474 = vmatprep.subr.mxu0 0.0
    %475 = vmatpush1.msra.mxu0 0.0
    %476 = vmatprep.subr.mxu0 0.0
    %477 = vmatpush1.msra.mxu0 0.0
    %478 = vmatprep.subr.mxu0 0.0
    %479 = vmatpush1.msra.mxu0 0.0
    %480 = vmatprep.subr.mxu0 0.0
    %481 = vmatpush1.msra.mxu0 0.0
    %482 = vmatprep.subr.mxu0 0.0
    %483 = vmatpush1.msra.mxu0 0.0
    %484 = vmatprep.subr.mxu0 0.0
    %485 = vmatpush1.msra.mxu0 0.0
    %486 = vmatprep.subr.mxu0 0.0
    %487 = vmatpush1.msra.mxu0 0.0
    %488 = vmatprep.subr.mxu0 0.0
    %489 = vmatpush1.msra.mxu0 0.0
    %490 = vmatprep.subr.mxu0 0.0
    %491 = vmatpush1.msra.mxu0 0.0
    %492 = vmatprep.subr.mxu0 0.0
    %493 = vmatpush1.msra.mxu0 0.0
    %494 = vmatprep.subr.mxu0 0.0
    %495 = vmatpush1.msra.mxu0 0.0
    %496 = vmatprep.subr.mxu0 0.0
    %497 = vmatpush1.msra.mxu0 0.0
    %498 = vmatprep.subr.mxu0 0.0
    %499 = vmatpush1.msra.mxu0 0.0
    %500 = vmatprep.subr.mxu0 0.0
    %501 = vmatpush1.msra.mxu0 0.0
    %502 = vmatprep.subr.mxu0 0.0
    %503 = vmatpush1.msra.mxu0 0.0
    %504 = vmatprep.subr.mxu0 0.0
    %505 = vmatpush1.msra.mxu0 0.0
    %506 = vmatprep.subr.mxu0 0.0
    %507 = vmatpush1.msra.mxu0 0.0
    %508 = vmatprep.subr.mxu0 0.0
    %509 = vmatpush1.msra.mxu0 0.0
    %510 = vmatprep.subr.mxu0 0.0
    %511 = vmatpush1.msra.mxu0 0.0
    %512 = vmatprep.subr.mxu0 0.0
    %513 = vmatpush1.msra.mxu0 0.0
    %514 = vmatprep.subr.mxu0 0.0
    %515 = vmatpush1.msra.mxu0 0.0
    %516 = vmatprep.subr.mxu0 0.0
    %517 = vmatpush1.msra.mxu0 0.0
    %518 = vmatprep.subr.mxu0 0.0
    %519 = vmatpush1.msra.mxu0 0.0
    %520 = vmatprep.mubr.f32.mxu0 0.0
    %521 = vmatmul.mubr.f32.gmra.mrb[0].mxu0 %v445
    %v522 = vpop.f32.mrb[0].mxu0
    %v523 = vadd.f32 %v434, %v522
    %v524 = vpop.f32.mrb[0].mxu0
    %v525 = vadd.f32 %v436, %v524
    %526 = vmatprep.mubr.f32.mxu0 0.0
    %527 = vmatmul.mubr.f32.gmra.mrb[0].mxu0 %v448
    %v528 = vpop.f32.mrb[0].mxu0
    %v529 = vadd.f32 %v440, %v528
    %v530 = vpop.f32.mrb[0].mxu0
    %v531 = vadd.f32 %v442, %v530
    %532 = vdwg.mxu0
    %v533 = vld [vmem:[%s6] sm:$0xff]
    %v534 = vld [vmem:[%s6 + $0x8] sm:$0xff]
    %v536 = vsel %vm354, %v533, 0
    %v539 = vsel %vm354, %v534, 0
    %v542 = vsel %vm283, %v348, 0
    %v545 = vsel %vm283, %v349, 0
    %547 = vmatprep.subr.mxu0 %v545
    %548 = vmatpush1.msra.mxu0 %v542
    %549 = vmatprep.subr.mxu0 0.0
    %550 = vmatpush1.msra.mxu0 0.0
    %551 = vmatprep.subr.mxu0 0.0
    %552 = vmatpush1.msra.mxu0 0.0
    %553 = vmatprep.subr.mxu0 0.0
    %554 = vmatpush1.msra.mxu0 0.0
    %555 = vmatprep.subr.mxu0 0.0
    %556 = vmatpush1.msra.mxu0 0.0
    %557 = vmatprep.subr.mxu0 0.0
    %558 = vmatpush1.msra.mxu0 0.0
    %559 = vmatprep.subr.mxu0 0.0
    %560 = vmatpush1.msra.mxu0 0.0
    %561 = vmatprep.subr.mxu0 0.0
    %562 = vmatpush1.msra.mxu0 0.0
    %563 = vmatprep.subr.mxu0 0.0
    %564 = vmatpush1.msra.mxu0 0.0
    %565 = vmatprep.subr.mxu0 0.0
    %566 = vmatpush1.msra.mxu0 0.0
    %567 = vmatprep.subr.mxu0 0.0
    %568 = vmatpush1.msra.mxu0 0.0
    %569 = vmatprep.subr.mxu0 0.0
    %570 = vmatpush1.msra.mxu0 0.0
    %571 = vmatprep.subr.mxu0 0.0
    %572 = vmatpush1.msra.mxu0 0.0
    %573 = vmatprep.subr.mxu0 0.0
    %574 = vmatpush1.msra.mxu0 0.0
    %575 = vmatprep.subr.mxu0 0.0
    %576 = vmatpush1.msra.mxu0 0.0
    %577 = vmatprep.subr.mxu0 0.0
    %578 = vmatpush1.msra.mxu0 0.0
    %579 = vmatprep.subr.mxu0 0.0
    %580 = vmatpush1.msra.mxu0 0.0
    %581 = vmatprep.subr.mxu0 0.0
    %582 = vmatpush1.msra.mxu0 0.0
    %583 = vmatprep.subr.mxu0 0.0
    %584 = vmatpush1.msra.mxu0 0.0
    %585 = vmatprep.subr.mxu0 0.0
    %586 = vmatpush1.msra.mxu0 0.0
    %587 = vmatprep.subr.mxu0 0.0
    %588 = vmatpush1.msra.mxu0 0.0
    %589 = vmatprep.subr.mxu0 0.0
    %590 = vmatpush1.msra.mxu0 0.0
    %591 = vmatprep.subr.mxu0 0.0
    %592 = vmatpush1.msra.mxu0 0.0
    %593 = vmatprep.subr.mxu0 0.0
    %594 = vmatpush1.msra.mxu0 0.0
    %595 = vmatprep.subr.mxu0 0.0
    %596 = vmatpush1.msra.mxu0 0.0
    %597 = vmatprep.subr.mxu0 0.0
    %598 = vmatpush1.msra.mxu0 0.0
    %599 = vmatprep.subr.mxu0 0.0
    %600 = vmatpush1.msra.mxu0 0.0
    %601 = vmatprep.subr.mxu0 0.0
    %602 = vmatpush1.msra.mxu0 0.0
    %603 = vmatprep.subr.mxu0 0.0
    %604 = vmatpush1.msra.mxu0 0.0
    %605 = vmatprep.subr.mxu0 0.0
    %606 = vmatpush1.msra.mxu0 0.0
    %607 = vmatprep.subr.mxu0 0.0
    %608 = vmatpush1.msra.mxu0 0.0
    %609 = vmatprep.subr.mxu0 0.0
    %610 = vmatpush1.msra.mxu0 0.0
    %611 = vmatprep.mubr.f32.mxu0 0.0
    %612 = vmatmul.mubr.f32.gmra.mrb[0].mxu0 %v536
    %v613 = vpop.f32.mrb[0].mxu0
    %v614 = vadd.f32 0.0, %v613
    %v615 = vpop.f32.mrb[0].mxu0
    %v616 = vadd.f32 0.0, %v615
    %617 = vmatprep.mubr.f32.mxu0 0.0
    %618 = vmatmul.mubr.f32.gmra.mrb[0].mxu0 %v539
    %v619 = vpop.f32.mrb[0].mxu0
    %v620 = vadd.f32 0.0, %v619
    %v621 = vpop.f32.mrb[0].mxu0
    %v622 = vadd.f32 0.0, %v621
    %623 = vdwg.mxu0
    %v624 = vadd.f32 %v523, %v614
    %v625 = vadd.f32 %v525, %v616
    %v626 = vadd.f32 %v529, %v620
    %v627 = vadd.f32 %v531, %v622
    %v628 = vld [vmem:[%s7] sm:$0xff]
    %v629 = vld [vmem:[%s7 + $0x8] sm:$0xff]
    %631 = vset.pattern.permute.xlu0 0
    %632 = vperm.xlu0 %631, %v628
    %v633 = vpop.permute.xlu0 %632
    %636 = vset.pattern.permute.xlu0 0
    %637 = vperm.xlu0 %636, %v629
    %v638 = vpop.permute.xlu0 %637
    %v640 = vadd.f32 %v624, %v633
    %v641 = vadd.f32 %v625, %v633
    %v642 = vadd.f32 %v626, %v638
    %v643 = vadd.f32 %v627, %v638
    %v644 = vmax.f32 %v640, 0.0
    %v645 = vmax.f32 %v641, 0.0
    %v646 = vmax.f32 %v642, 0.0
    %v647 = vmax.f32 %v643, 0.0
    %648 = vrot.lane.b32.xlu0 %v644, 127
    %v649 = vpop.permute.xlu0 %648
    %650 = vrot.lane.b32.xlu0 %v646, 127
    %v651 = vpop.permute.xlu0 %650
    %652 = vrot.lane.b32.xlu0 %v645, 127
    %v653 = vpop.permute.xlu0 %652
    %654 = vrot.lane.b32.xlu0 %v647, 127
    %v655 = vpop.permute.xlu0 %654
    %v656 = vsel %vm347, %v649, %v653
    %v657 = vsel %vm347, %v651, %v655
    %v658 = vsel %vm347, %v653, %v649
    %v659 = vsel %vm347, %v655, %v651
    %v660 = vmax.f32 %v644, %v656
    %v661 = vmax.f32 %v645, %v658
    %v662 = vmax.f32 %v646, %v657
    %v663 = vmax.f32 %v647, %v659
    %v664 = vld [vmem:[%s8] sm:$0xff]
    %v665 = vld [vmem:[%s8 + $0x8] sm:$0xff]
    %v666 = vld [vmem:[%s8 + $0x10] sm:$0xff]
    %v667 = vld [vmem:[%s8 + $0x18] sm:$0xff]
    %v668 = vld [vmem:[%s8 + $0x20] sm:$0xff]
    %v669 = vld [vmem:[%s8 + $0x28] sm:$0xff]
    %v670 = vld [vmem:[%s8 + $0x30] sm:$0xff]
    %v671 = vld [vmem:[%s8 + $0x38] sm:$0xff]
    %v672 = vld [vmem:[%s8 + $0x40] sm:$0xff]
    %v673 = vld [vmem:[%s8 + $0x48] sm:$0xff]
    %v674 = vld [vmem:[%s8 + $0x50] sm:$0xff]
    %v675 = vld [vmem:[%s8 + $0x58] sm:$0xff]
    %v676 = vld [vmem:[%s8 + $0x60] sm:$0xff]
    %v677 = vld [vmem:[%s8 + $0x68] sm:$0xff]
    %v678 = vld [vmem:[%s8 + $0x70] sm:$0xff]
    %v679 = vld [vmem:[%s8 + $0x78] sm:$0xff]
    %v680 = vld [vmem:[%s8 + $0x80] sm:$0xff]
    %v681 = vld [vmem:[%s8 + $0x88] sm:$0xff]
    %v682 = vld [vmem:[%s8 + $0x90] sm:$0xff]
    %v683 = vld [vmem:[%s8 + $0x98] sm:$0xff]
    %v684 = vld [vmem:[%s8 + $0xa0] sm:$0xff]
    %v685 = vld [vmem:[%s8 + $0xa8] sm:$0xff]
    %v686 = vld [vmem:[%s8 + $0xb0] sm:$0xff]
    %v687 = vld [vmem:[%s8 + $0xb8] sm:$0xff]
    %v688 = vld [vmem:[%s8 + $0xc0] sm:$0xff]
    %v689 = vld [vmem:[%s8 + $0xc8] sm:$0xff]
    %v690 = vld [vmem:[%s8 + $0xd0] sm:$0xff]
    %v691 = vld [vmem:[%s8 + $0xd8] sm:$0xff]
    %v692 = vld [vmem:[%s8 + $0xe0] sm:$0xff]
    %v693 = vld [vmem:[%s8 + $0xe8] sm:$0xff]
    %v694 = vld [vmem:[%s8 + $0xf0] sm:$0xff]
    %v695 = vld [vmem:[%s8 + $0xf8] sm:$0xff]
    %696 = vmatprep.subr.mxu0 0.0
    %697 = vmatpush1.msra.mxu0 %v664
    %698 = vmatprep.subr.mxu0 0.0
    %699 = vmatpush1.msra.mxu0 %v665
    %700 = vmatprep.subr.mxu0 0.0
    %701 = vmatpush1.msra.mxu0 %v666
    %702 = vmatprep.subr.mxu0 0.0
    %703 = vmatpush1.msra.mxu0 %v667
    %704 = vmatprep.subr.mxu0 0.0
    %705 = vmatpush1.msra.mxu0 %v668
    %706 = vmatprep.subr.mxu0 0.0
    %707 = vmatpush1.msra.mxu0 %v669
    %708 = vmatprep.subr.mxu0 0.0
    %709 = vmatpush1.msra.mxu0 %v670
    %710 = vmatprep.subr.mxu0 0.0
    %711 = vmatpush1.msra.mxu0 %v671
    %712 = vmatprep.subr.mxu0 0.0
    %713 = vmatpush1.msra.mxu0 %v672
    %714 = vmatprep.subr.mxu0 0.0
    %715 = vmatpush1.msra.mxu0 %v673
    %716 = vmatprep.subr.mxu0 0.0
    %717 = vmatpush1.msra.mxu0 %v674
    %718 = vmatprep.subr.mxu0 0.0
    %719 = vmatpush1.msra.mxu0 %v675
    %720 = vmatprep.subr.mxu0 0.0
    %721 = vmatpush1.msra.mxu0 %v676
    %722 = vmatprep.subr.mxu0 0.0
    %723 = vmatpush1.msra.mxu0 %v677
    %724 = vmatprep.subr.mxu0 0.0
    %725 = vmatpush1.msra.mxu0 %v678
    %726 = vmatprep.subr.mxu0 0.0
    %727 = vmatpush1.msra.mxu0 %v679
    %728 = vmatprep.subr.mxu0 0.0
    %729 = vmatpush1.msra.mxu0 %v680
    %730 = vmatprep.subr.mxu0 0.0
    %731 = vmatpush1.msra.mxu0 %v681
    %732 = vmatprep.subr.mxu0 0.0
    %733 = vmatpush1.msra.mxu0 %v682
    %734 = vmatprep.subr.mxu0 0.0
    %735 = vmatpush1.msra.mxu0 %v683
    %736 = vmatprep.subr.mxu0 0.0
    %737 = vmatpush1.msra.mxu0 %v684
    %738 = vmatprep.subr.mxu0 0.0
    %739 = vmatpush1.msra.mxu0 %v685
    %740 = vmatprep.subr.mxu0 0.0
    %741 = vmatpush1.msra.mxu0 %v686
    %742 = vmatprep.subr.mxu0 0.0
    %743 = vmatpush1.msra.mxu0 %v687
    %744 = vmatprep.subr.mxu0 0.0
    %745 = vmatpush1.msra.mxu0 %v688
    %746 = vmatprep.subr.mxu0 0.0
    %747 = vmatpush1.msra.mxu0 %v689
    %748 = vmatprep.subr.mxu0 0.0
    %749 = vmatpush1.msra.mxu0 %v690
    %750 = vmatprep.subr.mxu0 0.0
    %751 = vmatpush1.msra.mxu0 %v691
    %752 = vmatprep.subr.mxu0 0.0
    %753 = vmatpush1.msra.mxu0 %v692
    %754 = vmatprep.subr.mxu0 0.0
    %755 = vmatpush1.msra.mxu0 %v693
    %756 = vmatprep.subr.mxu0 0.0
    %757 = vmatpush1.msra.mxu0 %v694
    %758 = vmatprep.subr.mxu0 0.0
    %759 = vmatpush1.msra.mxu0 %v695
    %760 = vmatprep.mubr.f32.mxu0 %v661
    %761 = vmatmul.mubr.f32.gmra.mrb[0].mxu0 %v660
    %v762 = vpop.f32.mrb[0].mxu0
    %v763 = vadd.f32 0.0, %v762
    %v764 = vpop.f32.mrb[0].mxu0
    %765 = vmatprep.mubr.f32.mxu0 %v663
    %766 = vmatmul.mubr.f32.gmra.mrb[0].mxu0 %v662
    %v767 = vpop.f32.mrb[0].mxu0
    %v768 = vadd.f32 0.0, %v767
    %v769 = vpop.f32.mrb[0].mxu0
    %770 = vdwg.mxu0
    %771 = vrot.lane.b32.xlu0 %v763, 1
    %v772 = vpop.permute.xlu0 %771
    %773 = vrot.lane.b32.xlu0 %v768, 1
    %v774 = vpop.permute.xlu0 %773
    %775 = vrot.lane.b32.xlu0 %v763, 127
    %v776 = vpop.permute.xlu0 %775
    %777 = vrot.lane.b32.xlu0 %v768, 127
    %v778 = vpop.permute.xlu0 %777
    %v779 = vld [vmem:[#allocation11] sm:$0xff]
    %v780 = vld [vmem:[#allocation11 + $0x8] sm:$0xff]
    %v781 = vld [vmem:[#allocation11 + $0x10] sm:$0xff]
    %v782 = vld [vmem:[#allocation11 + $0x18] sm:$0xff]
    %v783 = vld [vmem:[%s10] sm:$0xff]
    %v784 = vld [vmem:[%s10 + $0x8] sm:$0xff]
    %v785 = vld [vmem:[%s10 + $0x10] sm:$0xff]
    %v786 = vld [vmem:[%s10 + $0x18] sm:$0xff]
    %788 = vset.pattern.permute.xlu0 0
    %789 = vperm.xlu0 %788, %v783
    %v790 = vpop.permute.xlu0 %789
    %793 = vset.pattern.permute.xlu0 0
    %794 = vperm.xlu0 %793, %v784
    %v795 = vpop.permute.xlu0 %794
    %798 = vset.pattern.permute.xlu0 0
    %799 = vperm.xlu0 %798, %v785
    %v800 = vpop.permute.xlu0 %799
    %803 = vset.pattern.permute.xlu0 0
    %804 = vperm.xlu0 %803, %v786
    %v805 = vpop.permute.xlu0 %804
    %vm807 = vcmask 392192
    %v809 = vsel %vm807, %v779, 0
    %v812 = vsel %vm807, %v780, 0
    %v815 = vsel %vm807, %v781, 0
    %v818 = vsel %vm807, %v782, 0
    %820 = vmatprep.subr.mxu0 0.0
    %821 = vmatpush1.msra.mxu0 %v772
    %822 = vmatprep.subr.mxu0 0.0
    %823 = vmatpush1.msra.mxu0 %v774
    %824 = vmatprep.subr.mxu0 0.0
    %825 = vmatpush1.msra.mxu0 %v763
    %826 = vmatprep.subr.mxu0 0.0
    %827 = vmatpush1.msra.mxu0 %v768
    %828 = vmatprep.subr.mxu0 0.0
    %829 = vmatpush1.msra.mxu0 %v776
    %830 = vmatprep.subr.mxu0 0.0
    %831 = vmatpush1.msra.mxu0 %v778
    %832 = vmatprep.subr.mxu0 0.0
    %833 = vmatpush1.msra.mxu0 0.0
    %834 = vmatprep.subr.mxu0 0.0
    %835 = vmatpush1.msra.mxu0 0.0
    %836 = vmatprep.subr.mxu0 0.0
    %837 = vmatpush1.msra.mxu0 0.0
    %838 = vmatprep.subr.mxu0 0.0
    %839 = vmatpush1.msra.mxu0 0.0
    %840 = vmatprep.subr.mxu0 0.0
    %841 = vmatpush1.msra.mxu0 0.0
    %842 = vmatprep.subr.mxu0 0.0
    %843 = vmatpush1.msra.mxu0 0.0
    %844 = vmatprep.subr.mxu0 0.0
    %845 = vmatpush1.msra.mxu0 0.0
    %846 = vmatprep.subr.mxu0 0.0
    %847 = vmatpush1.msra.mxu0 0.0
    %848 = vmatprep.subr.mxu0 0.0
    %849 = vmatpush1.msra.mxu0 0.0
    %850 = vmatprep.subr.mxu0 0.0
    %851 = vmatpush1.msra.mxu0 0.0
    %852 = vmatprep.subr.mxu0 0.0
    %853 = vmatpush1.msra.mxu0 0.0
    %854 = vmatprep.subr.mxu0 0.0
    %855 = vmatpush1.msra.mxu0 0.0
    %856 = vmatprep.subr.mxu0 0.0
    %857 = vmatpush1.msra.mxu0 0.0
    %858 = vmatprep.subr.mxu0 0.0
    %859 = vmatpush1.msra.mxu0 0.0
    %860 = vmatprep.subr.mxu0 0.0
    %861 = vmatpush1.msra.mxu0 0.0
    %862 = vmatprep.subr.mxu0 0.0
    %863 = vmatpush1.msra.mxu0 0.0
    %864 = vmatprep.subr.mxu0 0.0
    %865 = vmatpush1.msra.mxu0 0.0
    %866 = vmatprep.subr.mxu0 0.0
    %867 = vmatpush1.msra.mxu0 0.0
    %868 = vmatprep.subr.mxu0 0.0
    %869 = vmatpush1.msra.mxu0 0.0
    %870 = vmatprep.subr.mxu0 0.0
    %871 = vmatpush1.msra.mxu0 0.0
    %872 = vmatprep.subr.mxu0 0.0
    %873 = vmatpush1.msra.mxu0 0.0
    %874 = vmatprep.subr.mxu0 0.0
    %875 = vmatpush1.msra.mxu0 0.0
    %876 = vmatprep.subr.mxu0 0.0
    %877 = vmatpush1.msra.mxu0 0.0
    %878 = vmatprep.subr.mxu0 0.0
    %879 = vmatpush1.msra.mxu0 0.0
    %880 = vmatprep.subr.mxu0 0.0
    %881 = vmatpush1.msra.mxu0 0.0
    %882 = vmatprep.subr.mxu0 0.0
    %883 = vmatpush1.msra.mxu0 0.0
    %884 = vmatprep.mubr.f32.mxu0 0.0
    %885 = vmatmul.mubr.f32.gmra.mrb[0].mxu0 %v809
    %v886 = vpop.f32.mrb[0].mxu0
    %v887 = vadd.f32 %v790, %v886
    %v888 = vpop.f32.mrb[0].mxu0
    %889 = vmatprep.mubr.f32.mxu0 0.0
    %890 = vmatmul.mubr.f32.gmra.mrb[0].mxu0 %v812
    %v891 = vpop.f32.mrb[0].mxu0
    %v892 = vadd.f32 %v795, %v891
    %v893 = vpop.f32.mrb[0].mxu0
    %894 = vmatprep.mubr.f32.mxu0 0.0
    %895 = vmatmul.mubr.f32.gmra.mrb[0].mxu0 %v815
    %v896 = vpop.f32.mrb[0].mxu0
    %v897 = vadd.f32 %v800, %v896
    %v898 = vpop.f32.mrb[0].mxu0
    %899 = vmatprep.mubr.f32.mxu0 0.0
    %900 = vmatmul.mubr.f32.gmra.mrb[0].mxu0 %v818
    %v901 = vpop.f32.mrb[0].mxu0
    %v902 = vadd.f32 %v805, %v901
    %v903 = vpop.f32.mrb[0].mxu0
    %904 = vdwg.mxu0
    %v905 = vmax.f32 %v887, 0.0
    %v906 = vmax.f32 %v892, 0.0
    %v907 = vmax.f32 %v897, 0.0
    %v908 = vmax.f32 %v902, 0.0
    %909 = vrot.lane.b32.xlu0 %v905, 127
    %v910 = vpop.permute.xlu0 %909
    %911 = vrot.lane.b32.xlu0 %v906, 127
    %v912 = vpop.permute.xlu0 %911
    %913 = vrot.lane.b32.xlu0 %v907, 127
    %v914 = vpop.permute.xlu0 %913
    %915 = vrot.lane.b32.xlu0 %v908, 127
    %v916 = vpop.permute.xlu0 %915
    %v917 = vmax.f32 %v905, %v910
    %v918 = vmax.f32 %v906, %v912
    %v919 = vmax.f32 %v907, %v914
    %v920 = vmax.f32 %v908, %v916
    %v921 = vld [vmem:[#allocation12] sm:$0xff]
    %v922 = vld [vmem:[#allocation12 + $0x8] sm:$0xff]
    %v923 = vld [vmem:[#allocation12 + $0x10] sm:$0xff]
    %v924 = vld [vmem:[#allocation12 + $0x18] sm:$0xff]
    %v925 = vld [vmem:[#allocation12 + $0x20] sm:$0xff]
    %v926 = vld [vmem:[#allocation12 + $0x28] sm:$0xff]
    %v927 = vld [vmem:[#allocation12 + $0x30] sm:$0xff]
    %v928 = vld [vmem:[#allocation12 + $0x38] sm:$0xff]
    %v929 = vld [vmem:[#allocation12 + $0x40] sm:$0xff]
    %v930 = vld [vmem:[#allocation12 + $0x48] sm:$0xff]
    %v931 = vld [vmem:[#allocation12 + $0x50] sm:$0xff]
    %v932 = vld [vmem:[#allocation12 + $0x58] sm:$0xff]
    %v933 = vld [vmem:[#allocation12 + $0x60] sm:$0xff]
    %v934 = vld [vmem:[#allocation12 + $0x68] sm:$0xff]
    %v935 = vld [vmem:[#allocation12 + $0x70] sm:$0xff]
    %v936 = vld [vmem:[#allocation12 + $0x78] sm:$0xff]
    %937 = vmatprep.subr.mxu0 0.0
    %938 = vmatpush1.msra.mxu0 %v921
    %939 = vmatprep.subr.mxu0 0.0
    %940 = vmatpush1.msra.mxu0 %v922
    %941 = vmatprep.subr.mxu0 0.0
    %942 = vmatpush1.msra.mxu0 %v923
    %943 = vmatprep.subr.mxu0 0.0
    %944 = vmatpush1.msra.mxu0 %v924
    %945 = vmatprep.subr.mxu0 0.0
    %946 = vmatpush1.msra.mxu0 %v925
    %947 = vmatprep.subr.mxu0 0.0
    %948 = vmatpush1.msra.mxu0 %v926
    %949 = vmatprep.subr.mxu0 0.0
    %950 = vmatpush1.msra.mxu0 %v927
    %951 = vmatprep.subr.mxu0 0.0
    %952 = vmatpush1.msra.mxu0 %v928
    %953 = vmatprep.subr.mxu0 0.0
    %954 = vmatpush1.msra.mxu0 %v929
    %955 = vmatprep.subr.mxu0 0.0
    %956 = vmatpush1.msra.mxu0 %v930
    %957 = vmatprep.subr.mxu0 0.0
    %958 = vmatpush1.msra.mxu0 %v931
    %959 = vmatprep.subr.mxu0 0.0
    %960 = vmatpush1.msra.mxu0 %v932
    %961 = vmatprep.subr.mxu0 0.0
    %962 = vmatpush1.msra.mxu0 %v933
    %963 = vmatprep.subr.mxu0 0.0
    %964 = vmatpush1.msra.mxu0 %v934
    %965 = vmatprep.subr.mxu0 0.0
    %966 = vmatpush1.msra.mxu0 %v935
    %967 = vmatprep.subr.mxu0 0.0
    %968 = vmatpush1.msra.mxu0 %v936
    %969 = vmatprep.subr.mxu0 0.0
    %970 = vmatpush1.msra.mxu0 0.0
    %971 = vmatprep.subr.mxu0 0.0
    %972 = vmatpush1.msra.mxu0 0.0
    %973 = vmatprep.subr.mxu0 0.0
    %974 = vmatpush1.msra.mxu0 0.0
    %975 = vmatprep.subr.mxu0 0.0
    %976 = vmatpush1.msra.mxu0 0.0
    %977 = vmatprep.subr.mxu0 0.0
    %978 = vmatpush1.msra.mxu0 0.0
    %979 = vmatprep.subr.mxu0 0.0
    %980 = vmatpush1.msra.mxu0 0.0
    %981 = vmatprep.subr.mxu0 0.0
    %982 = vmatpush1.msra.mxu0 0.0
    %983 = vmatprep.subr.mxu0 0.0
    %984 = vmatpush1.msra.mxu0 0.0
    %985 = vmatprep.subr.mxu0 0.0
    %986 = vmatpush1.msra.mxu0 0.0
    %987 = vmatprep.subr.mxu0 0.0
    %988 = vmatpush1.msra.mxu0 0.0
    %989 = vmatprep.subr.mxu0 0.0
    %990 = vmatpush1.msra.mxu0 0.0
    %991 = vmatprep.subr.mxu0 0.0
    %992 = vmatpush1.msra.mxu0 0.0
    %993 = vmatprep.subr.mxu0 0.0
    %994 = vmatpush1.msra.mxu0 0.0
    %995 = vmatprep.subr.mxu0 0.0
    %996 = vmatpush1.msra.mxu0 0.0
    %997 = vmatprep.subr.mxu0 0.0
    %998 = vmatpush1.msra.mxu0 0.0
    %999 = vmatprep.subr.mxu0 0.0
    %1000 = vmatpush1.msra.mxu0 0.0
    %1001 = vmatprep.mubr.f32.mxu0 0.0
    %1002 = vmatmul.mubr.f32.gmra.mrb[0].mxu0 %v917
    %v1003 = vpop.f32.mrb[0].mxu0
    %v1004 = vadd.f32 0.0, %v1003
    %v1005 = vpop.f32.mrb[0].mxu0
    %1006 = vmatprep.mubr.f32.mxu0 0.0
    %1007 = vmatmul.mubr.f32.gmra.mrb[0].mxu0 %v918
    %v1008 = vpop.f32.mrb[0].mxu0
    %v1009 = vadd.f32 0.0, %v1008
    %v1010 = vpop.f32.mrb[0].mxu0
    %1011 = vmatprep.mubr.f32.mxu0 0.0
    %1012 = vmatmul.mubr.f32.gmra.mrb[0].mxu0 %v919
    %v1013 = vpop.f32.mrb[0].mxu0
    %v1014 = vadd.f32 0.0, %v1013
    %v1015 = vpop.f32.mrb[0].mxu0
    %1016 = vmatprep.mubr.f32.mxu0 0.0
    %1017 = vmatmul.mubr.f32.gmra.mrb[0].mxu0 %v920
    %v1018 = vpop.f32.mrb[0].mxu0
    %v1019 = vadd.f32 0.0, %v1018
    %v1020 = vpop.f32.mrb[0].mxu0
    %1021 = vdwg.mxu0
    %1022 = vrot.lane.b32.xlu0 %v1004, 1
    %v1023 = vpop.permute.xlu0 %1022
    %1024 = vrot.lane.b32.xlu0 %v1009, 1
    %v1025 = vpop.permute.xlu0 %1024
    %1026 = vrot.lane.b32.xlu0 %v1014, 1
    %v1027 = vpop.permute.xlu0 %1026
    %1028 = vrot.lane.b32.xlu0 %v1019, 1
    %v1029 = vpop.permute.xlu0 %1028
    %1030 = vrot.lane.b32.xlu0 %v1004, 127
    %v1031 = vpop.permute.xlu0 %1030
    %1032 = vrot.lane.b32.xlu0 %v1009, 127
    %v1033 = vpop.permute.xlu0 %1032
    %1034 = vrot.lane.b32.xlu0 %v1014, 127
    %v1035 = vpop.permute.xlu0 %1034
    %1036 = vrot.lane.b32.xlu0 %v1019, 127
    %v1037 = vpop.permute.xlu0 %1036
    %1038 = vrot.lane.b32.xlu0 %v1004, 2
    %v1039 = vpop.permute.xlu0 %1038
    %1040 = vrot.lane.b32.xlu0 %v1009, 2
    %v1041 = vpop.permute.xlu0 %1040
    %1042 = vrot.lane.b32.xlu0 %v1014, 2
    %v1043 = vpop.permute.xlu0 %1042
    %1044 = vrot.lane.b32.xlu0 %v1019, 2
    %v1045 = vpop.permute.xlu0 %1044
    %1046 = vrot.lane.b32.xlu0 %v1004, 126
    %v1047 = vpop.permute.xlu0 %1046
    %1048 = vrot.lane.b32.xlu0 %v1009, 126
    %v1049 = vpop.permute.xlu0 %1048
    %1050 = vrot.lane.b32.xlu0 %v1014, 126
    %v1051 = vpop.permute.xlu0 %1050
    %1052 = vrot.lane.b32.xlu0 %v1019, 126
    %v1053 = vpop.permute.xlu0 %1052
    %v1054 = vld [vmem:[#allocation14] sm:$0xff]
    %v1055 = vld [vmem:[#allocation14 + $0x8] sm:$0xff]
    %v1056 = vld [vmem:[#allocation14 + $0x10] sm:$0xff]
    %v1057 = vld [vmem:[#allocation14 + $0x18] sm:$0xff]
    %v1058 = vld [vmem:[#allocation14 + $0x20] sm:$0xff]
    %v1059 = vld [vmem:[#allocation14 + $0x28] sm:$0xff]
    %v1060 = vld [vmem:[#allocation14 + $0x30] sm:$0xff]
    %v1061 = vld [vmem:[#allocation14 + $0x38] sm:$0xff]
    %v1062 = vld [vmem:[#allocation14 + $0x40] sm:$0xff]
    %v1063 = vld [vmem:[#allocation14 + $0x48] sm:$0xff]
    %v1064 = vld [vmem:[#allocation14 + $0x50] sm:$0xff]
    %v1065 = vld [vmem:[#allocation14 + $0x58] sm:$0xff]
    %v1066 = vld [vmem:[%s13] sm:$0xff]
    %v1067 = vld [vmem:[%s13 + $0x8] sm:$0xff]
    %v1068 = vld [vmem:[%s13 + $0x10] sm:$0xff]
    %v1069 = vld [vmem:[%s13 + $0x18] sm:$0xff]
    %v1070 = vld [vmem:[%s13 + $0x20] sm:$0xff]
    %v1071 = vld [vmem:[%s13 + $0x28] sm:$0xff]
    %1073 = vset.pattern.permute.xlu0 0
    %1074 = vperm.xlu0 %1073, %v1066
    %v1075 = vpop.permute.xlu0 %1074
    %1078 = vset.pattern.permute.xlu0 0
    %1079 = vperm.xlu0 %1078, %v1067
    %v1080 = vpop.permute.xlu0 %1079
    %1083 = vset.pattern.permute.xlu0 0
    %1084 = vperm.xlu0 %1083, %v1068
    %v1085 = vpop.permute.xlu0 %1084
    %1088 = vset.pattern.permute.xlu0 0
    %1089 = vperm.xlu0 %1088, %v1069
    %v1090 = vpop.permute.xlu0 %1089
    %1093 = vset.pattern.permute.xlu0 0
    %1094 = vperm.xlu0 %1093, %v1070
    %v1095 = vpop.permute.xlu0 %1094
    %1098 = vset.pattern.permute.xlu0 0
    %1099 = vperm.xlu0 %1098, %v1071
    %v1100 = vpop.permute.xlu0 %1099
    %vm1102 = vcmask 261120
    %v1104 = vsel %vm1102, %v1055, 0
    %v1107 = vsel %vm1102, %v1057, 0
    %v1110 = vsel %vm1102, %v1059, 0
    %v1113 = vsel %vm1102, %v1061, 0
    %v1116 = vsel %vm1102, %v1063, 0
    %v1119 = vsel %vm1102, %v1065, 0
    %1121 = vmatprep.subr.mxu0 0.0
    %1122 = vmatpush1.msra.mxu0 %v1039
    %1123 = vmatprep.subr.mxu0 0.0
    %1124 = vmatpush1.msra.mxu0 %v1041
    %1125 = vmatprep.subr.mxu0 0.0
    %1126 = vmatpush1.msra.mxu0 %v1043
    %1127 = vmatprep.subr.mxu0 0.0
    %1128 = vmatpush1.msra.mxu0 %v1045
    %1129 = vmatprep.subr.mxu0 0.0
    %1130 = vmatpush1.msra.mxu0 %v1023
    %1131 = vmatprep.subr.mxu0 0.0
    %1132 = vmatpush1.msra.mxu0 %v1025
    %1133 = vmatprep.subr.mxu0 0.0
    %1134 = vmatpush1.msra.mxu0 %v1027
    %1135 = vmatprep.subr.mxu0 0.0
    %1136 = vmatpush1.msra.mxu0 %v1029
    %1137 = vmatprep.subr.mxu0 0.0
    %1138 = vmatpush1.msra.mxu0 %v1004
    %1139 = vmatprep.subr.mxu0 0.0
    %1140 = vmatpush1.msra.mxu0 %v1009
    %1141 = vmatprep.subr.mxu0 0.0
    %1142 = vmatpush1.msra.mxu0 %v1014
    %1143 = vmatprep.subr.mxu0 0.0
    %1144 = vmatpush1.msra.mxu0 %v1019
    %1145 = vmatprep.subr.mxu0 0.0
    %1146 = vmatpush1.msra.mxu0 %v1031
    %1147 = vmatprep.subr.mxu0 0.0
    %1148 = vmatpush1.msra.mxu0 %v1033
    %1149 = vmatprep.subr.mxu0 0.0
    %1150 = vmatpush1.msra.mxu0 %v1035
    %1151 = vmatprep.subr.mxu0 0.0
    %1152 = vmatpush1.msra.mxu0 %v1037
    %1153 = vmatprep.subr.mxu0 0.0
    %1154 = vmatpush1.msra.mxu0 %v1047
    %1155 = vmatprep.subr.mxu0 0.0
    %1156 = vmatpush1.msra.mxu0 %v1049
    %1157 = vmatprep.subr.mxu0 0.0
    %1158 = vmatpush1.msra.mxu0 %v1051
    %1159 = vmatprep.subr.mxu0 0.0
    %1160 = vmatpush1.msra.mxu0 %v1053
    %1161 = vmatprep.subr.mxu0 0.0
    %1162 = vmatpush1.msra.mxu0 0.0
    %1163 = vmatprep.subr.mxu0 0.0
    %1164 = vmatpush1.msra.mxu0 0.0
    %1165 = vmatprep.subr.mxu0 0.0
    %1166 = vmatpush1.msra.mxu0 0.0
    %1167 = vmatprep.subr.mxu0 0.0
    %1168 = vmatpush1.msra.mxu0 0.0
    %1169 = vmatprep.subr.mxu0 0.0
    %1170 = vmatpush1.msra.mxu0 0.0
    %1171 = vmatprep.subr.mxu0 0.0
    %1172 = vmatpush1.msra.mxu0 0.0
    %1173 = vmatprep.subr.mxu0 0.0
    %1174 = vmatpush1.msra.mxu0 0.0
    %1175 = vmatprep.subr.mxu0 0.0
    %1176 = vmatpush1.msra.mxu0 0.0
    %1177 = vmatprep.subr.mxu0 0.0
    %1178 = vmatpush1.msra.mxu0 0.0
    %1179 = vmatprep.subr.mxu0 0.0
    %1180 = vmatpush1.msra.mxu0 0.0
    %1181 = vmatprep.subr.mxu0 0.0
    %1182 = vmatpush1.msra.mxu0 0.0
    %1183 = vmatprep.subr.mxu0 0.0
    %1184 = vmatpush1.msra.mxu0 0.0
    %1185 = vmatprep.mubr.f32.mxu0 %v1104
    %1186 = vmatmul.mubr.f32.gmra.mrb[0].mxu0 %v1054
    %v1187 = vpop.f32.mrb[0].mxu0
    %v1188 = vadd.f32 %v1075, %v1187
    %v1189 = vpop.f32.mrb[0].mxu0
    %1190 = vmatprep.mubr.f32.mxu0 %v1107
    %1191 = vmatmul.mubr.f32.gmra.mrb[0].mxu0 %v1056
    %v1192 = vpop.f32.mrb[0].mxu0
    %v1193 = vadd.f32 %v1080, %v1192
    %v1194 = vpop.f32.mrb[0].mxu0
    %1195 = vmatprep.mubr.f32.mxu0 %v1110
    %1196 = vmatmul.mubr.f32.gmra.mrb[0].mxu0 %v1058
    %v1197 = vpop.f32.mrb[0].mxu0
    %v1198 = vadd.f32 %v1085, %v1197
    %v1199 = vpop.f32.mrb[0].mxu0
    %1200 = vmatprep.mubr.f32.mxu0 %v1113
    %1201 = vmatmul.mubr.f32.gmra.mrb[0].mxu0 %v1060
    %v1202 = vpop.f32.mrb[0].mxu0
    %v1203 = vadd.f32 %v1090, %v1202
    %v1204 = vpop.f32.mrb[0].mxu0
    %1205 = vmatprep.mubr.f32.mxu0 %v1116
    %1206 = vmatmul.mubr.f32.gmra.mrb[0].mxu0 %v1062
    %v1207 = vpop.f32.mrb[0].mxu0
    %v1208 = vadd.f32 %v1095, %v1207
    %v1209 = vpop.f32.mrb[0].mxu0
    %1210 = vmatprep.mubr.f32.mxu0 %v1119
    %1211 = vmatmul.mubr.f32.gmra.mrb[0].mxu0 %v1064
    %v1212 = vpop.f32.mrb[0].mxu0
    %v1213 = vadd.f32 %v1100, %v1212
    %v1214 = vpop.f32.mrb[0].mxu0
    %1215 = vdwg.mxu0
    %v1216 = vmax.f32 %v1188, 0.0
    %v1217 = vmax.f32 %v1193, 0.0
    %v1218 = vmax.f32 %v1198, 0.0
    %v1219 = vmax.f32 %v1203, 0.0
    %v1220 = vmax.f32 %v1208, 0.0
    %v1221 = vmax.f32 %v1213, 0.0
    %v1222 = vmax.f32 %v1023, %v1004
    %v1223 = vmax.f32 %v1025, %v1009
    %v1224 = vmax.f32 %v1027, %v1014
    %v1225 = vmax.f32 %v1029, %v1019
    %v1226 = vmax.f32 %v1222, %v1031
    %v1227 = vmax.f32 %v1223, %v1033
    %v1228 = vmax.f32 %v1224, %v1035
    %v1229 = vmax.f32 %v1225, %v1037
    %v1230 = vld [vmem:[%s14] sm:$0xff]
    %v1231 = vld [vmem:[%s14 + $0x8] sm:$0xff]
    %v1232 = vld [vmem:[%s15] sm:$0xff]
    %v1233 = vld [vmem:[%s15 + $0x8] sm:$0xff]
    %1235 = vset.pattern.permute.xlu0 0
    %1236 = vperm.xlu0 %1235, %v1232
    %v1237 = vpop.permute.xlu0 %1236
    %1240 = vset.pattern.permute.xlu0 0
    %1241 = vperm.xlu0 %1240, %v1233
    %v1242 = vpop.permute.xlu0 %1241
    %v1245 = vsel %vm1102, %v1230, 0
    %v1248 = vsel %vm1102, %v1231, 0
    %1250 = vmatprep.subr.mxu0 0.0
    %1251 = vmatpush1.msra.mxu0 %v1226
    %1252 = vmatprep.subr.mxu0 0.0
    %1253 = vmatpush1.msra.mxu0 %v1227
    %1254 = vmatprep.subr.mxu0 0.0
    %1255 = vmatpush1.msra.mxu0 %v1228
    %1256 = vmatprep.subr.mxu0 0.0
    %1257 = vmatpush1.msra.mxu0 %v1229
    %1258 = vmatprep.subr.mxu0 0.0
    %1259 = vmatpush1.msra.mxu0 0.0
    %1260 = vmatprep.subr.mxu0 0.0
    %1261 = vmatpush1.msra.mxu0 0.0
    %1262 = vmatprep.subr.mxu0 0.0
    %1263 = vmatpush1.msra.mxu0 0.0
    %1264 = vmatprep.subr.mxu0 0.0
    %1265 = vmatpush1.msra.mxu0 0.0
    %1266 = vmatprep.subr.mxu0 0.0
    %1267 = vmatpush1.msra.mxu0 0.0
    %1268 = vmatprep.subr.mxu0 0.0
    %1269 = vmatpush1.msra.mxu0 0.0
    %1270 = vmatprep.subr.mxu0 0.0
    %1271 = vmatpush1.msra.mxu0 0.0
    %1272 = vmatprep.subr.mxu0 0.0
    %1273 = vmatpush1.msra.mxu0 0.0
    %1274 = vmatprep.subr.mxu0 0.0
    %1275 = vmatpush1.msra.mxu0 0.0
    %1276 = vmatprep.subr.mxu0 0.0
    %1277 = vmatpush1.msra.mxu0 0.0
    %1278 = vmatprep.subr.mxu0 0.0
    %1279 = vmatpush1.msra.mxu0 0.0
    %1280 = vmatprep.subr.mxu0 0.0
    %1281 = vmatpush1.msra.mxu0 0.0
    %1282 = vmatprep.subr.mxu0 0.0
    %1283 = vmatpush1.msra.mxu0 0.0
    %1284 = vmatprep.subr.mxu0 0.0
    %1285 = vmatpush1.msra.mxu0 0.0
    %1286 = vmatprep.subr.mxu0 0.0
    %1287 = vmatpush1.msra.mxu0 0.0
    %1288 = vmatprep.subr.mxu0 0.0
    %1289 = vmatpush1.msra.mxu0 0.0
    %1290 = vmatprep.subr.mxu0 0.0
    %1291 = vmatpush1.msra.mxu0 0.0
    %1292 = vmatprep.subr.mxu0 0.0
    %1293 = vmatpush1.msra.mxu0 0.0
    %1294 = vmatprep.subr.mxu0 0.0
    %1295 = vmatpush1.msra.mxu0 0.0
    %1296 = vmatprep.subr.mxu0 0.0
    %1297 = vmatpush1.msra.mxu0 0.0
    %1298 = vmatprep.subr.mxu0 0.0
    %1299 = vmatpush1.msra.mxu0 0.0
    %1300 = vmatprep.subr.mxu0 0.0
    %1301 = vmatpush1.msra.mxu0 0.0
    %1302 = vmatprep.subr.mxu0 0.0
    %1303 = vmatpush1.msra.mxu0 0.0
    %1304 = vmatprep.subr.mxu0 0.0
    %1305 = vmatpush1.msra.mxu0 0.0
    %1306 = vmatprep.subr.mxu0 0.0
    %1307 = vmatpush1.msra.mxu0 0.0
    %1308 = vmatprep.subr.mxu0 0.0
    %1309 = vmatpush1.msra.mxu0 0.0
    %1310 = vmatprep.subr.mxu0 0.0
    %1311 = vmatpush1.msra.mxu0 0.0
    %1312 = vmatprep.subr.mxu0 0.0
    %1313 = vmatpush1.msra.mxu0 0.0
    %1314 = vmatprep.mubr.f32.mxu0 0.0
    %1315 = vmatmul.mubr.f32.gmra.mrb[0].mxu0 %v1245
    %v1316 = vpop.f32.mrb[0].mxu0
    %v1317 = vadd.f32 %v1237, %v1316
    %v1318 = vpop.f32.mrb[0].mxu0
    %1319 = vmatprep.mubr.f32.mxu0 0.0
    %1320 = vmatmul.mubr.f32.gmra.mrb[0].mxu0 %v1248
    %v1321 = vpop.f32.mrb[0].mxu0
    %v1322 = vadd.f32 %v1242, %v1321
    %v1323 = vpop.f32.mrb[0].mxu0
    %1324 = vdwg.mxu0
    %v1325 = vmax.f32 %v1317, 0.0
    %v1326 = vmax.f32 %v1322, 0.0
    %1327 = vst [vmem:[#allocation2] sm:$0xff] %v1216
    %1328 = vst [vmem:[#allocation2 + $0x8] sm:$0xff] %v1217
    %1329 = vst [vmem:[#allocation2 + $0x10] sm:$0xff] %v1218
    %1330 = vst [vmem:[#allocation2 + $0x18] sm:$0xff] %v1219
    %1331 = vst [vmem:[#allocation2 + $0x20] sm:$0xff] %v1220
    %1332 = vst [vmem:[#allocation2 + $0x28] sm:$0xff] %v1221
    %1333 = vst [vmem:[#allocation2 + $0x30] sm:$0xff] %v1325
    %1334 = vst [vmem:[#allocation2 + $0x38] sm:$0xff] %v1326
    %v1335 = vld [vmem:[#allocation2] sm:$0x1]
    %vm1336 = vcmask 401408
    %1337 = vst.msk [vmem:[#allocation3] sm:$0x1] %vm1336, %v1335
    %v1338 = vld [vmem:[#allocation2 + $0x1] sm:$0x1]
    %v1341 = vunpack.c.l.s4 1983009808
    %v1342 = vunpack.c.0.s8 %v1341
    %v1343 = vlaneseq
    %v1344 = vshrl.u32 %v1343, 7
    %v1345 = vsub.s32 %v1342, %v1344
    %v1346 = vrot.slane %v1338, %v1345
    %1347 = vrot.lane.b32.xlu0 %v1346, 50
    %v1348 = vpop.permute.xlu0 %1347
    %vm1350 = vcmask 811408
    %1351 = vst.msk [vmem:[#allocation3] sm:$0x1] %vm1350, %v1348
    %v1352 = vld [vmem:[#allocation2 + $0x2] sm:$0x1]
    %v1355 = vunpack.c.l.s4 1983009808
    %v1356 = vunpack.c.0.s8 %v1355
    %v1357 = vlaneseq
    %v1358 = vshrl.u32 %v1357, 7
    %v1359 = vsub.s32 %v1356, %v1358
    %v1360 = vrot.slane %v1352, %v1359
    %1361 = vrot.lane.b32.xlu0 %v1360, 100
    %v1362 = vpop.permute.xlu0 %1361
    %v1363 = vrot.slane %v1362, 6
    %vm1364 = vcmask 818176
    %v1365 = vsel %vm1364, %v1363, %v1362
    %vm1367 = vcmask 1041184
    %vm1368 = vcmask 174082
    %vm1369 = vmor %vm1368, %vm1367
    %1370 = vst.msk [vmem:[#allocation3] sm:$0x5] %vm1369, %v1365
    %v1371 = vld [vmem:[#allocation2 + $0x3] sm:$0x1]
    %v1374 = vunpack.c.l.s4 1983009808
    %v1375 = vunpack.c.0.s8 %v1374
    %v1376 = vlaneseq
    %v1377 = vshrl.u32 %v1376, 7
    %v1378 = vsub.s32 %v1375, %v1377
    %v1379 = vrot.slane %v1371, %v1378
    %1380 = vrot.lane.b32.xlu0 %v1379, 22
    %v1381 = vpop.permute.xlu0 %1380
    %vm1383 = vcmask 581808
    %1384 = vst.msk [vmem:[#allocation3 + $0x2] sm:$0x1] %vm1383, %v1381
    %v1385 = vld [vmem:[#allocation2 + $0x4] sm:$0x1]
    %v1388 = vunpack.c.l.s4 1983009808
    %v1389 = vunpack.c.0.s8 %v1388
    %v1390 = vlaneseq
    %v1391 = vshrl.u32 %v1390, 7
    %v1392 = vsub.s32 %v1389, %v1391
    %v1393 = vrot.slane %v1385, %v1392
    %1394 = vrot.lane.b32.xlu0 %v1393, 72
    %v1395 = vpop.permute.xlu0 %1394
    %vm1397 = vcmask 991808
    %1398 = vst.msk [vmem:[#allocation3 + $0x2] sm:$0x1] %vm1397, %v1395
    %v1399 = vld [vmem:[#allocation2 + $0x5] sm:$0x1]
    %v1402 = vunpack.c.l.s4 1983009808
    %v1403 = vunpack.c.0.s8 %v1402
    %v1404 = vlaneseq
    %v1405 = vshrl.u32 %v1404, 7
    %v1406 = vsub.s32 %v1403, %v1405
    %v1407 = vrot.slane %v1399, %v1406
    %1408 = vrot.lane.b32.xlu0 %v1407, 122
    %v1409 = vpop.permute.xlu0 %1408
    %v1410 = vrot.slane %v1409, 6
    %vm1411 = vcmask 998400
    %v1412 = vsel %vm1411, %v1410, %v1409
    %vm1414 = vcmask 1041360
    %vm1415 = vcmask 354306
    %vm1416 = vmor %vm1415, %vm1414
    %1417 = vst.msk [vmem:[#allocation3 + $0x2] sm:$0x5] %vm1416, %v1412
    %v1418 = vld [vmem:[#allocation2 + $0x6] sm:$0x1]
    %v1421 = vunpack.c.l.s4 1983009808
    %v1422 = vunpack.c.0.s8 %v1421
    %v1423 = vlaneseq
    %v1424 = vshrl.u32 %v1423, 7
    %v1425 = vsub.s32 %v1422, %v1424
    %v1426 = vrot.slane %v1418, %v1425
    %1427 = vrot.lane.b32.xlu0 %v1426, 44
    %v1428 = vpop.permute.xlu0 %1427
    %vm1430 = vcmask 762208
    %1431 = vst.msk [vmem:[#allocation3 + $0x4] sm:$0x1] %vm1430, %v1428
    %v1432 = vld [vmem:[#allocation2 + $0x7] sm:$0x1]
    %v1435 = vunpack.c.l.s4 1983009808
    %v1436 = vunpack.c.0.s8 %v1435
    %v1437 = vlaneseq
    %v1438 = vshrl.u32 %v1437, 7
    %v1439 = vsub.s32 %v1436, %v1438
    %v1440 = vrot.slane %v1432, %v1439
    %1441 = vrot.lane.b32.xlu0 %v1440, 94
    %v1442 = vpop.permute.xlu0 %1441
    %v1443 = vrot.slane %v1442, 6
    %vm1444 = vcmask 769024
    %v1445 = vsel %vm1444, %v1443, %v1442
    %vm1447 = vcmask 1041136
    %vm1448 = vcmask 124930
    %vm1449 = vmor %vm1448, %vm1447
    %1450 = vst.msk [vmem:[#allocation3 + $0x4] sm:$0x5] %vm1449, %v1445
    %v1451 = vld [vmem:[#allocation2 + $0x10] sm:$0x1]
    %v1454 = vunpack.c.l.s4 1983009808
    %v1455 = vunpack.c.0.s8 %v1454
    %v1456 = vlaneseq
    %v1457 = vshrl.u32 %v1456, 7
    %v1458 = vsub.s32 %v1455, %v1457
    %v1459 = vrot.slane %v1451, %v1458
    %1460 = vrot.lane.b32.xlu0 %v1459, 16
    %v1461 = vpop.permute.xlu0 %1460
    %vm1463 = vcmask 532608
    %1464 = vst.msk [vmem:[#allocation3 + $0x6] sm:$0x1] %vm1463, %v1461
    %v1465 = vld [vmem:[#allocation2 + $0x11] sm:$0x1]
    %v1468 = vunpack.c.l.s4 1983009808
    %v1469 = vunpack.c.0.s8 %v1468
    %v1470 = vlaneseq
    %v1471 = vshrl.u32 %v1470, 7
    %v1472 = vsub.s32 %v1469, %v1471
    %v1473 = vrot.slane %v1465, %v1472
    %1474 = vrot.lane.b32.xlu0 %v1473, 66
    %v1475 = vpop.permute.xlu0 %1474
    %vm1477 = vcmask 942608
    %1478 = vst.msk [vmem:[#allocation3 + $0x6] sm:$0x1] %vm1477, %v1475
    %v1479 = vld [vmem:[#allocation2 + $0x12] sm:$0x1]
    %v1482 = vunpack.c.l.s4 1983009808
    %v1483 = vunpack.c.0.s8 %v1482
    %v1484 = vlaneseq
    %v1485 = vshrl.u32 %v1484, 7
    %v1486 = vsub.s32 %v1483, %v1485
    %v1487 = vrot.slane %v1479, %v1486
    %1488 = vrot.lane.b32.xlu0 %v1487, 116
    %v1489 = vpop.permute.xlu0 %1488
    %v1490 = vrot.slane %v1489, 6
    %vm1491 = vcmask 949248
    %v1492 = vsel %vm1491, %v1490, %v1489
    %vm1494 = vcmask 1041312
    %vm1495 = vcmask 305154
    %vm1496 = vmor %vm1495, %vm1494
    %1497 = vst.msk [vmem:[#allocation3 + $0x6] sm:$0x5] %vm1496, %v1492
    %v1498 = vld [vmem:[#allocation2 + $0x13] sm:$0x1]
    %v1501 = vunpack.c.l.s4 1983009808
    %v1502 = vunpack.c.0.s8 %v1501
    %v1503 = vlaneseq
    %v1504 = vshrl.u32 %v1503, 7
    %v1505 = vsub.s32 %v1502, %v1504
    %v1506 = vrot.slane %v1498, %v1505
    %1507 = vrot.lane.b32.xlu0 %v1506, 38
    %v1508 = vpop.permute.xlu0 %1507
    %vm1510 = vcmask 713008
    %1511 = vst.msk [vmem:[#allocation3 + $0x8] sm:$0x1] %vm1510, %v1508
    %v1512 = vld [vmem:[#allocation2 + $0x14] sm:$0x1]
    %v1515 = vunpack.c.l.s4 1983009808
    %v1516 = vunpack.c.0.s8 %v1515
    %v1517 = vlaneseq
    %v1518 = vshrl.u32 %v1517, 7
    %v1519 = vsub.s32 %v1516, %v1518
    %v1520 = vrot.slane %v1512, %v1519
    %1521 = vrot.lane.b32.xlu0 %v1520, 88
    %v1522 = vpop.permute.xlu0 %1521
    %v1523 = vrot.slane %v1522, 6
    %vm1524 = vcmask 719872
    %v1525 = vsel %vm1524, %v1523, %v1522
    %vm1527 = vcmask 1041088
    %vm1528 = vcmask 75778
    %vm1529 = vmor %vm1528, %vm1527
    %1530 = vst.msk [vmem:[#allocation3 + $0x8] sm:$0x5] %vm1529, %v1525
    %v1531 = vld [vmem:[#allocation2 + $0x15] sm:$0x1]
    %v1534 = vunpack.c.l.s4 1983009808
    %v1535 = vunpack.c.0.s8 %v1534
    %v1536 = vlaneseq
    %v1537 = vshrl.u32 %v1536, 7
    %v1538 = vsub.s32 %v1535, %v1537
    %v1539 = vrot.slane %v1531, %v1538
    %1540 = vrot.lane.b32.xlu0 %v1539, 10
    %v1541 = vpop.permute.xlu0 %1540
    %vm1543 = vcmask 483408
    %1544 = vst.msk [vmem:[#allocation3 + $0xa] sm:$0x1] %vm1543, %v1541
    %v1545 = vld [vmem:[#allocation2 + $0x16] sm:$0x1]
    %v1548 = vunpack.c.l.s4 1983009808
    %v1549 = vunpack.c.0.s8 %v1548
    %v1550 = vlaneseq
    %v1551 = vshrl.u32 %v1550, 7
    %v1552 = vsub.s32 %v1549, %v1551
    %v1553 = vrot.slane %v1545, %v1552
    %1554 = vrot.lane.b32.xlu0 %v1553, 60
    %v1555 = vpop.permute.xlu0 %1554
    %vm1557 = vcmask 893408
    %1558 = vst.msk [vmem:[#allocation3 + $0xa] sm:$0x1] %vm1557, %v1555
    %v1559 = vld [vmem:[#allocation2 + $0x17] sm:$0x1]
    %v1562 = vunpack.c.l.s4 1983009808
    %v1563 = vunpack.c.0.s8 %v1562
    %v1564 = vlaneseq
    %v1565 = vshrl.u32 %v1564, 7
    %v1566 = vsub.s32 %v1563, %v1565
    %v1567 = vrot.slane %v1559, %v1566
    %1568 = vrot.lane.b32.xlu0 %v1567, 110
    %v1569 = vpop.permute.xlu0 %1568
    %v1570 = vrot.slane %v1569, 6
    %vm1571 = vcmask 900096
    %v1572 = vsel %vm1571, %v1570, %v1569
    %vm1574 = vcmask 1041264
    %vm1575 = vcmask 256002
    %vm1576 = vmor %vm1575, %vm1574
    %1577 = vst.msk [vmem:[#allocation3 + $0xa] sm:$0x5] %vm1576, %v1572
    %v1578 = vld [vmem:[#allocation2 + $0x20] sm:$0x1]
    %v1581 = vunpack.c.l.s4 1983009808
    %v1582 = vunpack.c.0.s8 %v1581
    %v1583 = vlaneseq
    %v1584 = vshrl.u32 %v1583, 7
    %v1585 = vsub.s32 %v1582, %v1584
    %v1586 = vrot.slane %v1578, %v1585
    %1587 = vrot.lane.b32.xlu0 %v1586, 32
    %v1588 = vpop.permute.xlu0 %1587
    %vm1590 = vcmask 663808
    %1591 = vst.msk [vmem:[#allocation3 + $0xc] sm:$0x1] %vm1590, %v1588
    %v1592 = vld [vmem:[#allocation2 + $0x21] sm:$0x1]
    %v1595 = vunpack.c.l.s4 1983009808
    %v1596 = vunpack.c.0.s8 %v1595
    %v1597 = vlaneseq
    %v1598 = vshrl.u32 %v1597, 7
    %v1599 = vsub.s32 %v1596, %v1598
    %v1600 = vrot.slane %v1592, %v1599
    %1601 = vrot.lane.b32.xlu0 %v1600, 82
    %v1602 = vpop.permute.xlu0 %1601
    %v1603 = vrot.slane %v1602, 6
    %vm1604 = vcmask 670720
    %v1605 = vsel %vm1604, %v1603, %v1602
    %vm1607 = vcmask 1041040
    %vm1608 = vcmask 26626
    %vm1609 = vmor %vm1608, %vm1607
    %1610 = vst.msk [vmem:[#allocation3 + $0xc] sm:$0x5] %vm1609, %v1605
    %v1611 = vld [vmem:[#allocation2 + $0x22] sm:$0x1]
    %v1614 = vunpack.c.l.s4 1983009808
    %v1615 = vunpack.c.0.s8 %v1614
    %v1616 = vlaneseq
    %v1617 = vshrl.u32 %v1616, 7
    %v1618 = vsub.s32 %v1615, %v1617
    %v1619 = vrot.slane %v1611, %v1618
    %1620 = vrot.lane.b32.xlu0 %v1619, 4
    %v1621 = vpop.permute.xlu0 %1620
    %vm1623 = vcmask 434208
    %1624 = vst.msk [vmem:[#allocation3 + $0xe] sm:$0x1] %vm1623, %v1621
    %v1625 = vld [vmem:[#allocation2 + $0x23] sm:$0x1]
    %v1628 = vunpack.c.l.s4 1983009808
    %v1629 = vunpack.c.0.s8 %v1628
    %v1630 = vlaneseq
    %v1631 = vshrl.u32 %v1630, 7
    %v1632 = vsub.s32 %v1629, %v1631
    %v1633 = vrot.slane %v1625, %v1632
    %1634 = vrot.lane.b32.xlu0 %v1633, 54
    %v1635 = vpop.permute.xlu0 %1634
    %vm1637 = vcmask 844208
    %1638 = vst.msk [vmem:[#allocation3 + $0xe] sm:$0x1] %vm1637, %v1635
    %v1639 = vld [vmem:[#allocation2 + $0x24] sm:$0x1]
    %v1642 = vunpack.c.l.s4 1983009808
    %v1643 = vunpack.c.0.s8 %v1642
    %v1644 = vlaneseq
    %v1645 = vshrl.u32 %v1644, 7
    %v1646 = vsub.s32 %v1643, %v1645
    %v1647 = vrot.slane %v1639, %v1646
    %1648 = vrot.lane.b32.xlu0 %v1647, 104
    %v1649 = vpop.permute.xlu0 %1648
    %v1650 = vrot.slane %v1649, 6
    %vm1651 = vcmask 850944
    %v1652 = vsel %vm1651, %v1650, %v1649
    %vm1654 = vcmask 1041216
    %vm1655 = vcmask 206850
    %vm1656 = vmor %vm1655, %vm1654
    %1657 = vst.msk [vmem:[#allocation3 + $0xe] sm:$0x5] %vm1656, %v1652
    %v1658 = vld [vmem:[#allocation2 + $0x25] sm:$0x1]
    %v1661 = vunpack.c.l.s4 1983009808
    %v1662 = vunpack.c.0.s8 %v1661
    %v1663 = vlaneseq
    %v1664 = vshrl.u32 %v1663, 7
    %v1665 = vsub.s32 %v1662, %v1664
    %v1666 = vrot.slane %v1658, %v1665
    %1667 = vrot.lane.b32.xlu0 %v1666, 26
    %v1668 = vpop.permute.xlu0 %1667
    %vm1670 = vcmask 614608
    %1671 = vst.msk [vmem:[#allocation3 + $0x10] sm:$0x1] %vm1670, %v1668
    %v1672 = vld [vmem:[#allocation2 + $0x26] sm:$0x1]
    %v1675 = vunpack.c.l.s4 1983009808
    %v1676 = vunpack.c.0.s8 %v1675
    %v1677 = vlaneseq
    %v1678 = vshrl.u32 %v1677, 7
    %v1679 = vsub.s32 %v1676, %v1678
    %v1680 = vrot.slane %v1672, %v1679
    %1681 = vrot.lane.b32.xlu0 %v1680, 76
    %v1682 = vpop.permute.xlu0 %1681
    %vm1684 = vcmask 1024608
    %1685 = vst.msk [vmem:[#allocation3 + $0x10] sm:$0x1] %vm1684, %v1682
    %v1686 = vld [vmem:[#allocation2 + $0x27] sm:$0x1]
    %v1689 = vunpack.c.l.s4 1983009808
    %v1690 = vunpack.c.0.s8 %v1689
    %v1691 = vlaneseq
    %v1692 = vshrl.u32 %v1691, 7
    %v1693 = vsub.s32 %v1690, %v1692
    %v1694 = vrot.slane %v1686, %v1693
    %1695 = vrot.lane.b32.xlu0 %v1694, 126
    %v1696 = vpop.permute.xlu0 %1695
    %v1697 = vrot.slane %v1696, 6
    %vm1698 = vcmask 1031168
    %v1699 = vsel %vm1698, %v1697, %v1696
    %vm1701 = vcmask 1041392
    %vm1702 = vcmask 387074
    %vm1703 = vmor %vm1702, %vm1701
    %1704 = vst.msk [vmem:[#allocation3 + $0x10] sm:$0x5] %vm1703, %v1699
    %v1705 = vld [vmem:[#allocation2 + $0x30] sm:$0x1]
    %v1708 = vunpack.c.l.s4 1983009808
    %v1709 = vunpack.c.0.s8 %v1708
    %v1710 = vlaneseq
    %v1711 = vshrl.u32 %v1710, 7
    %v1712 = vsub.s32 %v1709, %v1711
    %v1713 = vrot.slane %v1705, %v1712
    %1714 = vrot.lane.b32.xlu0 %v1713, 48
    %v1715 = vpop.permute.xlu0 %1714
    %vm1717 = vcmask 795008
    %1718 = vst.msk [vmem:[#allocation3 + $0x12] sm:$0x1] %vm1717, %v1715
    %v1719 = vld [vmem:[#allocation2 + $0x31] sm:$0x1]
    %v1722 = vunpack.c.l.s4 1983009808
    %v1723 = vunpack.c.0.s8 %v1722
    %v1724 = vlaneseq
    %v1725 = vshrl.u32 %v1724, 7
    %v1726 = vsub.s32 %v1723, %v1725
    %v1727 = vrot.slane %v1719, %v1726
    %1728 = vrot.lane.b32.xlu0 %v1727, 98
    %v1729 = vpop.permute.xlu0 %1728
    %v1730 = vrot.slane %v1729, 6
    %vm1731 = vcmask 801792
    %v1732 = vsel %vm1731, %v1730, %v1729
    %vm1734 = vcmask 1041168
    %vm1735 = vcmask 157698
    %vm1736 = vmor %vm1735, %vm1734
    %1737 = vst.msk [vmem:[#allocation3 + $0x12] sm:$0x5] %vm1736, %v1732
    %v1738 = vld [vmem:[#allocation2 + $0x32] sm:$0x1]
    %v1741 = vunpack.c.l.s4 1983009808
    %v1742 = vunpack.c.0.s8 %v1741
    %v1743 = vlaneseq
    %v1744 = vshrl.u32 %v1743, 7
    %v1745 = vsub.s32 %v1742, %v1744
    %v1746 = vrot.slane %v1738, %v1745
    %1747 = vrot.lane.b32.xlu0 %v1746, 20
    %v1748 = vpop.permute.xlu0 %1747
    %vm1750 = vcmask 565408
    %1751 = vst.msk [vmem:[#allocation3 + $0x14] sm:$0x1] %vm1750, %v1748
    %v1752 = vld [vmem:[#allocation2 + $0x33] sm:$0x1]
    %v1755 = vunpack.c.l.s4 1983009808
    %v1756 = vunpack.c.0.s8 %v1755
    %v1757 = vlaneseq
    %v1758 = vshrl.u32 %v1757, 7
    %v1759 = vsub.s32 %v1756, %v1758
    %v1760 = vrot.slane %v1752, %v1759
    %1761 = vrot.lane.b32.xlu0 %v1760, 70
    %v1762 = vpop.permute.xlu0 %1761
    %vm1764 = vcmask 975408
    %1765 = vst.msk [vmem:[#allocation3 + $0x14] sm:$0x1] %vm1764, %v1762
    %v1766 = vld [vmem:[#allocation2 + $0x34] sm:$0x1]
    %v1769 = vunpack.c.l.s4 1983009808
    %v1770 = vunpack.c.0.s8 %v1769
    %v1771 = vlaneseq
    %v1772 = vshrl.u32 %v1771, 7
    %v1773 = vsub.s32 %v1770, %v1772
    %v1774 = vrot.slane %v1766, %v1773
    %1775 = vrot.lane.b32.xlu0 %v1774, 120
    %v1776 = vpop.permute.xlu0 %1775
    %v1777 = vrot.slane %v1776, 6
    %vm1778 = vcmask 982016
    %v1779 = vsel %vm1778, %v1777, %v1776
    %vm1781 = vcmask 1041344
    %vm1782 = vcmask 337922
    %vm1783 = vmor %vm1782, %vm1781
    %1784 = vst.msk [vmem:[#allocation3 + $0x14] sm:$0x5] %vm1783, %v1779
    %v1785 = vld [vmem:[#allocation2 + $0x35] sm:$0x1]
    %v1788 = vunpack.c.l.s4 1983009808
    %v1789 = vunpack.c.0.s8 %v1788
    %v1790 = vlaneseq
    %v1791 = vshrl.u32 %v1790, 7
    %v1792 = vsub.s32 %v1789, %v1791
    %v1793 = vrot.slane %v1785, %v1792
    %1794 = vrot.lane.b32.xlu0 %v1793, 42
    %v1795 = vpop.permute.xlu0 %1794
    %vm1797 = vcmask 745808
    %1798 = vst.msk [vmem:[#allocation3 + $0x16] sm:$0x1] %vm1797, %v1795
    %v1799 = vld [vmem:[#allocation2 + $0x36] sm:$0x1]
    %v1802 = vunpack.c.l.s4 1983009808
    %v1803 = vunpack.c.0.s8 %v1802
    %v1804 = vlaneseq
    %v1805 = vshrl.u32 %v1804, 7
    %v1806 = vsub.s32 %v1803, %v1805
    %v1807 = vrot.slane %v1799, %v1806
    %1808 = vrot.lane.b32.xlu0 %v1807, 92
    %v1809 = vpop.permute.xlu0 %1808
    %v1810 = vrot.slane %v1809, 6
    %vm1811 = vcmask 752640
    %v1812 = vsel %vm1811, %v1810, %v1809
    %vm1814 = vcmask 1041120
    %vm1815 = vcmask 108546
    %vm1816 = vmor %vm1815, %vm1814
    %1817 = vst.msk [vmem:[#allocation3 + $0x16] sm:$0x5] %vm1816, %v1812
    %v1818 = vld [vmem:[#allocation2 + $0x37] sm:$0x1]
    %v1821 = vunpack.c.l.s4 1983009808
    %v1822 = vunpack.c.0.s8 %v1821
    %v1823 = vlaneseq
    %v1824 = vshrl.u32 %v1823, 7
    %v1825 = vsub.s32 %v1822, %v1824
    %v1826 = vrot.slane %v1818, %v1825
    %1827 = vrot.lane.b32.xlu0 %v1826, 14
    %v1828 = vpop.permute.xlu0 %1827
    %vm1830 = vcmask 516208
    %1831 = vst.msk [vmem:[#allocation3 + $0x18] sm:$0x1] %vm1830, %v1828
    %v1832 = vld [vmem:[#allocation2 + $0x8] sm:$0x1]
    %1833 = vst.msk [vmem:[#allocation3 + $0x1] sm:$0x1] %vm1336, %v1832
    %v1834 = vld [vmem:[#allocation2 + $0x9] sm:$0x1]
    %v1837 = vunpack.c.l.s4 1983009808
    %v1838 = vunpack.c.0.s8 %v1837
    %v1839 = vlaneseq
    %v1840 = vshrl.u32 %v1839, 7
    %v1841 = vsub.s32 %v1838, %v1840
    %v1842 = vrot.slane %v1834, %v1841
    %1843 = vrot.lane.b32.xlu0 %v1842, 50
    %v1844 = vpop.permute.xlu0 %1843
    %1846 = vst.msk [vmem:[#allocation3 + $0x1] sm:$0x1] %vm1350, %v1844
    %v1847 = vld [vmem:[#allocation2 + $0xa] sm:$0x1]
    %v1850 = vunpack.c.l.s4 1983009808
    %v1851 = vunpack.c.0.s8 %v1850
    %v1852 = vlaneseq
    %v1853 = vshrl.u32 %v1852, 7
    %v1854 = vsub.s32 %v1851, %v1853
    %v1855 = vrot.slane %v1847, %v1854
    %1856 = vrot.lane.b32.xlu0 %v1855, 100
    %v1857 = vpop.permute.xlu0 %1856
    %v1858 = vrot.slane %v1857, 6
    %v1859 = vsel %vm1364, %v1858, %v1857
    %1861 = vst.msk [vmem:[#allocation3 + $0x1] sm:$0x5] %vm1369, %v1859
    %v1862 = vld [vmem:[#allocation2 + $0xb] sm:$0x1]
    %v1865 = vunpack.c.l.s4 1983009808
    %v1866 = vunpack.c.0.s8 %v1865
    %v1867 = vlaneseq
    %v1868 = vshrl.u32 %v1867, 7
    %v1869 = vsub.s32 %v1866, %v1868
    %v1870 = vrot.slane %v1862, %v1869
    %1871 = vrot.lane.b32.xlu0 %v1870, 22
    %v1872 = vpop.permute.xlu0 %1871
    %1874 = vst.msk [vmem:[#allocation3 + $0x3] sm:$0x1] %vm1383, %v1872
    %v1875 = vld [vmem:[#allocation2 + $0xc] sm:$0x1]
    %v1878 = vunpack.c.l.s4 1983009808
    %v1879 = vunpack.c.0.s8 %v1878
    %v1880 = vlaneseq
    %v1881 = vshrl.u32 %v1880, 7
    %v1882 = vsub.s32 %v1879, %v1881
    %v1883 = vrot.slane %v1875, %v1882
    %1884 = vrot.lane.b32.xlu0 %v1883, 72
    %v1885 = vpop.permute.xlu0 %1884
    %1887 = vst.msk [vmem:[#allocation3 + $0x3] sm:$0x1] %vm1397, %v1885
    %v1888 = vld [vmem:[#allocation2 + $0xd] sm:$0x1]
    %v1891 = vunpack.c.l.s4 1983009808
    %v1892 = vunpack.c.0.s8 %v1891
    %v1893 = vlaneseq
    %v1894 = vshrl.u32 %v1893, 7
    %v1895 = vsub.s32 %v1892, %v1894
    %v1896 = vrot.slane %v1888, %v1895
    %1897 = vrot.lane.b32.xlu0 %v1896, 122
    %v1898 = vpop.permute.xlu0 %1897
    %v1899 = vrot.slane %v1898, 6
    %v1900 = vsel %vm1411, %v1899, %v1898
    %1902 = vst.msk [vmem:[#allocation3 + $0x3] sm:$0x5] %vm1416, %v1900
    %v1903 = vld [vmem:[#allocation2 + $0xe] sm:$0x1]
    %v1906 = vunpack.c.l.s4 1983009808
    %v1907 = vunpack.c.0.s8 %v1906
    %v1908 = vlaneseq
    %v1909 = vshrl.u32 %v1908, 7
    %v1910 = vsub.s32 %v1907, %v1909
    %v1911 = vrot.slane %v1903, %v1910
    %1912 = vrot.lane.b32.xlu0 %v1911, 44
    %v1913 = vpop.permute.xlu0 %1912
    %1915 = vst.msk [vmem:[#allocation3 + $0x5] sm:$0x1] %vm1430, %v1913
    %v1916 = vld [vmem:[#allocation2 + $0xf] sm:$0x1]
    %v1919 = vunpack.c.l.s4 1983009808
    %v1920 = vunpack.c.0.s8 %v1919
    %v1921 = vlaneseq
    %v1922 = vshrl.u32 %v1921, 7
    %v1923 = vsub.s32 %v1920, %v1922
    %v1924 = vrot.slane %v1916, %v1923
    %1925 = vrot.lane.b32.xlu0 %v1924, 94
    %v1926 = vpop.permute.xlu0 %1925
    %v1927 = vrot.slane %v1926, 6
    %v1928 = vsel %vm1444, %v1927, %v1926
    %1930 = vst.msk [vmem:[#allocation3 + $0x5] sm:$0x5] %vm1449, %v1928
    %v1931 = vld [vmem:[#allocation2 + $0x18] sm:$0x1]
    %v1934 = vunpack.c.l.s4 1983009808
    %v1935 = vunpack.c.0.s8 %v1934
    %v1936 = vlaneseq
    %v1937 = vshrl.u32 %v1936, 7
    %v1938 = vsub.s32 %v1935, %v1937
    %v1939 = vrot.slane %v1931, %v1938
    %1940 = vrot.lane.b32.xlu0 %v1939, 16
    %v1941 = vpop.permute.xlu0 %1940
    %1943 = vst.msk [vmem:[#allocation3 + $0x7] sm:$0x1] %vm1463, %v1941
    %v1944 = vld [vmem:[#allocation2 + $0x19] sm:$0x1]
    %v1947 = vunpack.c.l.s4 1983009808
    %v1948 = vunpack.c.0.s8 %v1947
    %v1949 = vlaneseq
    %v1950 = vshrl.u32 %v1949, 7
    %v1951 = vsub.s32 %v1948, %v1950
    %v1952 = vrot.slane %v1944, %v1951
    %1953 = vrot.lane.b32.xlu0 %v1952, 66
    %v1954 = vpop.permute.xlu0 %1953
    %1956 = vst.msk [vmem:[#allocation3 + $0x7] sm:$0x1] %vm1477, %v1954
    %v1957 = vld [vmem:[#allocation2 + $0x1a] sm:$0x1]
    %v1960 = vunpack.c.l.s4 1983009808
    %v1961 = vunpack.c.0.s8 %v1960
    %v1962 = vlaneseq
    %v1963 = vshrl.u32 %v1962, 7
    %v1964 = vsub.s32 %v1961, %v1963
    %v1965 = vrot.slane %v1957, %v1964
    %1966 = vrot.lane.b32.xlu0 %v1965, 116
    %v1967 = vpop.permute.xlu0 %1966
    %v1968 = vrot.slane %v1967, 6
    %v1969 = vsel %vm1491, %v1968, %v1967
    %1971 = vst.msk [vmem:[#allocation3 + $0x7] sm:$0x5] %vm1496, %v1969
    %v1972 = vld [vmem:[#allocation2 + $0x1b] sm:$0x1]
    %v1975 = vunpack.c.l.s4 1983009808
    %v1976 = vunpack.c.0.s8 %v1975
    %v1977 = vlaneseq
    %v1978 = vshrl.u32 %v1977, 7
    %v1979 = vsub.s32 %v1976, %v1978
    %v1980 = vrot.slane %v1972, %v1979
    %1981 = vrot.lane.b32.xlu0 %v1980, 38
    %v1982 = vpop.permute.xlu0 %1981
    %1984 = vst.msk [vmem:[#allocation3 + $0x9] sm:$0x1] %vm1510, %v1982
    %v1985 = vld [vmem:[#allocation2 + $0x1c] sm:$0x1]
    %v1988 = vunpack.c.l.s4 1983009808
    %v1989 = vunpack.c.0.s8 %v1988
    %v1990 = vlaneseq
    %v1991 = vshrl.u32 %v1990, 7
    %v1992 = vsub.s32 %v1989, %v1991
    %v1993 = vrot.slane %v1985, %v1992
    %1994 = vrot.lane.b32.xlu0 %v1993, 88
    %v1995 = vpop.permute.xlu0 %1994
    %v1996 = vrot.slane %v1995, 6
    %v1997 = vsel %vm1524, %v1996, %v1995
    %1999 = vst.msk [vmem:[#allocation3 + $0x9] sm:$0x5] %vm1529, %v1997
    %v2000 = vld [vmem:[#allocation2 + $0x1d] sm:$0x1]
    %v2003 = vunpack.c.l.s4 1983009808
    %v2004 = vunpack.c.0.s8 %v2003
    %v2005 = vlaneseq
    %v2006 = vshrl.u32 %v2005, 7
    %v2007 = vsub.s32 %v2004, %v2006
    %v2008 = vrot.slane %v2000, %v2007
    %2009 = vrot.lane.b32.xlu0 %v2008, 10
    %v2010 = vpop.permute.xlu0 %2009
    %2012 = vst.msk [vmem:[#allocation3 + $0xb] sm:$0x1] %vm1543, %v2010
    %v2013 = vld [vmem:[#allocation2 + $0x1e] sm:$0x1]
    %v2016 = vunpack.c.l.s4 1983009808
    %v2017 = vunpack.c.0.s8 %v2016
    %v2018 = vlaneseq
    %v2019 = vshrl.u32 %v2018, 7
    %v2020 = vsub.s32 %v2017, %v2019
    %v2021 = vrot.slane %v2013, %v2020
    %2022 = vrot.lane.b32.xlu0 %v2021, 60
    %v2023 = vpop.permute.xlu0 %2022
    %2025 = vst.msk [vmem:[#allocation3 + $0xb] sm:$0x1] %vm1557, %v2023
    %v2026 = vld [vmem:[#allocation2 + $0x1f] sm:$0x1]
    %v2029 = vunpack.c.l.s4 1983009808
    %v2030 = vunpack.c.0.s8 %v2029
    %v2031 = vlaneseq
    %v2032 = vshrl.u32 %v2031, 7
    %v2033 = vsub.s32 %v2030, %v2032
    %v2034 = vrot.slane %v2026, %v2033
    %2035 = vrot.lane.b32.xlu0 %v2034, 110
    %v2036 = vpop.permute.xlu0 %2035
    %v2037 = vrot.slane %v2036, 6
    %v2038 = vsel %vm1571, %v2037, %v2036
    %2040 = vst.msk [vmem:[#allocation3 + $0xb] sm:$0x5] %vm1576, %v2038
    %v2041 = vld [vmem:[#allocation2 + $0x28] sm:$0x1]
    %v2044 = vunpack.c.l.s4 1983009808
    %v2045 = vunpack.c.0.s8 %v2044
    %v2046 = vlaneseq
    %v2047 = vshrl.u32 %v2046, 7
    %v2048 = vsub.s32 %v2045, %v2047
    %v2049 = vrot.slane %v2041, %v2048
    %2050 = vrot.lane.b32.xlu0 %v2049, 32
    %v2051 = vpop.permute.xlu0 %2050
    %2053 = vst.msk [vmem:[#allocation3 + $0xd] sm:$0x1] %vm1590, %v2051
    %v2054 = vld [vmem:[#allocation2 + $0x29] sm:$0x1]
    %v2057 = vunpack.c.l.s4 1983009808
    %v2058 = vunpack.c.0.s8 %v2057
    %v2059 = vlaneseq
    %v2060 = vshrl.u32 %v2059, 7
    %v2061 = vsub.s32 %v2058, %v2060
    %v2062 = vrot.slane %v2054, %v2061
    %2063 = vrot.lane.b32.xlu0 %v2062, 82
    %v2064 = vpop.permute.xlu0 %2063
    %v2065 = vrot.slane %v2064, 6
    %v2066 = vsel %vm1604, %v2065, %v2064
    %2068 = vst.msk [vmem:[#allocation3 + $0xd] sm:$0x5] %vm1609, %v2066
    %v2069 = vld [vmem:[#allocation2 + $0x2a] sm:$0x1]
    %v2072 = vunpack.c.l.s4 1983009808
    %v2073 = vunpack.c.0.s8 %v2072
    %v2074 = vlaneseq
    %v2075 = vshrl.u32 %v2074, 7
    %v2076 = vsub.s32 %v2073, %v2075
    %v2077 = vrot.slane %v2069, %v2076
    %2078 = vrot.lane.b32.xlu0 %v2077, 4
    %v2079 = vpop.permute.xlu0 %2078
    %2081 = vst.msk [vmem:[#allocation3 + $0xf] sm:$0x1] %vm1623, %v2079
    %v2082 = vld [vmem:[#allocation2 + $0x2b] sm:$0x1]
    %v2085 = vunpack.c.l.s4 1983009808
    %v2086 = vunpack.c.0.s8 %v2085
    %v2087 = vlaneseq
    %v2088 = vshrl.u32 %v2087, 7
    %v2089 = vsub.s32 %v2086, %v2088
    %v2090 = vrot.slane %v2082, %v2089
    %2091 = vrot.lane.b32.xlu0 %v2090, 54
    %v2092 = vpop.permute.xlu0 %2091
    %2094 = vst.msk [vmem:[#allocation3 + $0xf] sm:$0x1] %vm1637, %v2092
    %v2095 = vld [vmem:[#allocation2 + $0x2c] sm:$0x1]
    %v2098 = vunpack.c.l.s4 1983009808
    %v2099 = vunpack.c.0.s8 %v2098
    %v2100 = vlaneseq
    %v2101 = vshrl.u32 %v2100, 7
    %v2102 = vsub.s32 %v2099, %v2101
    %v2103 = vrot.slane %v2095, %v2102
    %2104 = vrot.lane.b32.xlu0 %v2103, 104
    %v2105 = vpop.permute.xlu0 %2104
    %v2106 = vrot.slane %v2105, 6
    %v2107 = vsel %vm1651, %v2106, %v2105
    %2109 = vst.msk [vmem:[#allocation3 + $0xf] sm:$0x5] %vm1656, %v2107
    %v2110 = vld [vmem:[#allocation2 + $0x2d] sm:$0x1]
    %v2113 = vunpack.c.l.s4 1983009808
    %v2114 = vunpack.c.0.s8 %v2113
    %v2115 = vlaneseq
    %v2116 = vshrl.u32 %v2115, 7
    %v2117 = vsub.s32 %v2114, %v2116
    %v2118 = vrot.slane %v2110, %v2117
    %2119 = vrot.lane.b32.xlu0 %v2118, 26
    %v2120 = vpop.permute.xlu0 %2119
    %2122 = vst.msk [vmem:[#allocation3 + $0x11] sm:$0x1] %vm1670, %v2120
    %v2123 = vld [vmem:[#allocation2 + $0x2e] sm:$0x1]
    %v2126 = vunpack.c.l.s4 1983009808
    %v2127 = vunpack.c.0.s8 %v2126
    %v2128 = vlaneseq
    %v2129 = vshrl.u32 %v2128, 7
    %v2130 = vsub.s32 %v2127, %v2129
    %v2131 = vrot.slane %v2123, %v2130
    %2132 = vrot.lane.b32.xlu0 %v2131, 76
    %v2133 = vpop.permute.xlu0 %2132
    %2135 = vst.msk [vmem:[#allocation3 + $0x11] sm:$0x1] %vm1684, %v2133
    %v2136 = vld [vmem:[#allocation2 + $0x2f] sm:$0x1]
    %v2139 = vunpack.c.l.s4 1983009808
    %v2140 = vunpack.c.0.s8 %v2139
    %v2141 = vlaneseq
    %v2142 = vshrl.u32 %v2141, 7
    %v2143 = vsub.s32 %v2140, %v2142
    %v2144 = vrot.slane %v2136, %v2143
    %2145 = vrot.lane.b32.xlu0 %v2144, 126
    %v2146 = vpop.permute.xlu0 %2145
    %v2147 = vrot.slane %v2146, 6
    %v2148 = vsel %vm1698, %v2147, %v2146
    %2150 = vst.msk [vmem:[#allocation3 + $0x11] sm:$0x5] %vm1703, %v2148
    %v2151 = vld [vmem:[#allocation2 + $0x38] sm:$0x1]
    %v2154 = vunpack.c.l.s4 1983009808
    %v2155 = vunpack.c.0.s8 %v2154
    %v2156 = vlaneseq
    %v2157 = vshrl.u32 %v2156, 7
    %v2158 = vsub.s32 %v2155, %v2157
    %v2159 = vrot.slane %v2151, %v2158
    %2160 = vrot.lane.b32.xlu0 %v2159, 48
    %v2161 = vpop.permute.xlu0 %2160
    %2163 = vst.msk [vmem:[#allocation3 + $0x13] sm:$0x1] %vm1717, %v2161
    %v2164 = vld [vmem:[#allocation2 + $0x39] sm:$0x1]
    %v2167 = vunpack.c.l.s4 1983009808
    %v2168 = vunpack.c.0.s8 %v2167
    %v2169 = vlaneseq
    %v2170 = vshrl.u32 %v2169, 7
    %v2171 = vsub.s32 %v2168, %v2170
    %v2172 = vrot.slane %v2164, %v2171
    %2173 = vrot.lane.b32.xlu0 %v2172, 98
    %v2174 = vpop.permute.xlu0 %2173
    %v2175 = vrot.slane %v2174, 6
    %v2176 = vsel %vm1731, %v2175, %v2174
    %2178 = vst.msk [vmem:[#allocation3 + $0x13] sm:$0x5] %vm1736, %v2176
    %v2179 = vld [vmem:[#allocation2 + $0x3a] sm:$0x1]
    %v2182 = vunpack.c.l.s4 1983009808
    %v2183 = vunpack.c.0.s8 %v2182
    %v2184 = vlaneseq
    %v2185 = vshrl.u32 %v2184, 7
    %v2186 = vsub.s32 %v2183, %v2185
    %v2187 = vrot.slane %v2179, %v2186
    %2188 = vrot.lane.b32.xlu0 %v2187, 20
    %v2189 = vpop.permute.xlu0 %2188
    %2191 = vst.msk [vmem:[#allocation3 + $0x15] sm:$0x1] %vm1750, %v2189
    %v2192 = vld [vmem:[#allocation2 + $0x3b] sm:$0x1]
    %v2195 = vunpack.c.l.s4 1983009808
    %v2196 = vunpack.c.0.s8 %v2195
    %v2197 = vlaneseq
    %v2198 = vshrl.u32 %v2197, 7
    %v2199 = vsub.s32 %v2196, %v2198
    %v2200 = vrot.slane %v2192, %v2199
    %2201 = vrot.lane.b32.xlu0 %v2200, 70
    %v2202 = vpop.permute.xlu0 %2201
    %2204 = vst.msk [vmem:[#allocation3 + $0x15] sm:$0x1] %vm1764, %v2202
    %v2205 = vld [vmem:[#allocation2 + $0x3c] sm:$0x1]
    %v2208 = vunpack.c.l.s4 1983009808
    %v2209 = vunpack.c.0.s8 %v2208
    %v2210 = vlaneseq
    %v2211 = vshrl.u32 %v2210, 7
    %v2212 = vsub.s32 %v2209, %v2211
    %v2213 = vrot.slane %v2205, %v2212
    %2214 = vrot.lane.b32.xlu0 %v2213, 120
    %v2215 = vpop.permute.xlu0 %2214
    %v2216 = vrot.slane %v2215, 6
    %v2217 = vsel %vm1778, %v2216, %v2215
    %2219 = vst.msk [vmem:[#allocation3 + $0x15] sm:$0x5] %vm1783, %v2217
    %v2220 = vld [vmem:[#allocation2 + $0x3d] sm:$0x1]
    %v2223 = vunpack.c.l.s4 1983009808
    %v2224 = vunpack.c.0.s8 %v2223
    %v2225 = vlaneseq
    %v2226 = vshrl.u32 %v2225, 7
    %v2227 = vsub.s32 %v2224, %v2226
    %v2228 = vrot.slane %v2220, %v2227
    %2229 = vrot.lane.b32.xlu0 %v2228, 42
    %v2230 = vpop.permute.xlu0 %2229
    %2232 = vst.msk [vmem:[#allocation3 + $0x17] sm:$0x1] %vm1797, %v2230
    %v2233 = vld [vmem:[#allocation2 + $0x3e] sm:$0x1]
    %v2236 = vunpack.c.l.s4 1983009808
    %v2237 = vunpack.c.0.s8 %v2236
    %v2238 = vlaneseq
    %v2239 = vshrl.u32 %v2238, 7
    %v2240 = vsub.s32 %v2237, %v2239
    %v2241 = vrot.slane %v2233, %v2240
    %2242 = vrot.lane.b32.xlu0 %v2241, 92
    %v2243 = vpop.permute.xlu0 %2242
    %v2244 = vrot.slane %v2243, 6
    %v2245 = vsel %vm1811, %v2244, %v2243
    %2247 = vst.msk [vmem:[#allocation3 + $0x17] sm:$0x5] %vm1816, %v2245
    %v2248 = vld [vmem:[#allocation2 + $0x3f] sm:$0x1]
    %v2251 = vunpack.c.l.s4 1983009808
    %v2252 = vunpack.c.0.s8 %v2251
    %v2253 = vlaneseq
    %v2254 = vshrl.u32 %v2253, 7
    %v2255 = vsub.s32 %v2252, %v2254
    %v2256 = vrot.slane %v2248, %v2255
    %2257 = vrot.lane.b32.xlu0 %v2256, 14
    %v2258 = vpop.permute.xlu0 %2257
    %2260 = vst.msk [vmem:[#allocation3 + $0x19] sm:$0x1] %vm1830, %v2258
    %s2261 = smul.u32 4, 200
    %s2262 = smul.u32 %s2261, 1
    %s2263 = sshll.u32 %s2262, 4
    %2264 = dma.done [#allocation5], %s2263
    %v2265 = vld [vmem:[#allocation3] sm:$0xff]
    %v2266 = vld [vmem:[#allocation3 + $0x8] sm:$0xff]
    %v2267 = vld [vmem:[#allocation3 + $0x10] sm:$0xff]
    %v2268 = vld [vmem:[#allocation3 + $0x18] sm:$0x3]
    %v2273 = vcombine.high %v2265, %v2265
    %v2275 = vunpack.c.l.s4 1983009808
    %v2276 = vunpack.c.0.s8 %v2275
    %v2277 = vlaneseq
    %v2278 = vshrl.u32 %v2277, 7
    %v2279 = vsub.s32 %v2276, %v2278
    %v2280 = vrot.slane %v2265, %v2279
    %v2282 = vunpack.c.l.s4 1983009808
    %v2283 = vunpack.c.0.s8 %v2282
    %v2284 = vlaneseq
    %v2285 = vshrl.u32 %v2284, 7
    %v2286 = vsub.s32 %v2283, %v2285
    %v2287 = vrot.slane %v2273, %v2286
    %v2288 = vcombine.high %v2280, %v2280
    %v2289 = vcombine.high %v2287, %v2287
    %v2290 = vcombine.high %v2266, %v2266
    %v2292 = vunpack.c.l.s4 1983009808
    %v2293 = vunpack.c.0.s8 %v2292
    %v2294 = vlaneseq
    %v2295 = vshrl.u32 %v2294, 7
    %v2296 = vsub.s32 %v2293, %v2295
    %v2297 = vrot.slane %v2266, %v2296
    %v2299 = vunpack.c.l.s4 1983009808
    %v2300 = vunpack.c.0.s8 %v2299
    %v2301 = vlaneseq
    %v2302 = vshrl.u32 %v2301, 7
    %v2303 = vsub.s32 %v2300, %v2302
    %v2304 = vrot.slane %v2290, %v2303
    %v2305 = vcombine.high %v2297, %v2297
    %v2306 = vcombine.high %v2304, %v2304
    %v2307 = vcombine.high %v2267, %v2267
    %v2309 = vunpack.c.l.s4 1983009808
    %v2310 = vunpack.c.0.s8 %v2309
    %v2311 = vlaneseq
    %v2312 = vshrl.u32 %v2311, 7
    %v2313 = vsub.s32 %v2310, %v2312
    %v2314 = vrot.slane %v2267, %v2313
    %v2316 = vunpack.c.l.s4 1983009808
    %v2317 = vunpack.c.0.s8 %v2316
    %v2318 = vlaneseq
    %v2319 = vshrl.u32 %v2318, 7
    %v2320 = vsub.s32 %v2317, %v2319
    %v2321 = vrot.slane %v2307, %v2320
    %v2322 = vcombine.high %v2314, %v2314
    %v2323 = vcombine.high %v2321, %v2321
    %v2325 = vunpack.c.l.s4 1983009808
    %v2326 = vunpack.c.0.s8 %v2325
    %v2327 = vlaneseq
    %v2328 = vshrl.u32 %v2327, 7
    %v2329 = vsub.s32 %v2326, %v2328
    %v2330 = vrot.slane %v2268, %v2329
    %v2344 = vpack.c.bf16 %v2280, %v2280
    %v2345 = vpack.c.bf16 %v2288, %v2288
    %v2346 = vpack.c.bf16 %v2287, %v2287
    %v2347 = vpack.c.bf16 %v2289, %v2289
    %v2348 = vpack.c.bf16 %v2297, %v2297
    %v2349 = vpack.c.bf16 %v2305, %v2305
    %v2350 = vpack.c.bf16 %v2304, %v2304
    %v2351 = vpack.c.bf16 %v2306, %v2306
    %v2352 = vpack.c.bf16 %v2314, %v2314
    %v2353 = vpack.c.bf16 %v2322, %v2322
    %v2354 = vpack.c.bf16 %v2321, %v2321
    %v2355 = vpack.c.bf16 %v2323, %v2323
    %v2356 = vpack.c.bf16 %v2330, %v2330
    %v2357 = vld [vmem:[#allocation4] sm:$0xff]
    %v2358 = vld [vmem:[#allocation4 + $0x8] sm:$0xff]
    %v2359 = vld [vmem:[#allocation4 + $0x10] sm:$0xff]
    %v2360 = vld [vmem:[#allocation4 + $0x18] sm:$0xff]
    %v2361 = vld [vmem:[#allocation4 + $0x20] sm:$0xff]
    %v2362 = vld [vmem:[#allocation4 + $0x28] sm:$0xff]
    %v2363 = vld [vmem:[#allocation4 + $0x30] sm:$0xff]
    %v2364 = vld [vmem:[#allocation4 + $0x38] sm:$0xff]
    %v2365 = vld [vmem:[#allocation4 + $0x40] sm:$0xff]
    %v2366 = vld [vmem:[#allocation4 + $0x48] sm:$0xff]
    %v2367 = vld [vmem:[#allocation4 + $0x50] sm:$0xff]
    %v2368 = vld [vmem:[#allocation4 + $0x58] sm:$0xff]
    %v2369 = vld [vmem:[#allocation4 + $0x60] sm:$0xff]
    %v2370 = vld [vmem:[#allocation4 + $0x68] sm:$0xff]
    %v2371 = vld [vmem:[#allocation4 + $0x70] sm:$0xff]
    %v2372 = vld [vmem:[#allocation4 + $0x78] sm:$0xff]
    %v2373 = vld [vmem:[#allocation4 + $0x80] sm:$0xff]
    %v2374 = vld [vmem:[#allocation4 + $0x88] sm:$0xff]
    %v2375 = vld [vmem:[#allocation4 + $0x90] sm:$0xff]
    %v2376 = vld [vmem:[#allocation4 + $0x98] sm:$0xff]
    %v2377 = vld [vmem:[#allocation4 + $0xa0] sm:$0xff]
    %v2378 = vld [vmem:[#allocation4 + $0xa8] sm:$0xff]
    %v2379 = vld [vmem:[#allocation4 + $0xb0] sm:$0xff]
    %v2380 = vld [vmem:[#allocation4 + $0xb8] sm:$0xff]
    %v2381 = vld [vmem:[#allocation4 + $0xc0] sm:$0xff]
    %v2382 = vld [vmem:[#allocation4 + $0xc8] sm:$0xff]
    %v2383 = vld [vmem:[#allocation4 + $0xd0] sm:$0xff]
    %v2384 = vld [vmem:[#allocation4 + $0xd8] sm:$0xff]
    %v2385 = vld [vmem:[#allocation4 + $0xe0] sm:$0xff]
    %v2386 = vld [vmem:[#allocation4 + $0xe8] sm:$0xff]
    %v2387 = vld [vmem:[#allocation4 + $0xf0] sm:$0xff]
    %v2388 = vld [vmem:[#allocation4 + $0xf8] sm:$0xff]
    %v2389 = vld [vmem:[#allocation4 + $0x100] sm:$0xff]
    %v2390 = vld [vmem:[#allocation4 + $0x108] sm:$0xff]
    %v2391 = vld [vmem:[#allocation4 + $0x110] sm:$0xff]
    %v2392 = vld [vmem:[#allocation4 + $0x118] sm:$0xff]
    %v2393 = vld [vmem:[#allocation4 + $0x120] sm:$0xff]
    %v2394 = vld [vmem:[#allocation4 + $0x128] sm:$0xff]
    %v2395 = vld [vmem:[#allocation4 + $0x130] sm:$0xff]
    %v2396 = vld [vmem:[#allocation4 + $0x138] sm:$0xff]
    %v2397 = vld [vmem:[#allocation4 + $0x140] sm:$0xff]
    %v2398 = vld [vmem:[#allocation4 + $0x148] sm:$0xff]
    %v2399 = vld [vmem:[#allocation4 + $0x150] sm:$0xff]
    %v2400 = vld [vmem:[#allocation4 + $0x158] sm:$0xff]
    %v2401 = vld [vmem:[#allocation4 + $0x160] sm:$0xff]
    %v2402 = vld [vmem:[#allocation4 + $0x168] sm:$0xff]
    %v2403 = vld [vmem:[#allocation4 + $0x170] sm:$0xff]
    %v2404 = vld [vmem:[#allocation4 + $0x178] sm:$0xff]
    %v2405 = vld [vmem:[#allocation4 + $0x180] sm:$0xff]
    %v2406 = vld [vmem:[#allocation4 + $0x188] sm:$0xff]
    %v2407 = vld [vmem:[#allocation4 + $0x190] sm:$0xff]
    %v2408 = vld [vmem:[#allocation4 + $0x198] sm:$0xff]
    %v2409 = vld [vmem:[#allocation4 + $0x1a0] sm:$0xff]
    %v2410 = vld [vmem:[#allocation4 + $0x1a8] sm:$0xff]
    %v2411 = vld [vmem:[#allocation4 + $0x1b0] sm:$0xff]
    %v2412 = vld [vmem:[#allocation4 + $0x1b8] sm:$0xff]
    %v2413 = vld [vmem:[#allocation4 + $0x1c0] sm:$0xff]
    %v2414 = vld [vmem:[#allocation4 + $0x1c8] sm:$0xff]
    %v2415 = vld [vmem:[#allocation4 + $0x1d0] sm:$0xff]
    %v2416 = vld [vmem:[#allocation4 + $0x1d8] sm:$0xff]
    %v2417 = vld [vmem:[#allocation4 + $0x1e0] sm:$0xff]
    %v2418 = vld [vmem:[#allocation4 + $0x1e8] sm:$0xff]
    %v2419 = vld [vmem:[#allocation4 + $0x1f0] sm:$0xff]
    %v2420 = vld [vmem:[#allocation4 + $0x1f8] sm:$0xff]
    %v2421 = vld [vmem:[#allocation4 + $0x200] sm:$0xff]
    %v2422 = vld [vmem:[#allocation4 + $0x208] sm:$0xff]
    %v2423 = vld [vmem:[#allocation4 + $0x210] sm:$0xff]
    %v2424 = vld [vmem:[#allocation4 + $0x218] sm:$0xff]
    %v2425 = vld [vmem:[#allocation4 + $0x220] sm:$0xff]
    %v2426 = vld [vmem:[#allocation4 + $0x228] sm:$0xff]
    %v2427 = vld [vmem:[#allocation4 + $0x230] sm:$0xff]
    %v2428 = vld [vmem:[#allocation4 + $0x238] sm:$0xff]
    %v2429 = vld [vmem:[#allocation4 + $0x240] sm:$0xff]
    %v2430 = vld [vmem:[#allocation4 + $0x248] sm:$0xff]
    %v2431 = vld [vmem:[#allocation4 + $0x250] sm:$0xff]
    %v2432 = vld [vmem:[#allocation4 + $0x258] sm:$0xff]
    %v2433 = vld [vmem:[#allocation4 + $0x260] sm:$0xff]
    %v2434 = vld [vmem:[#allocation4 + $0x268] sm:$0xff]
    %v2435 = vld [vmem:[#allocation4 + $0x270] sm:$0xff]
    %v2436 = vld [vmem:[#allocation4 + $0x278] sm:$0xff]
    %v2437 = vld [vmem:[#allocation4 + $0x280] sm:$0xff]
    %v2438 = vld [vmem:[#allocation4 + $0x288] sm:$0xff]
    %v2439 = vld [vmem:[#allocation4 + $0x290] sm:$0xff]
    %v2440 = vld [vmem:[#allocation4 + $0x298] sm:$0xff]
    %v2441 = vld [vmem:[#allocation4 + $0x2a0] sm:$0xff]
    %v2442 = vld [vmem:[#allocation4 + $0x2a8] sm:$0xff]
    %v2443 = vld [vmem:[#allocation4 + $0x2b0] sm:$0xff]
    %v2444 = vld [vmem:[#allocation4 + $0x2b8] sm:$0xff]
    %v2445 = vld [vmem:[#allocation4 + $0x2c0] sm:$0xff]
    %v2446 = vld [vmem:[#allocation4 + $0x2c8] sm:$0xff]
    %v2447 = vld [vmem:[#allocation4 + $0x2d0] sm:$0xff]
    %v2448 = vld [vmem:[#allocation4 + $0x2d8] sm:$0xff]
    %v2449 = vld [vmem:[#allocation4 + $0x2e0] sm:$0xff]
    %v2450 = vld [vmem:[#allocation4 + $0x2e8] sm:$0xff]
    %v2451 = vld [vmem:[#allocation4 + $0x2f0] sm:$0xff]
    %v2452 = vld [vmem:[#allocation4 + $0x2f8] sm:$0xff]
    %v2453 = vld [vmem:[#allocation4 + $0x300] sm:$0xff]
    %v2454 = vld [vmem:[#allocation4 + $0x308] sm:$0xff]
    %v2455 = vld [vmem:[#allocation4 + $0x310] sm:$0xff]
    %v2456 = vld [vmem:[#allocation4 + $0x318] sm:$0xff]
    %v2457 = vld [vmem:[%s17] sm:$0x1]
    %v2459 = vlaneseq
    %v2460 = vshrl.u32 %v2459, 7
    %v2461 = vsub.s32 0, %v2460
    %v2462 = vrot.slane %v2457, %v2461
    %vm2464 = vcmask 523264
    %v2466 = vsel %vm2464, %v2356, 0
    %2468 = vmatprep.subr.bf16.mxu0 0
    %2469 = vmatpush1.bf16.msra.mxu0 %v2357
    %2470 = vmatprep.subr.bf16.mxu0 0
    %2471 = vmatpush1.bf16.msra.mxu0 %v2358
    %2472 = vmatprep.subr.bf16.mxu0 0
    %2473 = vmatpush1.bf16.msra.mxu0 %v2359
    %2474 = vmatprep.subr.bf16.mxu0 0
    %2475 = vmatpush1.bf16.msra.mxu0 %v2360
    %2476 = vmatprep.subr.bf16.mxu0 0
    %2477 = vmatpush1.bf16.msra.mxu0 %v2361
    %2478 = vmatprep.subr.bf16.mxu0 0
    %2479 = vmatpush1.bf16.msra.mxu0 %v2362
    %2480 = vmatprep.subr.bf16.mxu0 0
    %2481 = vmatpush1.bf16.msra.mxu0 %v2363
    %2482 = vmatprep.subr.bf16.mxu0 0
    %2483 = vmatpush1.bf16.msra.mxu0 %v2364
    %2484 = vmatprep.subr.bf16.mxu0 0
    %2485 = vmatpush1.bf16.msra.mxu0 %v2365
    %2486 = vmatprep.subr.bf16.mxu0 0
    %2487 = vmatpush1.bf16.msra.mxu0 %v2366
    %2488 = vmatprep.subr.bf16.mxu0 0
    %2489 = vmatpush1.bf16.msra.mxu0 %v2367
    %2490 = vmatprep.subr.bf16.mxu0 0
    %2491 = vmatpush1.bf16.msra.mxu0 %v2368
    %2492 = vmatprep.subr.bf16.mxu0 0
    %2493 = vmatpush1.bf16.msra.mxu0 %v2369
    %2494 = vmatprep.subr.bf16.mxu0 0
    %2495 = vmatpush1.bf16.msra.mxu0 %v2370
    %2496 = vmatprep.subr.bf16.mxu0 0
    %2497 = vmatpush1.bf16.msra.mxu0 %v2371
    %2498 = vmatprep.subr.bf16.mxu0 0
    %2499 = vmatpush1.bf16.msra.mxu0 %v2372
    %2500 = vmatprep.mubr.bf16.mxu0 %v2345
    %2501 = vmatmul.mubr.bf16.gmra.mrb[0].mxu0 %v2344
    %v2502 = vpop.f32.mrb[0].mxu0
    %v2503 = vadd.f32 %v2462, %v2502
    %v2504 = vpop.f32.mrb[0].mxu0
    %v2505 = vpop.f32.mrb[0].mxu0
    %v2506 = vpop.f32.mrb[0].mxu0
    %2507 = vdwg.mxu0
    %2508 = vmatprep.subr.bf16.mxu0 0
    %2509 = vmatpush1.bf16.msra.mxu0 %v2373
    %2510 = vmatprep.subr.bf16.mxu0 0
    %2511 = vmatpush1.bf16.msra.mxu0 %v2374
    %2512 = vmatprep.subr.bf16.mxu0 0
    %2513 = vmatpush1.bf16.msra.mxu0 %v2375
    %2514 = vmatprep.subr.bf16.mxu0 0
    %2515 = vmatpush1.bf16.msra.mxu0 %v2376
    %2516 = vmatprep.subr.bf16.mxu0 0
    %2517 = vmatpush1.bf16.msra.mxu0 %v2377
    %2518 = vmatprep.subr.bf16.mxu0 0
    %2519 = vmatpush1.bf16.msra.mxu0 %v2378
    %2520 = vmatprep.subr.bf16.mxu0 0
    %2521 = vmatpush1.bf16.msra.mxu0 %v2379
    %2522 = vmatprep.subr.bf16.mxu0 0
    %2523 = vmatpush1.bf16.msra.mxu0 %v2380
    %2524 = vmatprep.subr.bf16.mxu0 0
    %2525 = vmatpush1.bf16.msra.mxu0 %v2381
    %2526 = vmatprep.subr.bf16.mxu0 0
    %2527 = vmatpush1.bf16.msra.mxu0 %v2382
    %2528 = vmatprep.subr.bf16.mxu0 0
    %2529 = vmatpush1.bf16.msra.mxu0 %v2383
    %2530 = vmatprep.subr.bf16.mxu0 0
    %2531 = vmatpush1.bf16.msra.mxu0 %v2384
    %2532 = vmatprep.subr.bf16.mxu0 0
    %2533 = vmatpush1.bf16.msra.mxu0 %v2385
    %2534 = vmatprep.subr.bf16.mxu0 0
    %2535 = vmatpush1.bf16.msra.mxu0 %v2386
    %2536 = vmatprep.subr.bf16.mxu0 0
    %2537 = vmatpush1.bf16.msra.mxu0 %v2387
    %2538 = vmatprep.subr.bf16.mxu0 0
    %2539 = vmatpush1.bf16.msra.mxu0 %v2388
    %2540 = vmatprep.mubr.bf16.mxu0 %v2347
    %2541 = vmatmul.mubr.bf16.gmra.mrb[0].mxu0 %v2346
    %v2542 = vpop.f32.mrb[0].mxu0
    %v2543 = vadd.f32 %v2503, %v2542
    %v2544 = vpop.f32.mrb[0].mxu0
    %v2545 = vpop.f32.mrb[0].mxu0
    %v2546 = vpop.f32.mrb[0].mxu0
    %2547 = vdwg.mxu0
    %2548 = vmatprep.subr.bf16.mxu0 0
    %2549 = vmatpush1.bf16.msra.mxu0 %v2389
    %2550 = vmatprep.subr.bf16.mxu0 0
    %2551 = vmatpush1.bf16.msra.mxu0 %v2390
    %2552 = vmatprep.subr.bf16.mxu0 0
    %2553 = vmatpush1.bf16.msra.mxu0 %v2391
    %2554 = vmatprep.subr.bf16.mxu0 0
    %2555 = vmatpush1.bf16.msra.mxu0 %v2392
    %2556 = vmatprep.subr.bf16.mxu0 0
    %2557 = vmatpush1.bf16.msra.mxu0 %v2393
    %2558 = vmatprep.subr.bf16.mxu0 0
    %2559 = vmatpush1.bf16.msra.mxu0 %v2394
    %2560 = vmatprep.subr.bf16.mxu0 0
    %2561 = vmatpush1.bf16.msra.mxu0 %v2395
    %2562 = vmatprep.subr.bf16.mxu0 0
    %2563 = vmatpush1.bf16.msra.mxu0 %v2396
    %2564 = vmatprep.subr.bf16.mxu0 0
    %2565 = vmatpush1.bf16.msra.mxu0 %v2397
    %2566 = vmatprep.subr.bf16.mxu0 0
    %2567 = vmatpush1.bf16.msra.mxu0 %v2398
    %2568 = vmatprep.subr.bf16.mxu0 0
    %2569 = vmatpush1.bf16.msra.mxu0 %v2399
    %2570 = vmatprep.subr.bf16.mxu0 0
    %2571 = vmatpush1.bf16.msra.mxu0 %v2400
    %2572 = vmatprep.subr.bf16.mxu0 0
    %2573 = vmatpush1.bf16.msra.mxu0 %v2401
    %2574 = vmatprep.subr.bf16.mxu0 0
    %2575 = vmatpush1.bf16.msra.mxu0 %v2402
    %2576 = vmatprep.subr.bf16.mxu0 0
    %2577 = vmatpush1.bf16.msra.mxu0 %v2403
    %2578 = vmatprep.subr.bf16.mxu0 0
    %2579 = vmatpush1.bf16.msra.mxu0 %v2404
    %2580 = vmatprep.mubr.bf16.mxu0 %v2349
    %2581 = vmatmul.mubr.bf16.gmra.mrb[0].mxu0 %v2348
    %v2582 = vpop.f32.mrb[0].mxu0
    %v2583 = vadd.f32 %v2543, %v2582
    %v2584 = vpop.f32.mrb[0].mxu0
    %v2585 = vpop.f32.mrb[0].mxu0
    %v2586 = vpop.f32.mrb[0].mxu0
    %2587 = vdwg.mxu0
    %2588 = vmatprep.subr.bf16.mxu0 0
    %2589 = vmatpush1.bf16.msra.mxu0 %v2405
    %2590 = vmatprep.subr.bf16.mxu0 0
    %2591 = vmatpush1.bf16.msra.mxu0 %v2406
    %2592 = vmatprep.subr.bf16.mxu0 0
    %2593 = vmatpush1.bf16.msra.mxu0 %v2407
    %2594 = vmatprep.subr.bf16.mxu0 0
    %2595 = vmatpush1.bf16.msra.mxu0 %v2408
    %2596 = vmatprep.subr.bf16.mxu0 0
    %2597 = vmatpush1.bf16.msra.mxu0 %v2409
    %2598 = vmatprep.subr.bf16.mxu0 0
    %2599 = vmatpush1.bf16.msra.mxu0 %v2410
    %2600 = vmatprep.subr.bf16.mxu0 0
    %2601 = vmatpush1.bf16.msra.mxu0 %v2411
    %2602 = vmatprep.subr.bf16.mxu0 0
    %2603 = vmatpush1.bf16.msra.mxu0 %v2412
    %2604 = vmatprep.subr.bf16.mxu0 0
    %2605 = vmatpush1.bf16.msra.mxu0 %v2413
    %2606 = vmatprep.subr.bf16.mxu0 0
    %2607 = vmatpush1.bf16.msra.mxu0 %v2414
    %2608 = vmatprep.subr.bf16.mxu0 0
    %2609 = vmatpush1.bf16.msra.mxu0 %v2415
    %2610 = vmatprep.subr.bf16.mxu0 0
    %2611 = vmatpush1.bf16.msra.mxu0 %v2416
    %2612 = vmatprep.subr.bf16.mxu0 0
    %2613 = vmatpush1.bf16.msra.mxu0 %v2417
    %2614 = vmatprep.subr.bf16.mxu0 0
    %2615 = vmatpush1.bf16.msra.mxu0 %v2418
    %2616 = vmatprep.subr.bf16.mxu0 0
    %2617 = vmatpush1.bf16.msra.mxu0 %v2419
    %2618 = vmatprep.subr.bf16.mxu0 0
    %2619 = vmatpush1.bf16.msra.mxu0 %v2420
    %2620 = vmatprep.mubr.bf16.mxu0 %v2351
    %2621 = vmatmul.mubr.bf16.gmra.mrb[0].mxu0 %v2350
    %v2622 = vpop.f32.mrb[0].mxu0
    %v2623 = vadd.f32 %v2583, %v2622
    %v2624 = vpop.f32.mrb[0].mxu0
    %v2625 = vpop.f32.mrb[0].mxu0
    %v2626 = vpop.f32.mrb[0].mxu0
    %2627 = vdwg.mxu0
    %2628 = vmatprep.subr.bf16.mxu0 0
    %2629 = vmatpush1.bf16.msra.mxu0 %v2421
    %2630 = vmatprep.subr.bf16.mxu0 0
    %2631 = vmatpush1.bf16.msra.mxu0 %v2422
    %2632 = vmatprep.subr.bf16.mxu0 0
    %2633 = vmatpush1.bf16.msra.mxu0 %v2423
    %2634 = vmatprep.subr.bf16.mxu0 0
    %2635 = vmatpush1.bf16.msra.mxu0 %v2424
    %2636 = vmatprep.subr.bf16.mxu0 0
    %2637 = vmatpush1.bf16.msra.mxu0 %v2425
    %2638 = vmatprep.subr.bf16.mxu0 0
    %2639 = vmatpush1.bf16.msra.mxu0 %v2426
    %2640 = vmatprep.subr.bf16.mxu0 0
    %2641 = vmatpush1.bf16.msra.mxu0 %v2427
    %2642 = vmatprep.subr.bf16.mxu0 0
    %2643 = vmatpush1.bf16.msra.mxu0 %v2428
    %2644 = vmatprep.subr.bf16.mxu0 0
    %2645 = vmatpush1.bf16.msra.mxu0 %v2429
    %2646 = vmatprep.subr.bf16.mxu0 0
    %2647 = vmatpush1.bf16.msra.mxu0 %v2430
    %2648 = vmatprep.subr.bf16.mxu0 0
    %2649 = vmatpush1.bf16.msra.mxu0 %v2431
    %2650 = vmatprep.subr.bf16.mxu0 0
    %2651 = vmatpush1.bf16.msra.mxu0 %v2432
    %2652 = vmatprep.subr.bf16.mxu0 0
    %2653 = vmatpush1.bf16.msra.mxu0 %v2433
    %2654 = vmatprep.subr.bf16.mxu0 0
    %2655 = vmatpush1.bf16.msra.mxu0 %v2434
    %2656 = vmatprep.subr.bf16.mxu0 0
    %2657 = vmatpush1.bf16.msra.mxu0 %v2435
    %2658 = vmatprep.subr.bf16.mxu0 0
    %2659 = vmatpush1.bf16.msra.mxu0 %v2436
    %2660 = vmatprep.mubr.bf16.mxu0 %v2353
    %2661 = vmatmul.mubr.bf16.gmra.mrb[0].mxu0 %v2352
    %v2662 = vpop.f32.mrb[0].mxu0
    %v2663 = vadd.f32 %v2623, %v2662
    %v2664 = vpop.f32.mrb[0].mxu0
    %v2665 = vpop.f32.mrb[0].mxu0
    %v2666 = vpop.f32.mrb[0].mxu0
    %2667 = vdwg.mxu0
    %2668 = vmatprep.subr.bf16.mxu0 0
    %2669 = vmatpush1.bf16.msra.mxu0 %v2437
    %2670 = vmatprep.subr.bf16.mxu0 0
    %2671 = vmatpush1.bf16.msra.mxu0 %v2438
    %2672 = vmatprep.subr.bf16.mxu0 0
    %2673 = vmatpush1.bf16.msra.mxu0 %v2439
    %2674 = vmatprep.subr.bf16.mxu0 0
    %2675 = vmatpush1.bf16.msra.mxu0 %v2440
    %2676 = vmatprep.subr.bf16.mxu0 0
    %2677 = vmatpush1.bf16.msra.mxu0 %v2441
    %2678 = vmatprep.subr.bf16.mxu0 0
    %2679 = vmatpush1.bf16.msra.mxu0 %v2442
    %2680 = vmatprep.subr.bf16.mxu0 0
    %2681 = vmatpush1.bf16.msra.mxu0 %v2443
    %2682 = vmatprep.subr.bf16.mxu0 0
    %2683 = vmatpush1.bf16.msra.mxu0 %v2444
    %2684 = vmatprep.subr.bf16.mxu0 0
    %2685 = vmatpush1.bf16.msra.mxu0 %v2445
    %2686 = vmatprep.subr.bf16.mxu0 0
    %2687 = vmatpush1.bf16.msra.mxu0 %v2446
    %2688 = vmatprep.subr.bf16.mxu0 0
    %2689 = vmatpush1.bf16.msra.mxu0 %v2447
    %2690 = vmatprep.subr.bf16.mxu0 0
    %2691 = vmatpush1.bf16.msra.mxu0 %v2448
    %2692 = vmatprep.subr.bf16.mxu0 0
    %2693 = vmatpush1.bf16.msra.mxu0 %v2449
    %2694 = vmatprep.subr.bf16.mxu0 0
    %2695 = vmatpush1.bf16.msra.mxu0 %v2450
    %2696 = vmatprep.subr.bf16.mxu0 0
    %2697 = vmatpush1.bf16.msra.mxu0 %v2451
    %2698 = vmatprep.subr.bf16.mxu0 0
    %2699 = vmatpush1.bf16.msra.mxu0 %v2452
    %2700 = vmatprep.mubr.bf16.mxu0 %v2355
    %2701 = vmatmul.mubr.bf16.gmra.mrb[0].mxu0 %v2354
    %v2702 = vpop.f32.mrb[0].mxu0
    %v2703 = vadd.f32 %v2663, %v2702
    %v2704 = vpop.f32.mrb[0].mxu0
    %v2705 = vpop.f32.mrb[0].mxu0
    %v2706 = vpop.f32.mrb[0].mxu0
    %2707 = vdwg.mxu0
    %2708 = vmatprep.subr.bf16.mxu0 0
    %2709 = vmatpush1.bf16.msra.mxu0 %v2453
    %2710 = vmatprep.subr.bf16.mxu0 0
    %2711 = vmatpush1.bf16.msra.mxu0 %v2454
    %2712 = vmatprep.subr.bf16.mxu0 0
    %2713 = vmatpush1.bf16.msra.mxu0 %v2455
    %2714 = vmatprep.subr.bf16.mxu0 0
    %2715 = vmatpush1.bf16.msra.mxu0 %v2456
    %2716 = vmatprep.subr.bf16.mxu0 0
    %2717 = vmatpush1.bf16.msra.mxu0 0
    %2718 = vmatprep.subr.bf16.mxu0 0
    %2719 = vmatpush1.bf16.msra.mxu0 0
    %2720 = vmatprep.subr.bf16.mxu0 0
    %2721 = vmatpush1.bf16.msra.mxu0 0
    %2722 = vmatprep.subr.bf16.mxu0 0
    %2723 = vmatpush1.bf16.msra.mxu0 0
    %2724 = vmatprep.subr.bf16.mxu0 0
    %2725 = vmatpush1.bf16.msra.mxu0 0
    %2726 = vmatprep.subr.bf16.mxu0 0
    %2727 = vmatpush1.bf16.msra.mxu0 0
    %2728 = vmatprep.subr.bf16.mxu0 0
    %2729 = vmatpush1.bf16.msra.mxu0 0
    %2730 = vmatprep.subr.bf16.mxu0 0
    %2731 = vmatpush1.bf16.msra.mxu0 0
    %2732 = vmatprep.subr.bf16.mxu0 0
    %2733 = vmatpush1.bf16.msra.mxu0 0
    %2734 = vmatprep.subr.bf16.mxu0 0
    %2735 = vmatpush1.bf16.msra.mxu0 0
    %2736 = vmatprep.subr.bf16.mxu0 0
    %2737 = vmatpush1.bf16.msra.mxu0 0
    %2738 = vmatprep.subr.bf16.mxu0 0
    %2739 = vmatpush1.bf16.msra.mxu0 0
    %2740 = vmatprep.mubr.bf16.mxu0 0
    %2741 = vmatmul.mubr.bf16.gmra.mrb[0].mxu0 %v2466
    %v2742 = vpop.f32.mrb[0].mxu0
    %v2743 = vadd.f32 %v2703, %v2742
    %v2744 = vpop.f32.mrb[0].mxu0
    %v2745 = vpop.f32.mrb[0].mxu0
    %v2746 = vpop.f32.mrb[0].mxu0
    %2747 = vdwg.mxu0
    %v2748 = vld [vmem:[%s18] sm:$0x1]
    %v2750 = vlaneseq
    %v2751 = vshrl.u32 %v2750, 7
    %v2752 = vsub.s32 0, %v2751
    %v2753 = vrot.slane %v2748, %v2752
    %v2755 = vmul.f32 %v2743, %v2753
    %v2756 = vld [vmem:[%s19] sm:$0x1]
    %v2758 = vlaneseq
    %v2759 = vshrl.u32 %v2758, 7
    %v2760 = vsub.s32 0, %v2759
    %v2761 = vrot.slane %v2756, %v2760
    %v2763 = vadd.f32 %v2755, %v2761
    %v2764 = vmax.f32 %v2763, 0.0
    %v2765 = vpack.c.bf16 %v2764, %v2764
    %v2766 = vld [vmem:[%s20] sm:$0xf]
    %v2767 = vld [vmem:[%s20 + $0x4] sm:$0xf]
    %v2768 = vld [vmem:[%s20 + $0x8] sm:$0xf]
    %v2769 = vld [vmem:[%s20 + $0xc] sm:$0xf]
    %v2770 = vld [vmem:[%s20 + $0x10] sm:$0xf]
    %v2771 = vld [vmem:[%s20 + $0x14] sm:$0xf]
    %v2772 = vld [vmem:[%s20 + $0x18] sm:$0xf]
    %v2773 = vld [vmem:[%s20 + $0x1c] sm:$0xf]
    %v2774 = vld [vmem:[%s20 + $0x20] sm:$0xf]
    %v2775 = vld [vmem:[%s20 + $0x24] sm:$0xf]
    %v2776 = vld [vmem:[%s20 + $0x28] sm:$0xf]
    %v2777 = vld [vmem:[%s20 + $0x2c] sm:$0xf]
    %v2778 = vld [vmem:[%s20 + $0x30] sm:$0xf]
    %v2779 = vld [vmem:[%s20 + $0x34] sm:$0xf]
    %v2780 = vld [vmem:[%s20 + $0x38] sm:$0xf]
    %v2781 = vld [vmem:[%s20 + $0x3c] sm:$0xf]
    %v2782 = vld [vmem:[%s21] sm:$0x1]
    %v2784 = vlaneseq
    %v2785 = vshrl.u32 %v2784, 7
    %v2786 = vsub.s32 0, %v2785
    %v2787 = vrot.slane %v2782, %v2786
    %v2805 = vunpack.c.l.b16 %v2766
    %v2806 = vunpack.c.l.b16 %v2767
    %v2807 = vunpack.c.l.b16 %v2768
    %v2808 = vunpack.c.l.b16 %v2769
    %v2809 = vunpack.c.l.b16 %v2770
    %v2810 = vunpack.c.l.b16 %v2771
    %v2811 = vunpack.c.l.b16 %v2772
    %v2812 = vunpack.c.l.b16 %v2773
    %v2813 = vunpack.c.l.b16 %v2774
    %v2814 = vunpack.c.l.b16 %v2775
    %v2815 = vunpack.c.l.b16 %v2776
    %v2816 = vunpack.c.l.b16 %v2777
    %v2817 = vunpack.c.l.b16 %v2778
    %v2818 = vunpack.c.l.b16 %v2779
    %v2819 = vunpack.c.l.b16 %v2780
    %v2820 = vunpack.c.l.b16 %v2781
    %v2821 = vpack.c.b16 %v2806, %v2805
    %v2822 = vpack.c.b16 %v2808, %v2807
    %v2823 = vpack.c.b16 %v2810, %v2809
    %v2824 = vpack.c.b16 %v2812, %v2811
    %v2825 = vpack.c.b16 %v2814, %v2813
    %v2826 = vpack.c.b16 %v2816, %v2815
    %v2827 = vpack.c.b16 %v2818, %v2817
    %v2828 = vpack.c.b16 %v2820, %v2819
    %2837 = vmatprep.subr.bf16.mxu0 0
    %2838 = vmatpush1.bf16.msra.mxu0 %v2821
    %2839 = vmatprep.subr.bf16.mxu0 0
    %2840 = vmatpush1.bf16.msra.mxu0 %v2822
    %2841 = vmatprep.subr.bf16.mxu0 0
    %2842 = vmatpush1.bf16.msra.mxu0 %v2823
    %2843 = vmatprep.subr.bf16.mxu0 0
    %2844 = vmatpush1.bf16.msra.mxu0 %v2824
    %2845 = vmatprep.subr.bf16.mxu0 0
    %2846 = vmatpush1.bf16.msra.mxu0 %v2825
    %2847 = vmatprep.subr.bf16.mxu0 0
    %2848 = vmatpush1.bf16.msra.mxu0 %v2826
    %2849 = vmatprep.subr.bf16.mxu0 0
    %2850 = vmatpush1.bf16.msra.mxu0 %v2827
    %2851 = vmatprep.subr.bf16.mxu0 0
    %2852 = vmatpush1.bf16.msra.mxu0 %v2828
    %2853 = vmatprep.subr.bf16.mxu0 0
    %2854 = vmatpush1.bf16.msra.mxu0 0
    %2855 = vmatprep.subr.bf16.mxu0 0
    %2856 = vmatpush1.bf16.msra.mxu0 0
    %2857 = vmatprep.subr.bf16.mxu0 0
    %2858 = vmatpush1.bf16.msra.mxu0 0
    %2859 = vmatprep.subr.bf16.mxu0 0
    %2860 = vmatpush1.bf16.msra.mxu0 0
    %2861 = vmatprep.subr.bf16.mxu0 0
    %2862 = vmatpush1.bf16.msra.mxu0 0
    %2863 = vmatprep.subr.bf16.mxu0 0
    %2864 = vmatpush1.bf16.msra.mxu0 0
    %2865 = vmatprep.subr.bf16.mxu0 0
    %2866 = vmatpush1.bf16.msra.mxu0 0
    %2867 = vmatprep.subr.bf16.mxu0 0
    %2868 = vmatpush1.bf16.msra.mxu0 0
    %2869 = vmatprep.mubr.bf16.mxu0 0
    %2870 = vmatmul.mubr.bf16.gmra.mrb[0].mxu0 %v2765
    %v2871 = vpop.f32.mrb[0].mxu0
    %v2872 = vadd.f32 %v2787, %v2871
    %v2873 = vpop.f32.mrb[0].mxu0
    %v2874 = vpop.f32.mrb[0].mxu0
    %v2875 = vpop.f32.mrb[0].mxu0
    %2876 = vdwg.mxu0
    %vm2877 = vcmask 25600
    %v2878 = vsel %vm2877, %v2872, -inf
    %2879 = vmax.xlane.f32.xlu0 %v2878
    %v2880 = vpop.xlane.xlu0 %2879
    %v2881 = vsub.f32 %v2872, %v2880
    %v2882 = vmul.f32 %v2881, 1.442695
    %v2883 = vpow.pop %v2882
    %v2884 = vsel %vm2877, %v2883, 0.0
    %2885 = vadd.xlane.f32.xlu0 %v2884
    %v2886 = vpop.xlane.xlu0 %2885
    %v2887 = vrcp.pop %v2886
    %v2888 = vmul.f32 %v2883, %v2887
    %2889 = vst.msk [vmem:[#allocation15] sm:$0x3] %vm2877, %v2888
    // Predicated region
    $region110: #{deepspectra_forward.1} parent=1 // pred_check
      _
    $region111: #{deepspectra_forward.1} parent=1 // pred_check_branch
      %2891 = sbr.rel (0) target = $region113
    $region112: #{deepspectra_forward.1} parent=1 // pred_region
      %s2893 = ssub.s32 32, 32
      %2894 = vsyncadd [#allocation8], %s2893
      %s2896 = sshll.u32 [#allocation15], 4
      %s2897 = int_to_ptr.vmem [resolvable:$true] %s2896
      %2899 = dma.vmem_to_hbm [thread:$0]  %s2897, 32, %s22, [#allocation8]
    $region113: #{deepspectra_forward.1} parent=1 // pred_fallthru
      _
    // Predicated region
    $region114: #{deepspectra_forward.1} parent=1 // pred_check
      _
    $region115: #{deepspectra_forward.1} parent=1 // pred_check_branch
      %2901 = sbr.rel (0) target = $region117
    $region116: #{deepspectra_forward.1} parent=1 // pred_region
      %2902 = dma.done [#allocation8], 32
    $region117: #{deepspectra_forward.1} parent=1 // pred_fallthru
      _
    %2903 = vsyncpa [#allocation7], 1
    %2904 = vsyncpa [#allocation10], 1
    %2905 = vsyncpa [#allocation13], 1
    %2906 = vsyncpa [#allocation8], 1
  %2907 = vsyncmov [#allocation5]
  %s2908 = vpop.sfrf %2907
  %p2909 = scmp.eq.s32.totalorder %s2908, 0
  %p2910 = pneg %p2909
  %2912 = shalt.err (%p2910)

</llo_original>
